<compile_context>
chip_gen: v5e
topology: v5e:2x2
jax: 0.10.0
libtpu: 0.0.40
codegen_flags: <defaults>
</compile_context>

<pallas_src>
import functools

import jax
import jax.numpy as jnp
from jax.experimental import pallas as pl
from jax.experimental.pallas import tpu as pltpu

# ---------------------------------------------------------------------------
# Model hyper-parameters (small, consistent with the module's constructor).
# ---------------------------------------------------------------------------
IMG_SIZE = 16
PATCH = 4
IN_CHANS = 3
EMBED = 32
DEPTH = 2
NUM_HEADS = 4
MLP_RATIO = 4.0
NUM_CLASSES = 10

NUM_PATCHES = (IMG_SIZE // PATCH) ** 2          # 16
SEQ = NUM_PATCHES + 1                           # 17 (cls token + patches)
HIDDEN = int(EMBED * MLP_RATIO)                 # 128
HEAD_DIM = EMBED // NUM_HEADS                   # 8
PATCH_DIM = IN_CHANS * PATCH * PATCH            # 48
LN_EPS = 1e-5


# ---------------------------------------------------------------------------
# In-kernel helpers (pure elementwise / reduction ops, Mosaic-safe)
# ---------------------------------------------------------------------------
def _layernorm(v, w, b):
    mu = jnp.mean(v, axis=-1, keepdims=True)
    var = jnp.mean((v - mu) ** 2, axis=-1, keepdims=True)
    return (v - mu) * jax.lax.rsqrt(var + LN_EPS) * w + b


def _erf(x):
    # Abramowitz & Stegun 7.1.26: |error| < 1.5e-7, exp + polynomials only.
    a1, a2, a3, a4, a5 = (0.254829592, -0.284496736, 1.421413741,
                          -1.453152027, 1.061405429)
    p = 0.3275911
    z = jnp.abs(x)
    t = 1.0 / (1.0 + p * z)
    poly = ((((a5 * t + a4) * t + a3) * t + a2) * t + a1) * t
    r = 1.0 - poly * jnp.exp(-z * z)
    return jnp.where(x >= 0, r, -r)


def _gelu_exact(x):
    return 0.5 * x * (1.0 + _erf(x * 0.7071067811865476))


def _softmax_rows(s):
    # Exact divide (no approx reciprocal) so we track the reference closely.
    s = s - jnp.max(s, axis=-1, keepdims=True)
    p = jnp.exp(s)
    return p / jnp.sum(p, axis=-1, keepdims=True)


# ---------------------------------------------------------------------------
# Fused per-image kernel: patch-embed -> DEPTH blocks -> final LN -> head.
# Grid axis 0 = batch ("parallel"); all weights are VMEM-resident slabs.
# ---------------------------------------------------------------------------
def vit_kernel(patches_ref, addend_ref, patch_w_ref, attn_w_ref,
               mlp_w1_ref, mlp_w2_ref, vecs_ref, b1_ref,
               norm_wb_ref, head_w_ref, head_b_ref, out_ref,
               *, seq, num_heads, head_dim, depth):
    d = num_heads * head_dim

    # --- patch embedding + (cls_token / pos_embed / conv-bias) addend ------
    # patches_ref has a zero row at the CLS slot, so one matmul + one add
    # reproduces [cls_token; Conv2d(x)] + pos_embed exactly.
    x = (jnp.dot(patches_ref[...], patch_w_ref[...],
                 preferred_element_type=jnp.float32)
         + addend_ref[...])                                       # (S, D)

    # Per-head lane masks (trace-time constants, built once, reused).
    lane = jax.lax.broadcasted_iota(jnp.int32, (1, d), 1)
    head_masks = [
        ((lane >= h * head_dim) & (lane < (h + 1) * head_dim)
         ).astype(jnp.float32)
        for h in range(num_heads)
    ]

    # --- transformer blocks -------------------------------------------------
    for l in range(depth):
        ln1w = vecs_ref[l, 0:1, :]
        ln1b = vecs_ref[l, 1:2, :]
        ln2w = vecs_ref[l, 2:3, :]
        ln2b = vecs_ref[l, 3:4, :]
        bproj = vecs_ref[l, 4:5, :]
        b2 = vecs_ref[l, 5:6, :]

        # Attention branch (pre-norm).  wq already carries 1/sqrt(head_dim).
        h = _layernorm(x, ln1w, ln1b)
        q = jnp.dot(h, attn_w_ref[l, 0, :, :], preferred_element_type=jnp.float32)
        k = jnp.dot(h, attn_w_ref[l, 1, :, :], preferred_element_type=jnp.float32)
        v = jnp.dot(h, attn_w_ref[l, 2, :, :], preferred_element_type=jnp.float32)

        attn = jnp.zeros_like(x)
        for hm in head_masks:
            # Masked full-width contraction == per-head q_h @ k_h^T with no
            # lane slicing; heads occupy disjoint lanes, so the per-head
            # outputs combine with a plain add.
            s = jax.lax.dot_general(q * hm, k, (((1,), (1,)), ((), ())),
                                    preferred_element_type=jnp.float32)  # (S, S)
            p = _softmax_rows(s)
            attn = attn + jnp.dot(p, v * hm,
                                  preferred_element_type=jnp.float32)

        x = x + (jnp.dot(attn, attn_w_ref[l, 3, :, :],
                         preferred_element_type=jnp.float32) + bproj)

        # MLP branch (pre-norm); hidden dim 128 is lane-dense for the VPU.
        h2 = _layernorm(x, ln2w, ln2b)
        m = (jnp.dot(h2, mlp_w1_ref[l, :, :],
                     preferred_element_type=jnp.float32) + b1_ref[l, :, :])
        m = _gelu_exact(m)
        x = x + (jnp.dot(m, mlp_w2_ref[l, :, :],
                         preferred_element_type=jnp.float32) + b2)

    # --- final LayerNorm + classification head on the CLS token ------------
    # One-hot selector matmul instead of a row slice (keeps the epilogue on
    # the MXU fast path, no sublane gather).
    sel = (jax.lax.broadcasted_iota(jnp.int32, (1, seq), 1) == 0
           ).astype(jnp.float32)                                  # (1, S)
    cls_tok = jnp.dot(sel, x, preferred_element_type=jnp.float32)  # (1, D)
    cls_tok = _layernorm(cls_tok, norm_wb_ref[0:1, :], norm_wb_ref[1:2, :])
    out_ref[...] = (jnp.dot(cls_tok, head_w_ref[...],
                            preferred_element_type=jnp.float32)
                    + head_b_ref[...])                            # (1, C)


# ---------------------------------------------------------------------------
# Glue: patch extraction (equivalent to Conv2d with kernel == stride == patch)
# ---------------------------------------------------------------------------
def extract_patches(x, patch):
    # x: (B, C, H, W) NCHW -> (B, num_patches, C*p*p).  Pure layout glue,
    # left to XLA (zero compute).
    bsz, c, h, w = x.shape
    gh, gw = h // patch, w // patch
    x = x.reshape(bsz, c, gh, patch, gw, patch)
    x = x.transpose(0, 2, 4, 1, 3, 5)                  # (B, gh, gw, C, p, p)
    return x.reshape(bsz, gh * gw, c * patch * patch)


# ---------------------------------------------------------------------------
# Wrapper: one pallas_call, batch as a parallel grid axis.
# ---------------------------------------------------------------------------
@jax.jit
def vit_forward(x, params):
    bsz = x.shape[0]
    patches = extract_patches(x, PATCH)                         # (B, N, PD)
    # Zero row at the CLS slot so the kernel needs no token assembly.
    patches_pad = jnp.pad(patches, ((0, 0), (1, 0), (0, 0)))    # (B, S, PD)

    kern = functools.partial(vit_kernel, seq=SEQ, num_heads=NUM_HEADS,
                             head_dim=HEAD_DIM, depth=DEPTH)

    vmem_full = lambda: pl.BlockSpec(memory_space=pltpu.MemorySpace.VMEM)

    out = pl.pallas_call(
        kern,
        out_shape=jax.ShapeDtypeStruct((bsz, 1, NUM_CLASSES), jnp.float32),
        grid=(bsz,),
        in_specs=[
            # Per-image activation block.
            pl.BlockSpec((None, SEQ, PATCH_DIM), lambda b: (b, 0, 0)),
            # Whole-array VMEM-resident weight slabs (11 inputs total).
            vmem_full(),   # tok_addend  (SEQ, D)
            vmem_full(),   # patch_w     (PD, D)
            vmem_full(),   # attn_w      (DEPTH, 4, D, D)
            vmem_full(),   # mlp_w1      (DEPTH, D, HIDDEN)
            vmem_full(),   # mlp_w2      (DEPTH, HIDDEN, D)
            vmem_full(),   # vecs        (DEPTH, 6, D)
            vmem_full(),   # b1          (DEPTH, 1, HIDDEN)
            vmem_full(),   # norm_wb     (2, D)
            vmem_full(),   # head_w      (D, C)
            vmem_full(),   # head_b      (1, C)
        ],
        out_specs=pl.BlockSpec((None, 1, NUM_CLASSES), lambda b: (b, 0, 0)),
        compiler_params=pltpu.CompilerParams(
            dimension_semantics=("parallel",),
            # Total footprint < 1 MiB; explicit limit just documents headroom.
            vmem_limit_bytes=32 * 1024 * 1024),
    )(patches_pad, params["tok_addend"], params["patch_w"], params["attn_w"],
      params["mlp_w1"], params["mlp_w2"], params["vecs"], params["b1"],
      params["norm_wb"], params["head_w"], params["head_b"])

    return out.reshape(bsz, NUM_CLASSES)


# ---------------------------------------------------------------------------
# Parameter init (deterministic, matching the module's init scheme), packed
# directly into the coalesced slab layout the kernel consumes.
# ---------------------------------------------------------------------------
def trunc_normal(key, shape, std=0.02):
    return std * jax.random.truncated_normal(key, -2.0, 2.0, shape, jnp.float32)


def init_params(key):
    ks = jax.random.split(key, 10)
    scale = HEAD_DIM ** -0.5

    # Conv2d(in_chans, embed, k=p, s=p) weight flattened to (C*p*p, D); bias 0.
    patch_w = trunc_normal(ks[0], (PATCH_DIM, EMBED))
    patch_b = jnp.zeros((1, EMBED), jnp.float32)
    cls_token = trunc_normal(ks[1], (1, EMBED))
    pos_embed = trunc_normal(ks[2], (SEQ, EMBED))

    # Precomputed per-row addend: CLS row = cls_token + pos[0];
    # patch rows = pos[1:] + conv bias.
    tok_addend = jnp.concatenate(
        [cls_token + pos_embed[0:1, :], pos_embed[1:, :] + patch_b], axis=0)

    # qkv Linear(dim, 3*dim, bias=False) split into wq/wk/wv (same semantics);
    # the 1/sqrt(head_dim) attention scale is folded into wq.
    wq = trunc_normal(ks[3], (DEPTH, EMBED, EMBED)) * scale
    wk = trunc_normal(ks[4], (DEPTH, EMBED, EMBED))
    wv = trunc_normal(ks[5], (DEPTH, EMBED, EMBED))
    wproj = trunc_normal(ks[6], (DEPTH, EMBED, EMBED))
    attn_w = jnp.stack([wq, wk, wv, wproj], axis=1)          # (DEPTH, 4, D, D)

    # Per-layer (1, D) vectors packed into one slab:
    # [ln1_w, ln1_b, ln2_w, ln2_b, proj_b, mlp2_b]  (LN weights=1, biases=0).
    ones_d = jnp.ones((DEPTH, EMBED), jnp.float32)
    zeros_d = jnp.zeros((DEPTH, EMBED), jnp.float32)
    vecs = jnp.stack([ones_d, zeros_d, ones_d, zeros_d, zeros_d, zeros_d],
                     axis=1)                                  # (DEPTH, 6, D)

    return {
        "patch_w": patch_w,
        "tok_addend": tok_addend,                             # (SEQ, D)
        "attn_w": attn_w,
        "mlp_w1": trunc_normal(ks[7], (DEPTH, EMBED, HIDDEN)),
        "mlp_w2": trunc_normal(ks[8], (DEPTH, HIDDEN, EMBED)),
        "vecs": vecs,
        "b1": jnp.zeros((DEPTH, 1, HIDDEN), jnp.float32),
        "norm_wb": jnp.stack([jnp.ones((EMBED,), jnp.float32),
                              jnp.zeros((EMBED,), jnp.float32)], axis=0),
        "head_w": trunc_normal(ks[9], (EMBED, NUM_CLASSES)),
        "head_b": jnp.zeros((1, NUM_CLASSES), jnp.float32),
    }
    # TODO(synk): relprop()/gradient hooks (LRP) are backward-pass machinery
    # with no forward-pass effect and are not implemented.


if __name__ == "__main__":
    key = jax.random.PRNGKey(0)
    pkey, xkey = jax.random.split(key)
    params = init_params(pkey)
    x = jax.random.normal(xkey, (2, IN_CHANS, IMG_SIZE, IMG_SIZE), jnp.float32)

    logits = vit_forward(x, params)
    logits = jax.block_until_ready(logits)
    assert logits.shape == (2, NUM_CLASSES)
    assert bool(jnp.all(jnp.isfinite(logits)))
    print("KERNEL_OK")
</pallas_src>

<mosaic_0001>
module attributes {stable_mosaic.version = 11 : i64} {
  func.func @vit_kernel(%arg0: i32, %arg1: memref<1x17x48xf32, #tpu.memory_space<vmem>>, %arg2: memref<17x32xf32, #tpu.memory_space<vmem>>, %arg3: memref<48x32xf32, #tpu.memory_space<vmem>>, %arg4: memref<2x4x32x32xf32, #tpu.memory_space<vmem>>, %arg5: memref<2x32x128xf32, #tpu.memory_space<vmem>>, %arg6: memref<2x128x32xf32, #tpu.memory_space<vmem>>, %arg7: memref<2x6x32xf32, #tpu.memory_space<vmem>>, %arg8: memref<2x1x128xf32, #tpu.memory_space<vmem>>, %arg9: memref<2x32xf32, #tpu.memory_space<vmem>>, %arg10: memref<32x10xf32, #tpu.memory_space<vmem>>, %arg11: memref<1x10xf32, #tpu.memory_space<vmem>>, %arg12: memref<1x1x10xf32, #tpu.memory_space<vmem>>) attributes {dimension_semantics = [#tpu.dimension_semantics<parallel>], iteration_bounds = array<i64: 2>, scalar_prefetch = 0 : i64, scratch_operands = 0 : i64, tpu.core_type = #tpu.core_type<tc>, window_params = [{transform_indices = @transform_0, window_bounds = array<i64: 1, 17, 48>}, {pipeline_mode = #tpu.pipeline_mode<synchronous>, transform_indices = @transform_1, window_bounds = array<i64: 17, 32>}, {pipeline_mode = #tpu.pipeline_mode<synchronous>, transform_indices = @transform_2, window_bounds = array<i64: 48, 32>}, {pipeline_mode = #tpu.pipeline_mode<synchronous>, transform_indices = @transform_3, window_bounds = array<i64: 2, 4, 32, 32>}, {pipeline_mode = #tpu.pipeline_mode<synchronous>, transform_indices = @transform_4, window_bounds = array<i64: 2, 32, 128>}, {pipeline_mode = #tpu.pipeline_mode<synchronous>, transform_indices = @transform_5, window_bounds = array<i64: 2, 128, 32>}, {pipeline_mode = #tpu.pipeline_mode<synchronous>, transform_indices = @transform_6, window_bounds = array<i64: 2, 6, 32>}, {pipeline_mode = #tpu.pipeline_mode<synchronous>, transform_indices = @transform_7, window_bounds = array<i64: 2, 1, 128>}, {pipeline_mode = #tpu.pipeline_mode<synchronous>, transform_indices = @transform_8, window_bounds = array<i64: 2, 32>}, {pipeline_mode = #tpu.pipeline_mode<synchronous>, transform_indices = @transform_9, window_bounds = array<i64: 32, 10>}, {pipeline_mode = #tpu.pipeline_mode<synchronous>, transform_indices = @transform_10, window_bounds = array<i64: 1, 10>}, {transform_indices = @transform_11, window_bounds = array<i64: 1, 1, 10>}]} {
    %c0 = arith.constant 0 : index
    %c0_0 = arith.constant 0 : index
    %c0_1 = arith.constant 0 : index
    %0 = vector.load %arg1[%c0, %c0_0, %c0_1] : memref<1x17x48xf32, #tpu.memory_space<vmem>>, vector<1x17x48xf32>
    %1 = vector.shape_cast %0 : vector<1x17x48xf32> to vector<17x48xf32>
    %c0_2 = arith.constant 0 : index
    %c0_3 = arith.constant 0 : index
    %2 = vector.load %arg3[%c0_2, %c0_3] : memref<48x32xf32, #tpu.memory_space<vmem>>, vector<48x32xf32>
    %cst = arith.constant dense<0.000000e+00> : vector<17x32xf32>
    %3 = tpu.matmul %1, %2, %cst {dimension_numbers = #tpu.dot_dimension_numbers<[1], [0], [0], [1], [0, 0, 1, 1], [], []>} : vector<17x48xf32>, vector<48x32xf32>, vector<17x32xf32> -> vector<17x32xf32>
    %c0_4 = arith.constant 0 : index
    %c0_5 = arith.constant 0 : index
    %4 = vector.load %arg2[%c0_4, %c0_5] : memref<17x32xf32, #tpu.memory_space<vmem>>, vector<17x32xf32>
    %5 = arith.addf %3, %4 : vector<17x32xf32>
    %6 = tpu.iota {dimensions = array<i32: 1>} : vector<1x32xi32>
    %c0_i32 = arith.constant 0 : i32
    %7 = vector.broadcast %c0_i32 : i32 to vector<1x32xi32>
    %8 = arith.cmpi sge, %6, %7 : vector<1x32xi32>
    %c8_i32 = arith.constant 8 : i32
    %9 = vector.broadcast %c8_i32 : i32 to vector<1x32xi32>
    %10 = arith.cmpi slt, %6, %9 : vector<1x32xi32>
    %11 = arith.andi %8, %10 : vector<1x32xi1>
    %12 = arith.extui %11 : vector<1x32xi1> to vector<1x32xi32>
    %13 = arith.sitofp %12 : vector<1x32xi32> to vector<1x32xf32>
    %c8_i32_6 = arith.constant 8 : i32
    %14 = vector.broadcast %c8_i32_6 : i32 to vector<1x32xi32>
    %15 = arith.cmpi sge, %6, %14 : vector<1x32xi32>
    %c16_i32 = arith.constant 16 : i32
    %16 = vector.broadcast %c16_i32 : i32 to vector<1x32xi32>
    %17 = arith.cmpi slt, %6, %16 : vector<1x32xi32>
    %18 = arith.andi %15, %17 : vector<1x32xi1>
    %19 = arith.extui %18 : vector<1x32xi1> to vector<1x32xi32>
    %20 = arith.sitofp %19 : vector<1x32xi32> to vector<1x32xf32>
    %c16_i32_7 = arith.constant 16 : i32
    %21 = vector.broadcast %c16_i32_7 : i32 to vector<1x32xi32>
    %22 = arith.cmpi sge, %6, %21 : vector<1x32xi32>
    %c24_i32 = arith.constant 24 : i32
    %23 = vector.broadcast %c24_i32 : i32 to vector<1x32xi32>
    %24 = arith.cmpi slt, %6, %23 : vector<1x32xi32>
    %25 = arith.andi %22, %24 : vector<1x32xi1>
    %26 = arith.extui %25 : vector<1x32xi1> to vector<1x32xi32>
    %27 = arith.sitofp %26 : vector<1x32xi32> to vector<1x32xf32>
    %c24_i32_8 = arith.constant 24 : i32
    %28 = vector.broadcast %c24_i32_8 : i32 to vector<1x32xi32>
    %29 = arith.cmpi sge, %6, %28 : vector<1x32xi32>
    %c32_i32 = arith.constant 32 : i32
    %30 = vector.broadcast %c32_i32 : i32 to vector<1x32xi32>
    %31 = arith.cmpi slt, %6, %30 : vector<1x32xi32>
    %32 = arith.andi %29, %31 : vector<1x32xi1>
    %33 = arith.extui %32 : vector<1x32xi1> to vector<1x32xi32>
    %34 = arith.sitofp %33 : vector<1x32xi32> to vector<1x32xf32>
    %c0_9 = arith.constant 0 : index
    %c0_10 = arith.constant 0 : index
    %c0_11 = arith.constant 0 : index
    %35 = vector.load %arg7[%c0_9, %c0_10, %c0_11] : memref<2x6x32xf32, #tpu.memory_space<vmem>>, vector<1x1x32xf32>
    %36 = vector.shape_cast %35 : vector<1x1x32xf32> to vector<1x32xf32>
    %c0_12 = arith.constant 0 : index
    %c1 = arith.constant 1 : index
    %c0_13 = arith.constant 0 : index
    %37 = vector.load %arg7[%c0_12, %c1, %c0_13] : memref<2x6x32xf32, #tpu.memory_space<vmem>>, vector<1x1x32xf32>
    %38 = vector.shape_cast %37 : vector<1x1x32xf32> to vector<1x32xf32>
    %c0_14 = arith.constant 0 : index
    %c2 = arith.constant 2 : index
    %c0_15 = arith.constant 0 : index
    %39 = vector.load %arg7[%c0_14, %c2, %c0_15] : memref<2x6x32xf32, #tpu.memory_space<vmem>>, vector<1x1x32xf32>
    %40 = vector.shape_cast %39 : vector<1x1x32xf32> to vector<1x32xf32>
    %c0_16 = arith.constant 0 : index
    %c3 = arith.constant 3 : index
    %c0_17 = arith.constant 0 : index
    %41 = vector.load %arg7[%c0_16, %c3, %c0_17] : memref<2x6x32xf32, #tpu.memory_space<vmem>>, vector<1x1x32xf32>
    %42 = vector.shape_cast %41 : vector<1x1x32xf32> to vector<1x32xf32>
    %c0_18 = arith.constant 0 : index
    %c4 = arith.constant 4 : index
    %c0_19 = arith.constant 0 : index
    %43 = vector.load %arg7[%c0_18, %c4, %c0_19] : memref<2x6x32xf32, #tpu.memory_space<vmem>>, vector<1x1x32xf32>
    %44 = vector.shape_cast %43 : vector<1x1x32xf32> to vector<1x32xf32>
    %c0_20 = arith.constant 0 : index
    %c5 = arith.constant 5 : index
    %c0_21 = arith.constant 0 : index
    %45 = vector.load %arg7[%c0_20, %c5, %c0_21] : memref<2x6x32xf32, #tpu.memory_space<vmem>>, vector<1x1x32xf32>
    %46 = vector.shape_cast %45 : vector<1x1x32xf32> to vector<1x32xf32>
    %cst_22 = arith.constant dense<0.000000e+00> : vector<17xf32>
    %47 = vector.multi_reduction <add>, %5, %cst_22 [1] : vector<17x32xf32> to vector<17xf32>
    %48 = vector.shape_cast %47 : vector<17xf32> to vector<17x1xf32>
    %cst_23 = arith.constant 3.200000e+01 : f32
    %49 = vector.broadcast %cst_23 : f32 to vector<17x1xf32>
    %50 = arith.divf %48, %49 : vector<17x1xf32>
    %51 = vector.broadcast %50 : vector<17x1xf32> to vector<17x32xf32>
    %52 = arith.subf %5, %51 : vector<17x32xf32>
    %53 = arith.mulf %52, %52 : vector<17x32xf32>
    %cst_24 = arith.constant dense<0.000000e+00> : vector<17xf32>
    %54 = vector.multi_reduction <add>, %53, %cst_24 [1] : vector<17x32xf32> to vector<17xf32>
    %55 = vector.shape_cast %54 : vector<17xf32> to vector<17x1xf32>
    %cst_25 = arith.constant 3.200000e+01 : f32
    %56 = vector.broadcast %cst_25 : f32 to vector<17x1xf32>
    %57 = arith.divf %55, %56 : vector<17x1xf32>
    %58 = vector.broadcast %50 : vector<17x1xf32> to vector<17x32xf32>
    %59 = arith.subf %5, %58 : vector<17x32xf32>
    %cst_26 = arith.constant 9.99999974E-6 : f32
    %60 = vector.broadcast %cst_26 : f32 to vector<17x1xf32>
    %61 = arith.addf %57, %60 : vector<17x1xf32>
    %62 = math.rsqrt %61 : vector<17x1xf32>
    %63 = vector.broadcast %62 : vector<17x1xf32> to vector<17x32xf32>
    %64 = arith.mulf %59, %63 : vector<17x32xf32>
    %65 = vector.broadcast %36 : vector<1x32xf32> to vector<17x32xf32>
    %66 = arith.mulf %64, %65 : vector<17x32xf32>
    %67 = vector.broadcast %38 : vector<1x32xf32> to vector<17x32xf32>
    %68 = arith.addf %66, %67 : vector<17x32xf32>
    %c0_27 = arith.constant 0 : index
    %c0_28 = arith.constant 0 : index
    %c0_29 = arith.constant 0 : index
    %c0_30 = arith.constant 0 : index
    %69 = vector.load %arg4[%c0_27, %c0_28, %c0_29, %c0_30] : memref<2x4x32x32xf32, #tpu.memory_space<vmem>>, vector<1x1x32x32xf32>
    %70 = vector.shape_cast %69 : vector<1x1x32x32xf32> to vector<32x32xf32>
    %cst_31 = arith.constant dense<0.000000e+00> : vector<17x32xf32>
    %71 = tpu.matmul %68, %70, %cst_31 {dimension_numbers = #tpu.dot_dimension_numbers<[1], [0], [0], [1], [0, 0, 1, 1], [], []>} : vector<17x32xf32>, vector<32x32xf32>, vector<17x32xf32> -> vector<17x32xf32>
    %c0_32 = arith.constant 0 : index
    %c1_33 = arith.constant 1 : index
    %c0_34 = arith.constant 0 : index
    %c0_35 = arith.constant 0 : index
    %72 = vector.load %arg4[%c0_32, %c1_33, %c0_34, %c0_35] : memref<2x4x32x32xf32, #tpu.memory_space<vmem>>, vector<1x1x32x32xf32>
    %73 = vector.shape_cast %72 : vector<1x1x32x32xf32> to vector<32x32xf32>
    %cst_36 = arith.constant dense<0.000000e+00> : vector<17x32xf32>
    %74 = tpu.matmul %68, %73, %cst_36 {dimension_numbers = #tpu.dot_dimension_numbers<[1], [0], [0], [1], [0, 0, 1, 1], [], []>} : vector<17x32xf32>, vector<32x32xf32>, vector<17x32xf32> -> vector<17x32xf32>
    %c0_37 = arith.constant 0 : index
    %c2_38 = arith.constant 2 : index
    %c0_39 = arith.constant 0 : index
    %c0_40 = arith.constant 0 : index
    %75 = vector.load %arg4[%c0_37, %c2_38, %c0_39, %c0_40] : memref<2x4x32x32xf32, #tpu.memory_space<vmem>>, vector<1x1x32x32xf32>
    %76 = vector.shape_cast %75 : vector<1x1x32x32xf32> to vector<32x32xf32>
    %cst_41 = arith.constant dense<0.000000e+00> : vector<17x32xf32>
    %77 = tpu.matmul %68, %76, %cst_41 {dimension_numbers = #tpu.dot_dimension_numbers<[1], [0], [0], [1], [0, 0, 1, 1], [], []>} : vector<17x32xf32>, vector<32x32xf32>, vector<17x32xf32> -> vector<17x32xf32>
    %cst_42 = arith.constant 0.000000e+00 : f32
    %78 = vector.broadcast %cst_42 : f32 to vector<17x32xf32>
    %79 = vector.broadcast %13 : vector<1x32xf32> to vector<17x32xf32>
    %80 = arith.mulf %71, %79 : vector<17x32xf32>
    %cst_43 = arith.constant dense<0.000000e+00> : vector<17x17xf32>
    %81 = tpu.matmul %80, %74, %cst_43 {dimension_numbers = #tpu.dot_dimension_numbers<[1], [1], [0], [0], [0, 0, 1, 0], [], []>} : vector<17x32xf32>, vector<17x32xf32>, vector<17x17xf32> -> vector<17x17xf32>
    %cst_44 = arith.constant dense<0xFF800000> : vector<17xf32>
    %82 = vector.multi_reduction <maximumf>, %81, %cst_44 [1] : vector<17x17xf32> to vector<17xf32>
    %83 = vector.shape_cast %82 : vector<17xf32> to vector<17x1xf32>
    %84 = vector.broadcast %83 : vector<17x1xf32> to vector<17x17xf32>
    %85 = arith.subf %81, %84 : vector<17x17xf32>
    %86 = math.exp %85 : vector<17x17xf32>
    %cst_45 = arith.constant dense<0.000000e+00> : vector<17xf32>
    %87 = vector.multi_reduction <add>, %86, %cst_45 [1] : vector<17x17xf32> to vector<17xf32>
    %88 = vector.shape_cast %87 : vector<17xf32> to vector<17x1xf32>
    %89 = vector.broadcast %88 : vector<17x1xf32> to vector<17x17xf32>
    %90 = arith.divf %86, %89 : vector<17x17xf32>
    %91 = vector.broadcast %13 : vector<1x32xf32> to vector<17x32xf32>
    %92 = arith.mulf %77, %91 : vector<17x32xf32>
    %cst_46 = arith.constant dense<0.000000e+00> : vector<17x32xf32>
    %93 = tpu.matmul %90, %92, %cst_46 {dimension_numbers = #tpu.dot_dimension_numbers<[1], [0], [0], [1], [0, 0, 1, 1], [], []>} : vector<17x17xf32>, vector<17x32xf32>, vector<17x32xf32> -> vector<17x32xf32>
    %94 = arith.addf %78, %93 : vector<17x32xf32>
    %95 = vector.broadcast %20 : vector<1x32xf32> to vector<17x32xf32>
    %96 = arith.mulf %71, %95 : vector<17x32xf32>
    %cst_47 = arith.constant dense<0.000000e+00> : vector<17x17xf32>
    %97 = tpu.matmul %96, %74, %cst_47 {dimension_numbers = #tpu.dot_dimension_numbers<[1], [1], [0], [0], [0, 0, 1, 0], [], []>} : vector<17x32xf32>, vector<17x32xf32>, vector<17x17xf32> -> vector<17x17xf32>
    %cst_48 = arith.constant dense<0xFF800000> : vector<17xf32>
    %98 = vector.multi_reduction <maximumf>, %97, %cst_48 [1] : vector<17x17xf32> to vector<17xf32>
    %99 = vector.shape_cast %98 : vector<17xf32> to vector<17x1xf32>
    %100 = vector.broadcast %99 : vector<17x1xf32> to vector<17x17xf32>
    %101 = arith.subf %97, %100 : vector<17x17xf32>
    %102 = math.exp %101 : vector<17x17xf32>
    %cst_49 = arith.constant dense<0.000000e+00> : vector<17xf32>
    %103 = vector.multi_reduction <add>, %102, %cst_49 [1] : vector<17x17xf32> to vector<17xf32>
    %104 = vector.shape_cast %103 : vector<17xf32> to vector<17x1xf32>
    %105 = vector.broadcast %104 : vector<17x1xf32> to vector<17x17xf32>
    %106 = arith.divf %102, %105 : vector<17x17xf32>
    %107 = vector.broadcast %20 : vector<1x32xf32> to vector<17x32xf32>
    %108 = arith.mulf %77, %107 : vector<17x32xf32>
    %cst_50 = arith.constant dense<0.000000e+00> : vector<17x32xf32>
    %109 = tpu.matmul %106, %108, %cst_50 {dimension_numbers = #tpu.dot_dimension_numbers<[1], [0], [0], [1], [0, 0, 1, 1], [], []>} : vector<17x17xf32>, vector<17x32xf32>, vector<17x32xf32> -> vector<17x32xf32>
    %110 = arith.addf %94, %109 : vector<17x32xf32>
    %111 = vector.broadcast %27 : vector<1x32xf32> to vector<17x32xf32>
    %112 = arith.mulf %71, %111 : vector<17x32xf32>
    %cst_51 = arith.constant dense<0.000000e+00> : vector<17x17xf32>
    %113 = tpu.matmul %112, %74, %cst_51 {dimension_numbers = #tpu.dot_dimension_numbers<[1], [1], [0], [0], [0, 0, 1, 0], [], []>} : vector<17x32xf32>, vector<17x32xf32>, vector<17x17xf32> -> vector<17x17xf32>
    %cst_52 = arith.constant dense<0xFF800000> : vector<17xf32>
    %114 = vector.multi_reduction <maximumf>, %113, %cst_52 [1] : vector<17x17xf32> to vector<17xf32>
    %115 = vector.shape_cast %114 : vector<17xf32> to vector<17x1xf32>
    %116 = vector.broadcast %115 : vector<17x1xf32> to vector<17x17xf32>
    %117 = arith.subf %113, %116 : vector<17x17xf32>
    %118 = math.exp %117 : vector<17x17xf32>
    %cst_53 = arith.constant dense<0.000000e+00> : vector<17xf32>
    %119 = vector.multi_reduction <add>, %118, %cst_53 [1] : vector<17x17xf32> to vector<17xf32>
    %120 = vector.shape_cast %119 : vector<17xf32> to vector<17x1xf32>
    %121 = vector.broadcast %120 : vector<17x1xf32> to vector<17x17xf32>
    %122 = arith.divf %118, %121 : vector<17x17xf32>
    %123 = vector.broadcast %27 : vector<1x32xf32> to vector<17x32xf32>
    %124 = arith.mulf %77, %123 : vector<17x32xf32>
    %cst_54 = arith.constant dense<0.000000e+00> : vector<17x32xf32>
    %125 = tpu.matmul %122, %124, %cst_54 {dimension_numbers = #tpu.dot_dimension_numbers<[1], [0], [0], [1], [0, 0, 1, 1], [], []>} : vector<17x17xf32>, vector<17x32xf32>, vector<17x32xf32> -> vector<17x32xf32>
    %126 = arith.addf %110, %125 : vector<17x32xf32>
    %127 = vector.broadcast %34 : vector<1x32xf32> to vector<17x32xf32>
    %128 = arith.mulf %71, %127 : vector<17x32xf32>
    %cst_55 = arith.constant dense<0.000000e+00> : vector<17x17xf32>
    %129 = tpu.matmul %128, %74, %cst_55 {dimension_numbers = #tpu.dot_dimension_numbers<[1], [1], [0], [0], [0, 0, 1, 0], [], []>} : vector<17x32xf32>, vector<17x32xf32>, vector<17x17xf32> -> vector<17x17xf32>
    %cst_56 = arith.constant dense<0xFF800000> : vector<17xf32>
    %130 = vector.multi_reduction <maximumf>, %129, %cst_56 [1] : vector<17x17xf32> to vector<17xf32>
    %131 = vector.shape_cast %130 : vector<17xf32> to vector<17x1xf32>
    %132 = vector.broadcast %131 : vector<17x1xf32> to vector<17x17xf32>
    %133 = arith.subf %129, %132 : vector<17x17xf32>
    %134 = math.exp %133 : vector<17x17xf32>
    %cst_57 = arith.constant dense<0.000000e+00> : vector<17xf32>
    %135 = vector.multi_reduction <add>, %134, %cst_57 [1] : vector<17x17xf32> to vector<17xf32>
    %136 = vector.shape_cast %135 : vector<17xf32> to vector<17x1xf32>
    %137 = vector.broadcast %136 : vector<17x1xf32> to vector<17x17xf32>
    %138 = arith.divf %134, %137 : vector<17x17xf32>
    %139 = vector.broadcast %34 : vector<1x32xf32> to vector<17x32xf32>
    %140 = arith.mulf %77, %139 : vector<17x32xf32>
    %cst_58 = arith.constant dense<0.000000e+00> : vector<17x32xf32>
    %141 = tpu.matmul %138, %140, %cst_58 {dimension_numbers = #tpu.dot_dimension_numbers<[1], [0], [0], [1], [0, 0, 1, 1], [], []>} : vector<17x17xf32>, vector<17x32xf32>, vector<17x32xf32> -> vector<17x32xf32>
    %142 = arith.addf %126, %141 : vector<17x32xf32>
    %c0_59 = arith.constant 0 : index
    %c3_60 = arith.constant 3 : index
    %c0_61 = arith.constant 0 : index
    %c0_62 = arith.constant 0 : index
    %143 = vector.load %arg4[%c0_59, %c3_60, %c0_61, %c0_62] : memref<2x4x32x32xf32, #tpu.memory_space<vmem>>, vector<1x1x32x32xf32>
    %144 = vector.shape_cast %143 : vector<1x1x32x32xf32> to vector<32x32xf32>
    %cst_63 = arith.constant dense<0.000000e+00> : vector<17x32xf32>
    %145 = tpu.matmul %142, %144, %cst_63 {dimension_numbers = #tpu.dot_dimension_numbers<[1], [0], [0], [1], [0, 0, 1, 1], [], []>} : vector<17x32xf32>, vector<32x32xf32>, vector<17x32xf32> -> vector<17x32xf32>
    %146 = vector.broadcast %44 : vector<1x32xf32> to vector<17x32xf32>
    %147 = arith.addf %145, %146 : vector<17x32xf32>
    %148 = arith.addf %5, %147 : vector<17x32xf32>
    %cst_64 = arith.constant dense<0.000000e+00> : vector<17xf32>
    %149 = vector.multi_reduction <add>, %148, %cst_64 [1] : vector<17x32xf32> to vector<17xf32>
    %150 = vector.shape_cast %149 : vector<17xf32> to vector<17x1xf32>
    %cst_65 = arith.constant 3.200000e+01 : f32
    %151 = vector.broadcast %cst_65 : f32 to vector<17x1xf32>
    %152 = arith.divf %150, %151 : vector<17x1xf32>
    %153 = vector.broadcast %152 : vector<17x1xf32> to vector<17x32xf32>
    %154 = arith.subf %148, %153 : vector<17x32xf32>
    %155 = arith.mulf %154, %154 : vector<17x32xf32>
    %cst_66 = arith.constant dense<0.000000e+00> : vector<17xf32>
    %156 = vector.multi_reduction <add>, %155, %cst_66 [1] : vector<17x32xf32> to vector<17xf32>
    %157 = vector.shape_cast %156 : vector<17xf32> to vector<17x1xf32>
    %cst_67 = arith.constant 3.200000e+01 : f32
    %158 = vector.broadcast %cst_67 : f32 to vector<17x1xf32>
    %159 = arith.divf %157, %158 : vector<17x1xf32>
    %160 = vector.broadcast %152 : vector<17x1xf32> to vector<17x32xf32>
    %161 = arith.subf %148, %160 : vector<17x32xf32>
    %cst_68 = arith.constant 9.99999974E-6 : f32
    %162 = vector.broadcast %cst_68 : f32 to vector<17x1xf32>
    %163 = arith.addf %159, %162 : vector<17x1xf32>
    %164 = math.rsqrt %163 : vector<17x1xf32>
    %165 = vector.broadcast %164 : vector<17x1xf32> to vector<17x32xf32>
    %166 = arith.mulf %161, %165 : vector<17x32xf32>
    %167 = vector.broadcast %40 : vector<1x32xf32> to vector<17x32xf32>
    %168 = arith.mulf %166, %167 : vector<17x32xf32>
    %169 = vector.broadcast %42 : vector<1x32xf32> to vector<17x32xf32>
    %170 = arith.addf %168, %169 : vector<17x32xf32>
    %c0_69 = arith.constant 0 : index
    %c0_70 = arith.constant 0 : index
    %c0_71 = arith.constant 0 : index
    %171 = vector.load %arg5[%c0_69, %c0_70, %c0_71] : memref<2x32x128xf32, #tpu.memory_space<vmem>>, vector<1x32x128xf32>
    %172 = vector.shape_cast %171 : vector<1x32x128xf32> to vector<32x128xf32>
    %cst_72 = arith.constant dense<0.000000e+00> : vector<17x128xf32>
    %173 = tpu.matmul %170, %172, %cst_72 {dimension_numbers = #tpu.dot_dimension_numbers<[1], [0], [0], [1], [0, 0, 1, 1], [], []>} : vector<17x32xf32>, vector<32x128xf32>, vector<17x128xf32> -> vector<17x128xf32>
    %c0_73 = arith.constant 0 : index
    %c0_74 = arith.constant 0 : index
    %c0_75 = arith.constant 0 : index
    %174 = vector.load %arg8[%c0_73, %c0_74, %c0_75] : memref<2x1x128xf32, #tpu.memory_space<vmem>>, vector<1x1x128xf32>
    %175 = vector.shape_cast %174 : vector<1x1x128xf32> to vector<1x128xf32>
    %176 = vector.broadcast %175 : vector<1x128xf32> to vector<17x128xf32>
    %177 = arith.addf %173, %176 : vector<17x128xf32>
    %cst_76 = arith.constant 5.000000e-01 : f32
    %178 = vector.broadcast %cst_76 : f32 to vector<17x128xf32>
    %179 = arith.mulf %178, %177 : vector<17x128xf32>
    %cst_77 = arith.constant 0.707106769 : f32
    %180 = vector.broadcast %cst_77 : f32 to vector<17x128xf32>
    %181 = arith.mulf %177, %180 : vector<17x128xf32>
    %182 = math.absf %181 : vector<17x128xf32>
    %cst_78 = arith.constant 0.327591091 : f32
    %183 = vector.broadcast %cst_78 : f32 to vector<17x128xf32>
    %184 = arith.mulf %183, %182 : vector<17x128xf32>
    %cst_79 = arith.constant 1.000000e+00 : f32
    %185 = vector.broadcast %cst_79 : f32 to vector<17x128xf32>
    %186 = arith.addf %185, %184 : vector<17x128xf32>
    %cst_80 = arith.constant 1.000000e+00 : f32
    %187 = vector.broadcast %cst_80 : f32 to vector<17x128xf32>
    %188 = arith.divf %187, %186 : vector<17x128xf32>
    %cst_81 = arith.constant 1.06140542 : f32
    %189 = vector.broadcast %cst_81 : f32 to vector<17x128xf32>
    %190 = arith.mulf %189, %188 : vector<17x128xf32>
    %cst_82 = arith.constant -1.45315206 : f32
    %191 = vector.broadcast %cst_82 : f32 to vector<17x128xf32>
    %192 = arith.addf %190, %191 : vector<17x128xf32>
    %193 = arith.mulf %192, %188 : vector<17x128xf32>
    %cst_83 = arith.constant 1.42141378 : f32
    %194 = vector.broadcast %cst_83 : f32 to vector<17x128xf32>
    %195 = arith.addf %193, %194 : vector<17x128xf32>
    %196 = arith.mulf %195, %188 : vector<17x128xf32>
    %cst_84 = arith.constant -0.284496725 : f32
    %197 = vector.broadcast %cst_84 : f32 to vector<17x128xf32>
    %198 = arith.addf %196, %197 : vector<17x128xf32>
    %199 = arith.mulf %198, %188 : vector<17x128xf32>
    %cst_85 = arith.constant 0.254829586 : f32
    %200 = vector.broadcast %cst_85 : f32 to vector<17x128xf32>
    %201 = arith.addf %199, %200 : vector<17x128xf32>
    %202 = arith.mulf %201, %188 : vector<17x128xf32>
    %cst_86 = arith.constant 0.000000e+00 : f32
    %203 = vector.broadcast %cst_86 : f32 to vector<17x128xf32>
    %204 = arith.subf %203, %182 : vector<17x128xf32>
    %205 = arith.mulf %204, %182 : vector<17x128xf32>
    %206 = math.exp %205 : vector<17x128xf32>
    %207 = arith.mulf %202, %206 : vector<17x128xf32>
    %cst_87 = arith.constant 1.000000e+00 : f32
    %208 = vector.broadcast %cst_87 : f32 to vector<17x128xf32>
    %209 = arith.subf %208, %207 : vector<17x128xf32>
    %cst_88 = arith.constant 0.000000e+00 : f32
    %210 = vector.broadcast %cst_88 : f32 to vector<17x128xf32>
    %211 = arith.cmpf oge, %181, %210 : vector<17x128xf32>
    %cst_89 = arith.constant 0.000000e+00 : f32
    %212 = vector.broadcast %cst_89 : f32 to vector<17x128xf32>
    %213 = arith.subf %212, %209 : vector<17x128xf32>
    %214 = arith.select %211, %209, %213 : vector<17x128xi1>, vector<17x128xf32>
    %cst_90 = arith.constant 1.000000e+00 : f32
    %215 = vector.broadcast %cst_90 : f32 to vector<17x128xf32>
    %216 = arith.addf %215, %214 : vector<17x128xf32>
    %217 = arith.mulf %179, %216 : vector<17x128xf32>
    %c0_91 = arith.constant 0 : index
    %c0_92 = arith.constant 0 : index
    %c0_93 = arith.constant 0 : index
    %218 = vector.load %arg6[%c0_91, %c0_92, %c0_93] : memref<2x128x32xf32, #tpu.memory_space<vmem>>, vector<1x128x32xf32>
    %219 = vector.shape_cast %218 : vector<1x128x32xf32> to vector<128x32xf32>
    %cst_94 = arith.constant dense<0.000000e+00> : vector<17x32xf32>
    %220 = tpu.matmul %217, %219, %cst_94 {dimension_numbers = #tpu.dot_dimension_numbers<[1], [0], [0], [1], [0, 0, 1, 1], [], []>} : vector<17x128xf32>, vector<128x32xf32>, vector<17x32xf32> -> vector<17x32xf32>
    %221 = vector.broadcast %46 : vector<1x32xf32> to vector<17x32xf32>
    %222 = arith.addf %220, %221 : vector<17x32xf32>
    %223 = arith.addf %148, %222 : vector<17x32xf32>
    %c1_95 = arith.constant 1 : index
    %c0_96 = arith.constant 0 : index
    %c0_97 = arith.constant 0 : index
    %224 = vector.load %arg7[%c1_95, %c0_96, %c0_97] : memref<2x6x32xf32, #tpu.memory_space<vmem>>, vector<1x1x32xf32>
    %225 = vector.shape_cast %224 : vector<1x1x32xf32> to vector<1x32xf32>
    %c1_98 = arith.constant 1 : index
    %c1_99 = arith.constant 1 : index
    %c0_100 = arith.constant 0 : index
    %226 = vector.load %arg7[%c1_98, %c1_99, %c0_100] : memref<2x6x32xf32, #tpu.memory_space<vmem>>, vector<1x1x32xf32>
    %227 = vector.shape_cast %226 : vector<1x1x32xf32> to vector<1x32xf32>
    %c1_101 = arith.constant 1 : index
    %c2_102 = arith.constant 2 : index
    %c0_103 = arith.constant 0 : index
    %228 = vector.load %arg7[%c1_101, %c2_102, %c0_103] : memref<2x6x32xf32, #tpu.memory_space<vmem>>, vector<1x1x32xf32>
    %229 = vector.shape_cast %228 : vector<1x1x32xf32> to vector<1x32xf32>
    %c1_104 = arith.constant 1 : index
    %c3_105 = arith.constant 3 : index
    %c0_106 = arith.constant 0 : index
    %230 = vector.load %arg7[%c1_104, %c3_105, %c0_106] : memref<2x6x32xf32, #tpu.memory_space<vmem>>, vector<1x1x32xf32>
    %231 = vector.shape_cast %230 : vector<1x1x32xf32> to vector<1x32xf32>
    %c1_107 = arith.constant 1 : index
    %c4_108 = arith.constant 4 : index
    %c0_109 = arith.constant 0 : index
    %232 = vector.load %arg7[%c1_107, %c4_108, %c0_109] : memref<2x6x32xf32, #tpu.memory_space<vmem>>, vector<1x1x32xf32>
    %233 = vector.shape_cast %232 : vector<1x1x32xf32> to vector<1x32xf32>
    %c1_110 = arith.constant 1 : index
    %c5_111 = arith.constant 5 : index
    %c0_112 = arith.constant 0 : index
    %234 = vector.load %arg7[%c1_110, %c5_111, %c0_112] : memref<2x6x32xf32, #tpu.memory_space<vmem>>, vector<1x1x32xf32>
    %235 = vector.shape_cast %234 : vector<1x1x32xf32> to vector<1x32xf32>
    %cst_113 = arith.constant dense<0.000000e+00> : vector<17xf32>
    %236 = vector.multi_reduction <add>, %223, %cst_113 [1] : vector<17x32xf32> to vector<17xf32>
    %237 = vector.shape_cast %236 : vector<17xf32> to vector<17x1xf32>
    %cst_114 = arith.constant 3.200000e+01 : f32
    %238 = vector.broadcast %cst_114 : f32 to vector<17x1xf32>
    %239 = arith.divf %237, %238 : vector<17x1xf32>
    %240 = vector.broadcast %239 : vector<17x1xf32> to vector<17x32xf32>
    %241 = arith.subf %223, %240 : vector<17x32xf32>
    %242 = arith.mulf %241, %241 : vector<17x32xf32>
    %cst_115 = arith.constant dense<0.000000e+00> : vector<17xf32>
    %243 = vector.multi_reduction <add>, %242, %cst_115 [1] : vector<17x32xf32> to vector<17xf32>
    %244 = vector.shape_cast %243 : vector<17xf32> to vector<17x1xf32>
    %cst_116 = arith.constant 3.200000e+01 : f32
    %245 = vector.broadcast %cst_116 : f32 to vector<17x1xf32>
    %246 = arith.divf %244, %245 : vector<17x1xf32>
    %247 = vector.broadcast %239 : vector<17x1xf32> to vector<17x32xf32>
    %248 = arith.subf %223, %247 : vector<17x32xf32>
    %cst_117 = arith.constant 9.99999974E-6 : f32
    %249 = vector.broadcast %cst_117 : f32 to vector<17x1xf32>
    %250 = arith.addf %246, %249 : vector<17x1xf32>
    %251 = math.rsqrt %250 : vector<17x1xf32>
    %252 = vector.broadcast %251 : vector<17x1xf32> to vector<17x32xf32>
    %253 = arith.mulf %248, %252 : vector<17x32xf32>
    %254 = vector.broadcast %225 : vector<1x32xf32> to vector<17x32xf32>
    %255 = arith.mulf %253, %254 : vector<17x32xf32>
    %256 = vector.broadcast %227 : vector<1x32xf32> to vector<17x32xf32>
    %257 = arith.addf %255, %256 : vector<17x32xf32>
    %c1_118 = arith.constant 1 : index
    %c0_119 = arith.constant 0 : index
    %c0_120 = arith.constant 0 : index
    %c0_121 = arith.constant 0 : index
    %258 = vector.load %arg4[%c1_118, %c0_119, %c0_120, %c0_121] : memref<2x4x32x32xf32, #tpu.memory_space<vmem>>, vector<1x1x32x32xf32>
    %259 = vector.shape_cast %258 : vector<1x1x32x32xf32> to vector<32x32xf32>
    %cst_122 = arith.constant dense<0.000000e+00> : vector<17x32xf32>
    %260 = tpu.matmul %257, %259, %cst_122 {dimension_numbers = #tpu.dot_dimension_numbers<[1], [0], [0], [1], [0, 0, 1, 1], [], []>} : vector<17x32xf32>, vector<32x32xf32>, vector<17x32xf32> -> vector<17x32xf32>
    %c1_123 = arith.constant 1 : index
    %c1_124 = arith.constant 1 : index
    %c0_125 = arith.constant 0 : index
    %c0_126 = arith.constant 0 : index
    %261 = vector.load %arg4[%c1_123, %c1_124, %c0_125, %c0_126] : memref<2x4x32x32xf32, #tpu.memory_space<vmem>>, vector<1x1x32x32xf32>
    %262 = vector.shape_cast %261 : vector<1x1x32x32xf32> to vector<32x32xf32>
    %cst_127 = arith.constant dense<0.000000e+00> : vector<17x32xf32>
    %263 = tpu.matmul %257, %262, %cst_127 {dimension_numbers = #tpu.dot_dimension_numbers<[1], [0], [0], [1], [0, 0, 1, 1], [], []>} : vector<17x32xf32>, vector<32x32xf32>, vector<17x32xf32> -> vector<17x32xf32>
    %c1_128 = arith.constant 1 : index
    %c2_129 = arith.constant 2 : index
    %c0_130 = arith.constant 0 : index
    %c0_131 = arith.constant 0 : index
    %264 = vector.load %arg4[%c1_128, %c2_129, %c0_130, %c0_131] : memref<2x4x32x32xf32, #tpu.memory_space<vmem>>, vector<1x1x32x32xf32>
    %265 = vector.shape_cast %264 : vector<1x1x32x32xf32> to vector<32x32xf32>
    %cst_132 = arith.constant dense<0.000000e+00> : vector<17x32xf32>
    %266 = tpu.matmul %257, %265, %cst_132 {dimension_numbers = #tpu.dot_dimension_numbers<[1], [0], [0], [1], [0, 0, 1, 1], [], []>} : vector<17x32xf32>, vector<32x32xf32>, vector<17x32xf32> -> vector<17x32xf32>
    %cst_133 = arith.constant 0.000000e+00 : f32
    %267 = vector.broadcast %cst_133 : f32 to vector<17x32xf32>
    %268 = vector.broadcast %13 : vector<1x32xf32> to vector<17x32xf32>
    %269 = arith.mulf %260, %268 : vector<17x32xf32>
    %cst_134 = arith.constant dense<0.000000e+00> : vector<17x17xf32>
    %270 = tpu.matmul %269, %263, %cst_134 {dimension_numbers = #tpu.dot_dimension_numbers<[1], [1], [0], [0], [0, 0, 1, 0], [], []>} : vector<17x32xf32>, vector<17x32xf32>, vector<17x17xf32> -> vector<17x17xf32>
    %cst_135 = arith.constant dense<0xFF800000> : vector<17xf32>
    %271 = vector.multi_reduction <maximumf>, %270, %cst_135 [1] : vector<17x17xf32> to vector<17xf32>
    %272 = vector.shape_cast %271 : vector<17xf32> to vector<17x1xf32>
    %273 = vector.broadcast %272 : vector<17x1xf32> to vector<17x17xf32>
    %274 = arith.subf %270, %273 : vector<17x17xf32>
    %275 = math.exp %274 : vector<17x17xf32>
    %cst_136 = arith.constant dense<0.000000e+00> : vector<17xf32>
    %276 = vector.multi_reduction <add>, %275, %cst_136 [1] : vector<17x17xf32> to vector<17xf32>
    %277 = vector.shape_cast %276 : vector<17xf32> to vector<17x1xf32>
    %278 = vector.broadcast %277 : vector<17x1xf32> to vector<17x17xf32>
    %279 = arith.divf %275, %278 : vector<17x17xf32>
    %280 = vector.broadcast %13 : vector<1x32xf32> to vector<17x32xf32>
    %281 = arith.mulf %266, %280 : vector<17x32xf32>
    %cst_137 = arith.constant dense<0.000000e+00> : vector<17x32xf32>
    %282 = tpu.matmul %279, %281, %cst_137 {dimension_numbers = #tpu.dot_dimension_numbers<[1], [0], [0], [1], [0, 0, 1, 1], [], []>} : vector<17x17xf32>, vector<17x32xf32>, vector<17x32xf32> -> vector<17x32xf32>
    %283 = arith.addf %267, %282 : vector<17x32xf32>
    %284 = vector.broadcast %20 : vector<1x32xf32> to vector<17x32xf32>
    %285 = arith.mulf %260, %284 : vector<17x32xf32>
    %cst_138 = arith.constant dense<0.000000e+00> : vector<17x17xf32>
    %286 = tpu.matmul %285, %263, %cst_138 {dimension_numbers = #tpu.dot_dimension_numbers<[1], [1], [0], [0], [0, 0, 1, 0], [], []>} : vector<17x32xf32>, vector<17x32xf32>, vector<17x17xf32> -> vector<17x17xf32>
    %cst_139 = arith.constant dense<0xFF800000> : vector<17xf32>
    %287 = vector.multi_reduction <maximumf>, %286, %cst_139 [1] : vector<17x17xf32> to vector<17xf32>
    %288 = vector.shape_cast %287 : vector<17xf32> to vector<17x1xf32>
    %289 = vector.broadcast %288 : vector<17x1xf32> to vector<17x17xf32>
    %290 = arith.subf %286, %289 : vector<17x17xf32>
    %291 = math.exp %290 : vector<17x17xf32>
    %cst_140 = arith.constant dense<0.000000e+00> : vector<17xf32>
    %292 = vector.multi_reduction <add>, %291, %cst_140 [1] : vector<17x17xf32> to vector<17xf32>
    %293 = vector.shape_cast %292 : vector<17xf32> to vector<17x1xf32>
    %294 = vector.broadcast %293 : vector<17x1xf32> to vector<17x17xf32>
    %295 = arith.divf %291, %294 : vector<17x17xf32>
    %296 = vector.broadcast %20 : vector<1x32xf32> to vector<17x32xf32>
    %297 = arith.mulf %266, %296 : vector<17x32xf32>
    %cst_141 = arith.constant dense<0.000000e+00> : vector<17x32xf32>
    %298 = tpu.matmul %295, %297, %cst_141 {dimension_numbers = #tpu.dot_dimension_numbers<[1], [0], [0], [1], [0, 0, 1, 1], [], []>} : vector<17x17xf32>, vector<17x32xf32>, vector<17x32xf32> -> vector<17x32xf32>
    %299 = arith.addf %283, %298 : vector<17x32xf32>
    %300 = vector.broadcast %27 : vector<1x32xf32> to vector<17x32xf32>
    %301 = arith.mulf %260, %300 : vector<17x32xf32>
    %cst_142 = arith.constant dense<0.000000e+00> : vector<17x17xf32>
    %302 = tpu.matmul %301, %263, %cst_142 {dimension_numbers = #tpu.dot_dimension_numbers<[1], [1], [0], [0], [0, 0, 1, 0], [], []>} : vector<17x32xf32>, vector<17x32xf32>, vector<17x17xf32> -> vector<17x17xf32>
    %cst_143 = arith.constant dense<0xFF800000> : vector<17xf32>
    %303 = vector.multi_reduction <maximumf>, %302, %cst_143 [1] : vector<17x17xf32> to vector<17xf32>
    %304 = vector.shape_cast %303 : vector<17xf32> to vector<17x1xf32>
    %305 = vector.broadcast %304 : vector<17x1xf32> to vector<17x17xf32>
    %306 = arith.subf %302, %305 : vector<17x17xf32>
    %307 = math.exp %306 : vector<17x17xf32>
    %cst_144 = arith.constant dense<0.000000e+00> : vector<17xf32>
    %308 = vector.multi_reduction <add>, %307, %cst_144 [1] : vector<17x17xf32> to vector<17xf32>
    %309 = vector.shape_cast %308 : vector<17xf32> to vector<17x1xf32>
    %310 = vector.broadcast %309 : vector<17x1xf32> to vector<17x17xf32>
    %311 = arith.divf %307, %310 : vector<17x17xf32>
    %312 = vector.broadcast %27 : vector<1x32xf32> to vector<17x32xf32>
    %313 = arith.mulf %266, %312 : vector<17x32xf32>
    %cst_145 = arith.constant dense<0.000000e+00> : vector<17x32xf32>
    %314 = tpu.matmul %311, %313, %cst_145 {dimension_numbers = #tpu.dot_dimension_numbers<[1], [0], [0], [1], [0, 0, 1, 1], [], []>} : vector<17x17xf32>, vector<17x32xf32>, vector<17x32xf32> -> vector<17x32xf32>
    %315 = arith.addf %299, %314 : vector<17x32xf32>
    %316 = vector.broadcast %34 : vector<1x32xf32> to vector<17x32xf32>
    %317 = arith.mulf %260, %316 : vector<17x32xf32>
    %cst_146 = arith.constant dense<0.000000e+00> : vector<17x17xf32>
    %318 = tpu.matmul %317, %263, %cst_146 {dimension_numbers = #tpu.dot_dimension_numbers<[1], [1], [0], [0], [0, 0, 1, 0], [], []>} : vector<17x32xf32>, vector<17x32xf32>, vector<17x17xf32> -> vector<17x17xf32>
    %cst_147 = arith.constant dense<0xFF800000> : vector<17xf32>
    %319 = vector.multi_reduction <maximumf>, %318, %cst_147 [1] : vector<17x17xf32> to vector<17xf32>
    %320 = vector.shape_cast %319 : vector<17xf32> to vector<17x1xf32>
    %321 = vector.broadcast %320 : vector<17x1xf32> to vector<17x17xf32>
    %322 = arith.subf %318, %321 : vector<17x17xf32>
    %323 = math.exp %322 : vector<17x17xf32>
    %cst_148 = arith.constant dense<0.000000e+00> : vector<17xf32>
    %324 = vector.multi_reduction <add>, %323, %cst_148 [1] : vector<17x17xf32> to vector<17xf32>
    %325 = vector.shape_cast %324 : vector<17xf32> to vector<17x1xf32>
    %326 = vector.broadcast %325 : vector<17x1xf32> to vector<17x17xf32>
    %327 = arith.divf %323, %326 : vector<17x17xf32>
    %328 = vector.broadcast %34 : vector<1x32xf32> to vector<17x32xf32>
    %329 = arith.mulf %266, %328 : vector<17x32xf32>
    %cst_149 = arith.constant dense<0.000000e+00> : vector<17x32xf32>
    %330 = tpu.matmul %327, %329, %cst_149 {dimension_numbers = #tpu.dot_dimension_numbers<[1], [0], [0], [1], [0, 0, 1, 1], [], []>} : vector<17x17xf32>, vector<17x32xf32>, vector<17x32xf32> -> vector<17x32xf32>
    %331 = arith.addf %315, %330 : vector<17x32xf32>
    %c1_150 = arith.constant 1 : index
    %c3_151 = arith.constant 3 : index
    %c0_152 = arith.constant 0 : index
    %c0_153 = arith.constant 0 : index
    %332 = vector.load %arg4[%c1_150, %c3_151, %c0_152, %c0_153] : memref<2x4x32x32xf32, #tpu.memory_space<vmem>>, vector<1x1x32x32xf32>
    %333 = vector.shape_cast %332 : vector<1x1x32x32xf32> to vector<32x32xf32>
    %cst_154 = arith.constant dense<0.000000e+00> : vector<17x32xf32>
    %334 = tpu.matmul %331, %333, %cst_154 {dimension_numbers = #tpu.dot_dimension_numbers<[1], [0], [0], [1], [0, 0, 1, 1], [], []>} : vector<17x32xf32>, vector<32x32xf32>, vector<17x32xf32> -> vector<17x32xf32>
    %335 = vector.broadcast %233 : vector<1x32xf32> to vector<17x32xf32>
    %336 = arith.addf %334, %335 : vector<17x32xf32>
    %337 = arith.addf %223, %336 : vector<17x32xf32>
    %cst_155 = arith.constant dense<0.000000e+00> : vector<17xf32>
    %338 = vector.multi_reduction <add>, %337, %cst_155 [1] : vector<17x32xf32> to vector<17xf32>
    %339 = vector.shape_cast %338 : vector<17xf32> to vector<17x1xf32>
    %cst_156 = arith.constant 3.200000e+01 : f32
    %340 = vector.broadcast %cst_156 : f32 to vector<17x1xf32>
    %341 = arith.divf %339, %340 : vector<17x1xf32>
    %342 = vector.broadcast %341 : vector<17x1xf32> to vector<17x32xf32>
    %343 = arith.subf %337, %342 : vector<17x32xf32>
    %344 = arith.mulf %343, %343 : vector<17x32xf32>
    %cst_157 = arith.constant dense<0.000000e+00> : vector<17xf32>
    %345 = vector.multi_reduction <add>, %344, %cst_157 [1] : vector<17x32xf32> to vector<17xf32>
    %346 = vector.shape_cast %345 : vector<17xf32> to vector<17x1xf32>
    %cst_158 = arith.constant 3.200000e+01 : f32
    %347 = vector.broadcast %cst_158 : f32 to vector<17x1xf32>
    %348 = arith.divf %346, %347 : vector<17x1xf32>
    %349 = vector.broadcast %341 : vector<17x1xf32> to vector<17x32xf32>
    %350 = arith.subf %337, %349 : vector<17x32xf32>
    %cst_159 = arith.constant 9.99999974E-6 : f32
    %351 = vector.broadcast %cst_159 : f32 to vector<17x1xf32>
    %352 = arith.addf %348, %351 : vector<17x1xf32>
    %353 = math.rsqrt %352 : vector<17x1xf32>
    %354 = vector.broadcast %353 : vector<17x1xf32> to vector<17x32xf32>
    %355 = arith.mulf %350, %354 : vector<17x32xf32>
    %356 = vector.broadcast %229 : vector<1x32xf32> to vector<17x32xf32>
    %357 = arith.mulf %355, %356 : vector<17x32xf32>
    %358 = vector.broadcast %231 : vector<1x32xf32> to vector<17x32xf32>
    %359 = arith.addf %357, %358 : vector<17x32xf32>
    %c1_160 = arith.constant 1 : index
    %c0_161 = arith.constant 0 : index
    %c0_162 = arith.constant 0 : index
    %360 = vector.load %arg5[%c1_160, %c0_161, %c0_162] : memref<2x32x128xf32, #tpu.memory_space<vmem>>, vector<1x32x128xf32>
    %361 = vector.shape_cast %360 : vector<1x32x128xf32> to vector<32x128xf32>
    %cst_163 = arith.constant dense<0.000000e+00> : vector<17x128xf32>
    %362 = tpu.matmul %359, %361, %cst_163 {dimension_numbers = #tpu.dot_dimension_numbers<[1], [0], [0], [1], [0, 0, 1, 1], [], []>} : vector<17x32xf32>, vector<32x128xf32>, vector<17x128xf32> -> vector<17x128xf32>
    %c1_164 = arith.constant 1 : index
    %c0_165 = arith.constant 0 : index
    %c0_166 = arith.constant 0 : index
    %363 = vector.load %arg8[%c1_164, %c0_165, %c0_166] : memref<2x1x128xf32, #tpu.memory_space<vmem>>, vector<1x1x128xf32>
    %364 = vector.shape_cast %363 : vector<1x1x128xf32> to vector<1x128xf32>
    %365 = vector.broadcast %364 : vector<1x128xf32> to vector<17x128xf32>
    %366 = arith.addf %362, %365 : vector<17x128xf32>
    %cst_167 = arith.constant 5.000000e-01 : f32
    %367 = vector.broadcast %cst_167 : f32 to vector<17x128xf32>
    %368 = arith.mulf %367, %366 : vector<17x128xf32>
    %cst_168 = arith.constant 0.707106769 : f32
    %369 = vector.broadcast %cst_168 : f32 to vector<17x128xf32>
    %370 = arith.mulf %366, %369 : vector<17x128xf32>
    %371 = math.absf %370 : vector<17x128xf32>
    %cst_169 = arith.constant 0.327591091 : f32
    %372 = vector.broadcast %cst_169 : f32 to vector<17x128xf32>
    %373 = arith.mulf %372, %371 : vector<17x128xf32>
    %cst_170 = arith.constant 1.000000e+00 : f32
    %374 = vector.broadcast %cst_170 : f32 to vector<17x128xf32>
    %375 = arith.addf %374, %373 : vector<17x128xf32>
    %cst_171 = arith.constant 1.000000e+00 : f32
    %376 = vector.broadcast %cst_171 : f32 to vector<17x128xf32>
    %377 = arith.divf %376, %375 : vector<17x128xf32>
    %cst_172 = arith.constant 1.06140542 : f32
    %378 = vector.broadcast %cst_172 : f32 to vector<17x128xf32>
    %379 = arith.mulf %378, %377 : vector<17x128xf32>
    %cst_173 = arith.constant -1.45315206 : f32
    %380 = vector.broadcast %cst_173 : f32 to vector<17x128xf32>
    %381 = arith.addf %379, %380 : vector<17x128xf32>
    %382 = arith.mulf %381, %377 : vector<17x128xf32>
    %cst_174 = arith.constant 1.42141378 : f32
    %383 = vector.broadcast %cst_174 : f32 to vector<17x128xf32>
    %384 = arith.addf %382, %383 : vector<17x128xf32>
    %385 = arith.mulf %384, %377 : vector<17x128xf32>
    %cst_175 = arith.constant -0.284496725 : f32
    %386 = vector.broadcast %cst_175 : f32 to vector<17x128xf32>
    %387 = arith.addf %385, %386 : vector<17x128xf32>
    %388 = arith.mulf %387, %377 : vector<17x128xf32>
    %cst_176 = arith.constant 0.254829586 : f32
    %389 = vector.broadcast %cst_176 : f32 to vector<17x128xf32>
    %390 = arith.addf %388, %389 : vector<17x128xf32>
    %391 = arith.mulf %390, %377 : vector<17x128xf32>
    %cst_177 = arith.constant 0.000000e+00 : f32
    %392 = vector.broadcast %cst_177 : f32 to vector<17x128xf32>
    %393 = arith.subf %392, %371 : vector<17x128xf32>
    %394 = arith.mulf %393, %371 : vector<17x128xf32>
    %395 = math.exp %394 : vector<17x128xf32>
    %396 = arith.mulf %391, %395 : vector<17x128xf32>
    %cst_178 = arith.constant 1.000000e+00 : f32
    %397 = vector.broadcast %cst_178 : f32 to vector<17x128xf32>
    %398 = arith.subf %397, %396 : vector<17x128xf32>
    %cst_179 = arith.constant 0.000000e+00 : f32
    %399 = vector.broadcast %cst_179 : f32 to vector<17x128xf32>
    %400 = arith.cmpf oge, %370, %399 : vector<17x128xf32>
    %cst_180 = arith.constant 0.000000e+00 : f32
    %401 = vector.broadcast %cst_180 : f32 to vector<17x128xf32>
    %402 = arith.subf %401, %398 : vector<17x128xf32>
    %403 = arith.select %400, %398, %402 : vector<17x128xi1>, vector<17x128xf32>
    %cst_181 = arith.constant 1.000000e+00 : f32
    %404 = vector.broadcast %cst_181 : f32 to vector<17x128xf32>
    %405 = arith.addf %404, %403 : vector<17x128xf32>
    %406 = arith.mulf %368, %405 : vector<17x128xf32>
    %c1_182 = arith.constant 1 : index
    %c0_183 = arith.constant 0 : index
    %c0_184 = arith.constant 0 : index
    %407 = vector.load %arg6[%c1_182, %c0_183, %c0_184] : memref<2x128x32xf32, #tpu.memory_space<vmem>>, vector<1x128x32xf32>
    %408 = vector.shape_cast %407 : vector<1x128x32xf32> to vector<128x32xf32>
    %cst_185 = arith.constant dense<0.000000e+00> : vector<17x32xf32>
    %409 = tpu.matmul %406, %408, %cst_185 {dimension_numbers = #tpu.dot_dimension_numbers<[1], [0], [0], [1], [0, 0, 1, 1], [], []>} : vector<17x128xf32>, vector<128x32xf32>, vector<17x32xf32> -> vector<17x32xf32>
    %410 = vector.broadcast %235 : vector<1x32xf32> to vector<17x32xf32>
    %411 = arith.addf %409, %410 : vector<17x32xf32>
    %412 = arith.addf %337, %411 : vector<17x32xf32>
    %413 = tpu.iota {dimensions = array<i32: 1>} : vector<1x17xi32>
    %c0_i32_186 = arith.constant 0 : i32
    %414 = vector.broadcast %c0_i32_186 : i32 to vector<1x17xi32>
    %415 = arith.cmpi eq, %413, %414 : vector<1x17xi32>
    %416 = arith.extui %415 : vector<1x17xi1> to vector<1x17xi32>
    %417 = arith.sitofp %416 : vector<1x17xi32> to vector<1x17xf32>
    %cst_187 = arith.constant dense<0.000000e+00> : vector<1x32xf32>
    %418 = tpu.matmul %417, %412, %cst_187 {dimension_numbers = #tpu.dot_dimension_numbers<[1], [0], [0], [1], [0, 0, 1, 1], [], []>} : vector<1x17xf32>, vector<17x32xf32>, vector<1x32xf32> -> vector<1x32xf32>
    %c0_188 = arith.constant 0 : index
    %c0_189 = arith.constant 0 : index
    %419 = vector.load %arg9[%c0_188, %c0_189] : memref<2x32xf32, #tpu.memory_space<vmem>>, vector<1x32xf32>
    %c1_190 = arith.constant 1 : index
    %c0_191 = arith.constant 0 : index
    %420 = vector.load %arg9[%c1_190, %c0_191] : memref<2x32xf32, #tpu.memory_space<vmem>>, vector<1x32xf32>
    %cst_192 = arith.constant dense<0.000000e+00> : vector<1xf32>
    %421 = vector.multi_reduction <add>, %418, %cst_192 [1] : vector<1x32xf32> to vector<1xf32>
    %422 = vector.shape_cast %421 : vector<1xf32> to vector<1x1xf32>
    %cst_193 = arith.constant 3.200000e+01 : f32
    %423 = vector.broadcast %cst_193 : f32 to vector<1x1xf32>
    %424 = arith.divf %422, %423 : vector<1x1xf32>
    %425 = vector.broadcast %424 : vector<1x1xf32> to vector<1x32xf32>
    %426 = arith.subf %418, %425 : vector<1x32xf32>
    %427 = arith.mulf %426, %426 : vector<1x32xf32>
    %cst_194 = arith.constant dense<0.000000e+00> : vector<1xf32>
    %428 = vector.multi_reduction <add>, %427, %cst_194 [1] : vector<1x32xf32> to vector<1xf32>
    %429 = vector.shape_cast %428 : vector<1xf32> to vector<1x1xf32>
    %cst_195 = arith.constant 3.200000e+01 : f32
    %430 = vector.broadcast %cst_195 : f32 to vector<1x1xf32>
    %431 = arith.divf %429, %430 : vector<1x1xf32>
    %432 = vector.broadcast %424 : vector<1x1xf32> to vector<1x32xf32>
    %433 = arith.subf %418, %432 : vector<1x32xf32>
    %cst_196 = arith.constant 9.99999974E-6 : f32
    %434 = vector.broadcast %cst_196 : f32 to vector<1x1xf32>
    %435 = arith.addf %431, %434 : vector<1x1xf32>
    %436 = math.rsqrt %435 : vector<1x1xf32>
    %437 = vector.broadcast %436 : vector<1x1xf32> to vector<1x32xf32>
    %438 = arith.mulf %433, %437 : vector<1x32xf32>
    %439 = arith.mulf %438, %419 : vector<1x32xf32>
    %440 = arith.addf %439, %420 : vector<1x32xf32>
    %c0_197 = arith.constant 0 : index
    %c0_198 = arith.constant 0 : index
    %441 = vector.load %arg10[%c0_197, %c0_198] : memref<32x10xf32, #tpu.memory_space<vmem>>, vector<32x10xf32>
    %cst_199 = arith.constant dense<0.000000e+00> : vector<1x10xf32>
    %442 = tpu.matmul %440, %441, %cst_199 {dimension_numbers = #tpu.dot_dimension_numbers<[1], [0], [0], [1], [0, 0, 1, 1], [], []>} : vector<1x32xf32>, vector<32x10xf32>, vector<1x10xf32> -> vector<1x10xf32>
    %c0_200 = arith.constant 0 : index
    %c0_201 = arith.constant 0 : index
    %443 = vector.load %arg11[%c0_200, %c0_201] : memref<1x10xf32, #tpu.memory_space<vmem>>, vector<1x10xf32>
    %444 = arith.addf %442, %443 : vector<1x10xf32>
    %c0_202 = arith.constant 0 : index
    %c0_203 = arith.constant 0 : index
    %c0_204 = arith.constant 0 : index
    %445 = vector.load %arg12[%c0_202, %c0_203, %c0_204] : memref<1x1x10xf32, #tpu.memory_space<vmem>>, vector<1x1x10xf32>
    %446 = vector.shape_cast %445 : vector<1x1x10xf32> to vector<1x10xf32>
    %447 = vector.shape_cast %444 : vector<1x10xf32> to vector<1x1x10xf32>
    tpu.vector_store %arg12[%c0_202, %c0_203, %c0_204], %447 {strides = array<i32>} : memref<1x1x10xf32, #tpu.memory_space<vmem>>, vector<1x1x10xf32>,
    return
  }
  func.func @transform_0(%arg0: i32) -> (i32, i32, i32) {
    %c0_i32 = arith.constant 0 : i32
    %c0_i32_0 = arith.constant 0 : i32
    %c0_i32_1 = arith.constant 0 : i32
    return %arg0, %c0_i32, %c0_i32_0 : i32, i32, i32
  }
  func.func @transform_1(%arg0: i32) -> (i32, i32) {
    %c0_i32 = arith.constant 0 : i32
    %c0_i32_0 = arith.constant 0 : i32
    %c0_i32_1 = arith.constant 0 : i32
    return %c0_i32, %c0_i32_0 : i32, i32
  }
  func.func @transform_2(%arg0: i32) -> (i32, i32) {
    %c0_i32 = arith.constant 0 : i32
    %c0_i32_0 = arith.constant 0 : i32
    %c0_i32_1 = arith.constant 0 : i32
    return %c0_i32, %c0_i32_0 : i32, i32
  }
  func.func @transform_3(%arg0: i32) -> (i32, i32, i32, i32) {
    %c0_i32 = arith.constant 0 : i32
    %c0_i32_0 = arith.constant 0 : i32
    %c0_i32_1 = arith.constant 0 : i32
    %c0_i32_2 = arith.constant 0 : i32
    %c0_i32_3 = arith.constant 0 : i32
    return %c0_i32, %c0_i32_0, %c0_i32_1, %c0_i32_2 : i32, i32, i32, i32
  }
  func.func @transform_4(%arg0: i32) -> (i32, i32, i32) {
    %c0_i32 = arith.constant 0 : i32
    %c0_i32_0 = arith.constant 0 : i32
    %c0_i32_1 = arith.constant 0 : i32
    %c0_i32_2 = arith.constant 0 : i32
    return %c0_i32, %c0_i32_0, %c0_i32_1 : i32, i32, i32
  }
  func.func @transform_5(%arg0: i32) -> (i32, i32, i32) {
    %c0_i32 = arith.constant 0 : i32
    %c0_i32_0 = arith.constant 0 : i32
    %c0_i32_1 = arith.constant 0 : i32
    %c0_i32_2 = arith.constant 0 : i32
    return %c0_i32, %c0_i32_0, %c0_i32_1 : i32, i32, i32
  }
  func.func @transform_6(%arg0: i32) -> (i32, i32, i32) {
    %c0_i32 = arith.constant 0 : i32
    %c0_i32_0 = arith.constant 0 : i32
    %c0_i32_1 = arith.constant 0 : i32
    %c0_i32_2 = arith.constant 0 : i32
    return %c0_i32, %c0_i32_0, %c0_i32_1 : i32, i32, i32
  }
  func.func @transform_7(%arg0: i32) -> (i32, i32, i32) {
    %c0_i32 = arith.constant 0 : i32
    %c0_i32_0 = arith.constant 0 : i32
    %c0_i32_1 = arith.constant 0 : i32
    %c0_i32_2 = arith.constant 0 : i32
    return %c0_i32, %c0_i32_0, %c0_i32_1 : i32, i32, i32
  }
  func.func @transform_8(%arg0: i32) -> (i32, i32) {
    %c0_i32 = arith.constant 0 : i32
    %c0_i32_0 = arith.constant 0 : i32
    %c0_i32_1 = arith.constant 0 : i32
    return %c0_i32, %c0_i32_0 : i32, i32
  }
  func.func @transform_9(%arg0: i32) -> (i32, i32) {
    %c0_i32 = arith.constant 0 : i32
    %c0_i32_0 = arith.constant 0 : i32
    %c0_i32_1 = arith.constant 0 : i32
    return %c0_i32, %c0_i32_0 : i32, i32
  }
  func.func @transform_10(%arg0: i32) -> (i32, i32) {
    %c0_i32 = arith.constant 0 : i32
    %c0_i32_0 = arith.constant 0 : i32
    %c0_i32_1 = arith.constant 0 : i32
    return %c0_i32, %c0_i32_0 : i32, i32
  }
  func.func @transform_11(%arg0: i32) -> (i32, i32, i32) {
    %c0_i32 = arith.constant 0 : i32
    %c0_i32_0 = arith.constant 0 : i32
    %c0_i32_1 = arith.constant 0 : i32
    return %arg0, %c0_i32, %c0_i32_0 : i32, i32, i32
  }
}

</mosaic_0001>

<llo_original>
// kernel: vit_forward.1
$region0: #{vit_forward.1}
  #allocation0 [shape = 'u32[]', space=smem, size = 0x4, offset = 0x4, fixed_abs, tag = 'smem constant byte address 0x4 - core index']
  #allocation1 [shape = 'u32[72,128]{1,0:T(1,128)}', space=vmem, size = 0x9000, scoped, tag = 'internal scratch']
  %s0 = inlined_call_operand.vmem [shape: f32[2,17,48], index: 0, kind: input, shape index: {}]
  %s1 = inlined_call_operand.vmem [shape: f32[17,32], index: 1, kind: input, shape index: {}]
  %s2 = inlined_call_operand.vmem [shape: f32[48,32], index: 2, kind: input, shape index: {}]
  %s3 = inlined_call_operand.vmem [shape: f32[2,4,32,32], index: 3, kind: input, shape index: {}]
  %s4 = inlined_call_operand.vmem [shape: f32[2,32,128], index: 4, kind: input, shape index: {}]
  %s5 = inlined_call_operand.vmem [shape: f32[2,128,32], index: 5, kind: input, shape index: {}]
  %s6 = inlined_call_operand.vmem [shape: f32[2,6,32], index: 6, kind: input, shape index: {}]
  %s7 = inlined_call_operand.vmem [shape: f32[2,1,128], index: 7, kind: input, shape index: {}]
  %s8 = inlined_call_operand.vmem [shape: f32[2,32], index: 8, kind: input, shape index: {}]
  %s9 = inlined_call_operand.vmem [shape: f32[32,10], index: 9, kind: input, shape index: {}]
  %s10 = inlined_call_operand.vmem [shape: f32[1,10], index: 10, kind: input, shape index: {}]
  %s11 = inlined_call_operand.hbm [shape: f32[2,1,10], index: 11, kind: output, shape index: {}]
  %s12 = sld [smem:[#allocation0]]
  $region77: #{vit_forward.1} parent=0
    _
  %s14 = ssub.s32 1, %s12
  %s15 = scalar_select 0, %s14, %s12
  $region1: #{vit_forward.1} parent=0
    #allocation2 [shape = 'u8[1024]{0}', space=vmem, size = 0x400, scoped, tag = 'output window, operand 0']
    #allocation3 [shape = 's32[2]{0}', space=sflag, size = 0x8, scoped, tag = 'scoped memory for vit_forward.1']
    %16 = vsyncpa [#allocation3], 0
    %s17 = scalar_lea.sflag [#allocation3], 1
    %18 = vsyncpa %s17, 0
    loop: start=0, step=1, limit=4
    $region2: #{vit_forward.1} parent=1 // loop_pre_header
      _
    $region3: #{vit_forward.1} parent=1 // loop_header
      %s20 = sphi 0, %s24
      %p21 = scmp.ge.s32.totalorder %s20, 4
      %s30 = sphi 0, %s32
      %s33 = sphi 0, %s30
      %s34 = sphi 0, %s33
      %s50 = sphi 0, %s34
      %s54 = sphi 0, %s54
      %s56 = sphi 0, %s54
      %s57 = sphi 0, %s56
      %s71 = sphi 0, %s57
      %s75 = sphi 0, %s75
      %s77 = sphi 0, %s75
      %s78 = sphi 0, %s77
      %s92 = sphi 0, %s78
      %s96 = sphi 0, %s96
      %s98 = sphi 0, %s96
      %s99 = sphi 0, %s98
      %s113 = sphi 0, %s99
      %s117 = sphi 0, %s117
      %s119 = sphi 0, %s117
      %s120 = sphi 0, %s119
      %s134 = sphi 0, %s120
      %s138 = sphi 0, %s138
      %s140 = sphi 0, %s138
      %s141 = sphi 0, %s140
      %s155 = sphi 0, %s141
      %s159 = sphi 0, %s159
      %s161 = sphi 0, %s159
      %s162 = sphi 0, %s161
      %s176 = sphi 0, %s162
      %s180 = sphi 0, %s180
      %s182 = sphi 0, %s180
      %s183 = sphi 0, %s182
      %s197 = sphi 0, %s183
      %s201 = sphi 0, %s201
      %s203 = sphi 0, %s201
      %s204 = sphi 0, %s203
      %s218 = sphi 0, %s204
      %s222 = sphi 0, %s222
      %s224 = sphi 0, %s222
      %s225 = sphi 0, %s224
      %s239 = sphi 0, %s225
      %s243 = sphi 0, %s243
      %s245 = sphi 0, %s243
      %s246 = sphi 0, %s245
      %s260 = sphi 0, %s246
      %s266 = sphi 0, %s268
      %s269 = sphi 0, %s266
      %s270 = sphi 0, %s269
      %s286 = sphi 0, %s270
    $region4: #{vit_forward.1} parent=1 // loop_header_branch
      %23 = sbr.rel (%p21) target = $region8
    $region5: #{vit_forward.1} parent=1 // loop_body
      %s25 = ssub.s32 %s20, 1
      %s26 = ssub.s32 %s20, 2
      %s27 = sadd.s32 %s20, 1
      %s28 = ssub.s32 %s20, %s27
      %p29 = scmp.eq.s32.totalorder %s28, 0
      %s31 = sadd.s32 %s30, 1
      %s32 = scalar_select %p29, %s30, %s31
      %p35 = pneg %p29
      %p36 = scmp.eq.s32.totalorder %s20, 1
      %p37 = por %p35, %p36
      %p38 = scmp.ne.s32.totalorder %s30, %s33
      %p39 = scmp.eq.s32.totalorder %s20, 0
      %p40 = por %p38, %p39
      %p41 = scmp.ne.s32.totalorder %s30, %s33
      %p42 = scmp.eq.s32.totalorder %s25, 1
      %p43 = por %p41, %p42
      %p44 = scmp.ne.s32.totalorder %s33, %s34
      %p45 = scmp.eq.s32.totalorder %s25, 0
      %p46 = por %p44, %p45
      %p47 = scmp.ne.s32.totalorder %s33, %s34
      %p48 = scmp.eq.s32.totalorder %s26, 1
      %p49 = por %p47, %p48
      %p51 = scmp.ne.s32.totalorder %s34, %s50
      %p52 = scmp.eq.s32.totalorder %s26, 0
      %p53 = por %p51, %p52
      %s55 = sadd.s32 %s54, 1
      %p58 = scmp.eq.s32.totalorder %s20, 1
      %p59 = scmp.ne.s32.totalorder %s54, %s56
      %p60 = scmp.eq.s32.totalorder %s20, 0
      %p61 = por %p59, %p60
      %p62 = scmp.ne.s32.totalorder %s54, %s56
      %p63 = scmp.eq.s32.totalorder %s25, 1
      %p64 = por %p62, %p63
      %p65 = scmp.ne.s32.totalorder %s56, %s57
      %p66 = scmp.eq.s32.totalorder %s25, 0
      %p67 = por %p65, %p66
      %p68 = scmp.ne.s32.totalorder %s56, %s57
      %p69 = scmp.eq.s32.totalorder %s26, 1
      %p70 = por %p68, %p69
      %p72 = scmp.ne.s32.totalorder %s57, %s71
      %p73 = scmp.eq.s32.totalorder %s26, 0
      %p74 = por %p72, %p73
      %s76 = sadd.s32 %s75, 1
      %p79 = scmp.eq.s32.totalorder %s20, 1
      %p80 = scmp.ne.s32.totalorder %s75, %s77
      %p81 = scmp.eq.s32.totalorder %s20, 0
      %p82 = por %p80, %p81
      %p83 = scmp.ne.s32.totalorder %s75, %s77
      %p84 = scmp.eq.s32.totalorder %s25, 1
      %p85 = por %p83, %p84
      %p86 = scmp.ne.s32.totalorder %s77, %s78
      %p87 = scmp.eq.s32.totalorder %s25, 0
      %p88 = por %p86, %p87
      %p89 = scmp.ne.s32.totalorder %s77, %s78
      %p90 = scmp.eq.s32.totalorder %s26, 1
      %p91 = por %p89, %p90
      %p93 = scmp.ne.s32.totalorder %s78, %s92
      %p94 = scmp.eq.s32.totalorder %s26, 0
      %p95 = por %p93, %p94
      %s97 = sadd.s32 %s96, 1
      %p100 = scmp.eq.s32.totalorder %s20, 1
      %p101 = scmp.ne.s32.totalorder %s96, %s98
      %p102 = scmp.eq.s32.totalorder %s20, 0
      %p103 = por %p101, %p102
      %p104 = scmp.ne.s32.totalorder %s96, %s98
      %p105 = scmp.eq.s32.totalorder %s25, 1
      %p106 = por %p104, %p105
      %p107 = scmp.ne.s32.totalorder %s98, %s99
      %p108 = scmp.eq.s32.totalorder %s25, 0
      %p109 = por %p107, %p108
      %p110 = scmp.ne.s32.totalorder %s98, %s99
      %p111 = scmp.eq.s32.totalorder %s26, 1
      %p112 = por %p110, %p111
      %p114 = scmp.ne.s32.totalorder %s99, %s113
      %p115 = scmp.eq.s32.totalorder %s26, 0
      %p116 = por %p114, %p115
      %s118 = sadd.s32 %s117, 1
      %p121 = scmp.eq.s32.totalorder %s20, 1
      %p122 = scmp.ne.s32.totalorder %s117, %s119
      %p123 = scmp.eq.s32.totalorder %s20, 0
      %p124 = por %p122, %p123
      %p125 = scmp.ne.s32.totalorder %s117, %s119
      %p126 = scmp.eq.s32.totalorder %s25, 1
      %p127 = por %p125, %p126
      %p128 = scmp.ne.s32.totalorder %s119, %s120
      %p129 = scmp.eq.s32.totalorder %s25, 0
      %p130 = por %p128, %p129
      %p131 = scmp.ne.s32.totalorder %s119, %s120
      %p132 = scmp.eq.s32.totalorder %s26, 1
      %p133 = por %p131, %p132
      %p135 = scmp.ne.s32.totalorder %s120, %s134
      %p136 = scmp.eq.s32.totalorder %s26, 0
      %p137 = por %p135, %p136
      %s139 = sadd.s32 %s138, 1
      %p142 = scmp.eq.s32.totalorder %s20, 1
      %p143 = scmp.ne.s32.totalorder %s138, %s140
      %p144 = scmp.eq.s32.totalorder %s20, 0
      %p145 = por %p143, %p144
      %p146 = scmp.ne.s32.totalorder %s138, %s140
      %p147 = scmp.eq.s32.totalorder %s25, 1
      %p148 = por %p146, %p147
      %p149 = scmp.ne.s32.totalorder %s140, %s141
      %p150 = scmp.eq.s32.totalorder %s25, 0
      %p151 = por %p149, %p150
      %p152 = scmp.ne.s32.totalorder %s140, %s141
      %p153 = scmp.eq.s32.totalorder %s26, 1
      %p154 = por %p152, %p153
      %p156 = scmp.ne.s32.totalorder %s141, %s155
      %p157 = scmp.eq.s32.totalorder %s26, 0
      %p158 = por %p156, %p157
      %s160 = sadd.s32 %s159, 1
      %p163 = scmp.eq.s32.totalorder %s20, 1
      %p164 = scmp.ne.s32.totalorder %s159, %s161
      %p165 = scmp.eq.s32.totalorder %s20, 0
      %p166 = por %p164, %p165
      %p167 = scmp.ne.s32.totalorder %s159, %s161
      %p168 = scmp.eq.s32.totalorder %s25, 1
      %p169 = por %p167, %p168
      %p170 = scmp.ne.s32.totalorder %s161, %s162
      %p171 = scmp.eq.s32.totalorder %s25, 0
      %p172 = por %p170, %p171
      %p173 = scmp.ne.s32.totalorder %s161, %s162
      %p174 = scmp.eq.s32.totalorder %s26, 1
      %p175 = por %p173, %p174
      %p177 = scmp.ne.s32.totalorder %s162, %s176
      %p178 = scmp.eq.s32.totalorder %s26, 0
      %p179 = por %p177, %p178
      %s181 = sadd.s32 %s180, 1
      %p184 = scmp.eq.s32.totalorder %s20, 1
      %p185 = scmp.ne.s32.totalorder %s180, %s182
      %p186 = scmp.eq.s32.totalorder %s20, 0
      %p187 = por %p185, %p186
      %p188 = scmp.ne.s32.totalorder %s180, %s182
      %p189 = scmp.eq.s32.totalorder %s25, 1
      %p190 = por %p188, %p189
      %p191 = scmp.ne.s32.totalorder %s182, %s183
      %p192 = scmp.eq.s32.totalorder %s25, 0
      %p193 = por %p191, %p192
      %p194 = scmp.ne.s32.totalorder %s182, %s183
      %p195 = scmp.eq.s32.totalorder %s26, 1
      %p196 = por %p194, %p195
      %p198 = scmp.ne.s32.totalorder %s183, %s197
      %p199 = scmp.eq.s32.totalorder %s26, 0
      %p200 = por %p198, %p199
      %s202 = sadd.s32 %s201, 1
      %p205 = scmp.eq.s32.totalorder %s20, 1
      %p206 = scmp.ne.s32.totalorder %s201, %s203
      %p207 = scmp.eq.s32.totalorder %s20, 0
      %p208 = por %p206, %p207
      %p209 = scmp.ne.s32.totalorder %s201, %s203
      %p210 = scmp.eq.s32.totalorder %s25, 1
      %p211 = por %p209, %p210
      %p212 = scmp.ne.s32.totalorder %s203, %s204
      %p213 = scmp.eq.s32.totalorder %s25, 0
      %p214 = por %p212, %p213
      %p215 = scmp.ne.s32.totalorder %s203, %s204
      %p216 = scmp.eq.s32.totalorder %s26, 1
      %p217 = por %p215, %p216
      %p219 = scmp.ne.s32.totalorder %s204, %s218
      %p220 = scmp.eq.s32.totalorder %s26, 0
      %p221 = por %p219, %p220
      %s223 = sadd.s32 %s222, 1
      %p226 = scmp.eq.s32.totalorder %s20, 1
      %p227 = scmp.ne.s32.totalorder %s222, %s224
      %p228 = scmp.eq.s32.totalorder %s20, 0
      %p229 = por %p227, %p228
      %p230 = scmp.ne.s32.totalorder %s222, %s224
      %p231 = scmp.eq.s32.totalorder %s25, 1
      %p232 = por %p230, %p231
      %p233 = scmp.ne.s32.totalorder %s224, %s225
      %p234 = scmp.eq.s32.totalorder %s25, 0
      %p235 = por %p233, %p234
      %p236 = scmp.ne.s32.totalorder %s224, %s225
      %p237 = scmp.eq.s32.totalorder %s26, 1
      %p238 = por %p236, %p237
      %p240 = scmp.ne.s32.totalorder %s225, %s239
      %p241 = scmp.eq.s32.totalorder %s26, 0
      %p242 = por %p240, %p241
      %s244 = sadd.s32 %s243, 1
      %p247 = scmp.eq.s32.totalorder %s20, 1
      %p248 = scmp.ne.s32.totalorder %s243, %s245
      %p249 = scmp.eq.s32.totalorder %s20, 0
      %p250 = por %p248, %p249
      %p251 = scmp.ne.s32.totalorder %s243, %s245
      %p252 = scmp.eq.s32.totalorder %s25, 1
      %p253 = por %p251, %p252
      %p254 = scmp.ne.s32.totalorder %s245, %s246
      %p255 = scmp.eq.s32.totalorder %s25, 0
      %p256 = por %p254, %p255
      %p257 = scmp.ne.s32.totalorder %s245, %s246
      %p258 = scmp.eq.s32.totalorder %s26, 1
      %p259 = por %p257, %p258
      %p261 = scmp.ne.s32.totalorder %s246, %s260
      %p262 = scmp.eq.s32.totalorder %s26, 0
      %p263 = por %p261, %p262
      %s264 = ssub.s32 %s20, %s27
      %p265 = scmp.eq.s32.totalorder %s264, 0
      %s267 = sadd.s32 %s266, 1
      %s268 = scalar_select %p265, %s266, %s267
      %p271 = pneg %p265
      %p272 = scmp.eq.s32.totalorder %s20, 1
      %p273 = por %p271, %p272
      %p274 = scmp.ne.s32.totalorder %s266, %s269
      %p275 = scmp.eq.s32.totalorder %s20, 0
      %p276 = por %p274, %p275
      %p277 = scmp.ne.s32.totalorder %s266, %s269
      %p278 = scmp.eq.s32.totalorder %s25, 1
      %p279 = por %p277, %p278
      %p280 = scmp.ne.s32.totalorder %s269, %s270
      %p281 = scmp.eq.s32.totalorder %s25, 0
      %p282 = por %p280, %p281
      %p283 = scmp.ne.s32.totalorder %s269, %s270
      %p284 = scmp.eq.s32.totalorder %s26, 1
      %p285 = por %p283, %p284
      %p287 = scmp.ne.s32.totalorder %s270, %s286
      %p288 = scmp.eq.s32.totalorder %s26, 0
      %p289 = por %p287, %p288
      %p290 = scmp.le.s32.totalorder 1, %s20
      %p291 = scmp.lt.s32.totalorder %s20, 3
      %p292 = pnand %p290, %p291
      %p293 = pneg %p292
      // Predicated region
      $region9: #{vit_forward.1} parent=5 // pred_check
        _
      $region10: #{vit_forward.1} parent=5 // pred_check_branch
        %295 = sbr.rel (%p292) target = $region12
      $region11: #{vit_forward.1} parent=5 // pred_region
        %s296 = ssub.s32 %s20, 1
        // Predicated region
        $region13: #{vit_forward.1} parent=11 // pred_check
          %p297 = pneg %p67
        $region14: #{vit_forward.1} parent=11 // pred_check_branch
          %299 = sbr.rel (%p297) target = $region16
        $region15: #{vit_forward.1} parent=11 // pred_region
          _
        $region16: #{vit_forward.1} parent=11 // pred_fallthru
          _
        // Predicated region
        $region17: #{vit_forward.1} parent=11 // pred_check
          %p300 = pneg %p88
        $region18: #{vit_forward.1} parent=11 // pred_check_branch
          %302 = sbr.rel (%p300) target = $region20
        $region19: #{vit_forward.1} parent=11 // pred_region
          _
        $region20: #{vit_forward.1} parent=11 // pred_fallthru
          _
        // Predicated region
        $region21: #{vit_forward.1} parent=11 // pred_check
          %p303 = pneg %p109
        $region22: #{vit_forward.1} parent=11 // pred_check_branch
          %305 = sbr.rel (%p303) target = $region24
        $region23: #{vit_forward.1} parent=11 // pred_region
          _
        $region24: #{vit_forward.1} parent=11 // pred_fallthru
          _
        // Predicated region
        $region25: #{vit_forward.1} parent=11 // pred_check
          %p306 = pneg %p130
        $region26: #{vit_forward.1} parent=11 // pred_check_branch
          %308 = sbr.rel (%p306) target = $region28
        $region27: #{vit_forward.1} parent=11 // pred_region
          _
        $region28: #{vit_forward.1} parent=11 // pred_fallthru
          _
        // Predicated region
        $region29: #{vit_forward.1} parent=11 // pred_check
          %p309 = pneg %p151
        $region30: #{vit_forward.1} parent=11 // pred_check_branch
          %311 = sbr.rel (%p309) target = $region32
        $region31: #{vit_forward.1} parent=11 // pred_region
          _
        $region32: #{vit_forward.1} parent=11 // pred_fallthru
          _
        // Predicated region
        $region33: #{vit_forward.1} parent=11 // pred_check
          %p312 = pneg %p172
        $region34: #{vit_forward.1} parent=11 // pred_check_branch
          %314 = sbr.rel (%p312) target = $region36
        $region35: #{vit_forward.1} parent=11 // pred_region
          _
        $region36: #{vit_forward.1} parent=11 // pred_fallthru
          _
        // Predicated region
        $region37: #{vit_forward.1} parent=11 // pred_check
          %p315 = pneg %p193
        $region38: #{vit_forward.1} parent=11 // pred_check_branch
          %317 = sbr.rel (%p315) target = $region40
        $region39: #{vit_forward.1} parent=11 // pred_region
          _
        $region40: #{vit_forward.1} parent=11 // pred_fallthru
          _
        // Predicated region
        $region41: #{vit_forward.1} parent=11 // pred_check
          %p318 = pneg %p214
        $region42: #{vit_forward.1} parent=11 // pred_check_branch
          %320 = sbr.rel (%p318) target = $region44
        $region43: #{vit_forward.1} parent=11 // pred_region
          _
        $region44: #{vit_forward.1} parent=11 // pred_fallthru
          _
        // Predicated region
        $region45: #{vit_forward.1} parent=11 // pred_check
          %p321 = pneg %p235
        $region46: #{vit_forward.1} parent=11 // pred_check_branch
          %323 = sbr.rel (%p321) target = $region48
        $region47: #{vit_forward.1} parent=11 // pred_region
          _
        $region48: #{vit_forward.1} parent=11 // pred_fallthru
          _
        // Predicated region
        $region49: #{vit_forward.1} parent=11 // pred_check
          %p324 = pneg %p256
        $region50: #{vit_forward.1} parent=11 // pred_check_branch
          %326 = sbr.rel (%p324) target = $region52
        $region51: #{vit_forward.1} parent=11 // pred_region
          _
        $region52: #{vit_forward.1} parent=11 // pred_fallthru
          _
      $region12: #{vit_forward.1} parent=5 // pred_fallthru
        _
      %p327 = scmp.lt.s32.totalorder %s20, 2
      // Predicated region
      $region53: #{vit_forward.1} parent=5 // pred_check
        %p328 = pneg %p327
      $region54: #{vit_forward.1} parent=5 // pred_check_branch
        %330 = sbr.rel (%p328) target = $region56
      $region55: #{vit_forward.1} parent=5 // pred_region
        // Predicated region
        $region57: #{vit_forward.1} parent=55 // pred_check
          %p331 = pneg %p40
        $region58: #{vit_forward.1} parent=55 // pred_check_branch
          %333 = sbr.rel (%p331) target = $region60
        $region59: #{vit_forward.1} parent=55 // pred_region
          %p334 = scmp.lt.s32.totalorder %s20, 1
          %s335 = scalar_select %p334, %s20, 1
          %s336 = smul.addr %s335, 3
          %s337 = smul.addr %s336, 8
          %s338 = scalar_lea.vmem %s0, %s337
        $region60: #{vit_forward.1} parent=55 // pred_fallthru
          _
      $region56: #{vit_forward.1} parent=5 // pred_fallthru
        _
      %p339 = scmp.le.s32.totalorder 1, %s20
      %p340 = scmp.lt.s32.totalorder %s20, 3
      %p341 = pnand %p339, %p340
      %p342 = pneg %p341
      // Predicated region
      $region61: #{vit_forward.1} parent=5 // pred_check
        _
      $region62: #{vit_forward.1} parent=5 // pred_check_branch
        %344 = sbr.rel (%p341) target = $region64
      $region63: #{vit_forward.1} parent=5 // pred_region
        %s345 = ssub.s32 %s20, 1
        %p346 = scmp.lt.s32.totalorder %s25, 1
        %s347 = scalar_select %p346, %s25, 1
        %s348 = smul.addr %s347, 3
        %s349 = smul.addr %s348, 8
        %s350 = scalar_lea.vmem %s0, %s349
        %p351 = pneg %p46
        %p352 = pneg %p43
        %p353 = pneg %p67
        %p354 = pneg %p64
        %p355 = pneg %p88
        %p356 = pneg %p85
        %p357 = pneg %p109
        %p358 = pneg %p106
        %p359 = pneg %p130
        %p360 = pneg %p127
        %p361 = pneg %p151
        %p362 = pneg %p148
        %p363 = pneg %p172
        %p364 = pneg %p169
        %p365 = pneg %p193
        %p366 = pneg %p190
        %p367 = pneg %p214
        %p368 = pneg %p211
        %p369 = pneg %p235
        %p370 = pneg %p232
        %p371 = pneg %p256
        %p372 = pneg %p253
        %p373 = pneg %p282
        %p374 = pneg %p279
        %s375 = sand.u32 %s269, 1
        %s376 = scalar_lea.sflag [#allocation3], %s375
        %s377 = sand.u32 %s269, 1
        %s378 = scalar_lea.vmem [#allocation2], %s377
        %p379 = scmp.lt.s32.totalorder %s25, 1
        %s380 = scalar_select %p379, %s25, 1
        %s381 = smul.addr %s380, 3
        %s382 = smul.addr %s381, 8
        %s383 = scalar_lea.vmem %s0, %s382
        %v384 = vld [vmem:[%s383] sm:$0xff]
        %v385 = vld [vmem:[%s383 + $0x8] sm:$0xff]
        %v386 = vld [vmem:[%s383 + $0x10] sm:$0x1]
        %v387 = vld [vmem:[%s2] sm:$0xff]
        %v388 = vld [vmem:[%s2 + $0x8] sm:$0xff]
        %v389 = vld [vmem:[%s2 + $0x10] sm:$0xff]
        %v390 = vld [vmem:[%s2 + $0x18] sm:$0xff]
        %v391 = vld [vmem:[%s2 + $0x20] sm:$0xff]
        %v392 = vld [vmem:[%s2 + $0x28] sm:$0xff]
        %v393 = vld [vmem:[%s1] sm:$0xff]
        %v394 = vld [vmem:[%s1 + $0x8] sm:$0xff]
        %v395 = vld [vmem:[%s1 + $0x10] sm:$0x1]
        %vm396 = vcmask 392192
        %v398 = vsel %vm396, %v384, 0
        %v401 = vsel %vm396, %v385, 0
        %v404 = vsel %vm396, %v386, 0
        %406 = vmatpush.msra.mxu0 0.0
        %407 = vmatpush.msra.mxu0 0.0
        %408 = vmatpush.msra.mxu0 0.0
        %409 = vmatpush.msra.mxu0 0.0
        %410 = vmatpush.msra.mxu0 0.0
        %411 = vmatpush.msra.mxu0 0.0
        %412 = vmatpush.msra.mxu0 0.0
        %413 = vmatpush.msra.mxu0 0.0
        %414 = vmatpush.msra.mxu0 0.0
        %415 = vmatpush.msra.mxu0 0.0
        %416 = vmatpush.msra.mxu0 %v392
        %417 = vmatpush.msra.mxu0 %v391
        %418 = vmatpush.msra.mxu0 %v390
        %419 = vmatpush.msra.mxu0 %v389
        %420 = vmatpush.msra.mxu0 %v388
        %421 = vmatpush.msra.mxu0 %v387
        %422 = vmatmul.f32.gmra.mxu0 %v398
        %v423 = vpop.f32.mrf.mxu0
        %v424 = vadd.f32 %v393, %v423
        %425 = vmatmul.f32.gmra.mxu0 %v401
        %v426 = vpop.f32.mrf.mxu0
        %v427 = vadd.f32 %v394, %v426
        %428 = vmatmul.f32.gmra.mxu0 %v404
        %v429 = vpop.f32.mrf.mxu0
        %v430 = vadd.f32 %v395, %v429
        %431 = vdwg.mxu0
        %v432 = vlaneseq
        %v433 = vand.u32 %v432, 127
        %vm434 = vcmp.ge.s32.totalorder %v433, 0
        %vm435 = vcmp.lt.s32.totalorder %v433, 8
        %vm436 = vmand %vm434, %vm435
        %v437 = vsel %vm436, 1, 0
        %v438 = vcvt.s32.f32 %v437
        %vm439 = vcmp.ge.s32.totalorder %v433, 8
        %vm440 = vcmp.lt.s32.totalorder %v433, 16
        %vm441 = vmand %vm439, %vm440
        %v442 = vsel %vm441, 1, 0
        %v443 = vcvt.s32.f32 %v442
        %vm444 = vcmp.ge.s32.totalorder %v433, 16
        %vm445 = vcmp.lt.s32.totalorder %v433, 24
        %vm446 = vmand %vm444, %vm445
        %v447 = vsel %vm446, 1, 0
        %v448 = vcvt.s32.f32 %v447
        %vm449 = vcmp.ge.s32.totalorder %v433, 24
        %vm450 = vcmp.lt.s32.totalorder %v433, 32
        %vm451 = vmand %vm449, %vm450
        %v452 = vsel %vm451, 1, 0
        %v453 = vcvt.s32.f32 %v452
        %v454 = vld [vmem:[%s6] sm:$0x1]
        %v455 = vld [vmem:[%s6 + $0x1] sm:$0x1]
        %v456 = vld [vmem:[%s6 + $0x2] sm:$0x1]
        %v457 = vld [vmem:[%s6 + $0x3] sm:$0x1]
        %v458 = vld [vmem:[%s6 + $0x4] sm:$0x1]
        %v459 = vld [vmem:[%s6 + $0x5] sm:$0x1]
        %vm460 = vcmask 261120
        %v461 = vsel %vm460, %v424, 0.0
        %462 = vadd.xlane.f32.xlu0 %v461
        %v463 = vpop.xlane.xlu0 %462
        %v464 = vsel %vm460, %v427, 0.0
        %465 = vadd.xlane.f32.xlu0 %v464
        %v466 = vpop.xlane.xlu0 %465
        %vm467 = vcmask 253952
        %v468 = vsel %vm467, %v430, 0.0
        %469 = vadd.xlane.f32.xlu0 %v468
        %v470 = vpop.xlane.xlu0 %469
        %v471 = vrcp.pop 32.0
        %v472 = vmul.f32 32.0, %v471
        %v473 = vsub.f32 1.0, %v472
        %v474 = vmul.f32 %v471, %v473
        %v475 = vadd.f32 %v471, %v474
        %vm476 = vweird.f32 %v471
        %v477 = vsel %vm476, %v471, %v475
        %v478 = vmul.f32 %v463, %v477
        %v479 = vmul.f32 %v466, %v477
        %v480 = vmul.f32 %v470, %v477
        %v481 = vsub.f32 %v424, %v478
        %v482 = vsub.f32 %v427, %v479
        %v483 = vsub.f32 %v430, %v480
        %v484 = vmul.f32 %v481, %v481
        %v485 = vmul.f32 %v482, %v482
        %v486 = vmul.f32 %v483, %v483
        %v487 = vsel %vm460, %v484, 0.0
        %488 = vadd.xlane.f32.xlu0 %v487
        %v489 = vpop.xlane.xlu0 %488
        %v490 = vsel %vm460, %v485, 0.0
        %491 = vadd.xlane.f32.xlu0 %v490
        %v492 = vpop.xlane.xlu0 %491
        %v493 = vsel %vm467, %v486, 0.0
        %494 = vadd.xlane.f32.xlu0 %v493
        %v495 = vpop.xlane.xlu0 %494
        %v496 = vmul.f32 %v489, %v477
        %v497 = vmul.f32 %v492, %v477
        %v498 = vmul.f32 %v495, %v477
        %v499 = vadd.f32 %v496, 1e-05
        %v500 = vadd.f32 %v497, 1e-05
        %v501 = vadd.f32 %v498, 1e-05
        %v502 = vrsqrt.pop %v499
        %v503 = vmul.f32 %v502, %v499
        %v504 = vmul.f32 %v503, %v502
        %v505 = vmul.f32 0.5, %v504
        %v506 = vsub.f32 1.5, %v505
        %v507 = vmul.f32 %v502, %v506
        %vm508 = vweird.f32 %v499
        %vm509 = vweird.f32 %v502
        %vm510 = vmor %vm508, %vm509
        %v511 = vsel %vm510, %v502, %v507
        %v512 = vrsqrt.pop %v500
        %v513 = vmul.f32 %v512, %v500
        %v514 = vmul.f32 %v513, %v512
        %v515 = vmul.f32 0.5, %v514
        %v516 = vsub.f32 1.5, %v515
        %v517 = vmul.f32 %v512, %v516
        %vm518 = vweird.f32 %v500
        %vm519 = vweird.f32 %v512
        %vm520 = vmor %vm518, %vm519
        %v521 = vsel %vm520, %v512, %v517
        %v522 = vrsqrt.pop %v501
        %v523 = vmul.f32 %v522, %v501
        %v524 = vmul.f32 %v523, %v522
        %v525 = vmul.f32 0.5, %v524
        %v526 = vsub.f32 1.5, %v525
        %v527 = vmul.f32 %v522, %v526
        %vm528 = vweird.f32 %v501
        %vm529 = vweird.f32 %v522
        %vm530 = vmor %vm528, %vm529
        %v531 = vsel %vm530, %v522, %v527
        %v532 = vmul.f32 %v481, %v511
        %v533 = vmul.f32 %v482, %v521
        %v534 = vmul.f32 %v483, %v531
        %v535 = vperm.slane %v454, 0
        %v536 = vmul.f32 %v532, %v535
        %v537 = vmul.f32 %v533, %v535
        %v538 = vmul.f32 %v534, %v535
        %v539 = vperm.slane %v455, 0
        %v540 = vadd.f32 %v536, %v539
        %v541 = vadd.f32 %v537, %v539
        %v542 = vadd.f32 %v538, %v539
        %v543 = vld [vmem:[%s3] sm:$0xff]
        %v544 = vld [vmem:[%s3 + $0x8] sm:$0xff]
        %v545 = vld [vmem:[%s3 + $0x10] sm:$0xff]
        %v546 = vld [vmem:[%s3 + $0x18] sm:$0xff]
        %v548 = vsel %vm460, %v540, 0
        %v551 = vsel %vm460, %v541, 0
        %v554 = vsel %vm460, %v542, 0
        %556 = vmatpush.msra.mxu0 0.0
        %557 = vmatpush.msra.mxu0 0.0
        %558 = vmatpush.msra.mxu0 0.0
        %559 = vmatpush.msra.mxu0 0.0
        %560 = vmatpush.msra.mxu0 0.0
        %561 = vmatpush.msra.mxu0 0.0
        %562 = vmatpush.msra.mxu0 0.0
        %563 = vmatpush.msra.mxu0 0.0
        %564 = vmatpush.msra.mxu0 0.0
        %565 = vmatpush.msra.mxu0 0.0
        %566 = vmatpush.msra.mxu0 0.0
        %567 = vmatpush.msra.mxu0 0.0
        %568 = vmatpush.msra.mxu0 %v546
        %569 = vmatpush.msra.mxu0 %v545
        %570 = vmatpush.msra.mxu0 %v544
        %571 = vmatpush.msra.mxu0 %v543
        %572 = vmatmul.f32.gmra.mxu0 %v548
        %v573 = vpop.f32.mrf.mxu0
        %v574 = vadd.f32 0.0, %v573
        %575 = vmatmul.f32.gmra.mxu0 %v551
        %v576 = vpop.f32.mrf.mxu0
        %v577 = vadd.f32 0.0, %v576
        %578 = vmatmul.f32.gmra.mxu0 %v554
        %v579 = vpop.f32.mrf.mxu0
        %v580 = vadd.f32 0.0, %v579
        %581 = vdwg.mxu0
        %s582 = scalar_lea.vmem %s3, 32
        %v583 = vld [vmem:[%s582] sm:$0xff]
        %v584 = vld [vmem:[%s582 + $0x8] sm:$0xff]
        %v585 = vld [vmem:[%s582 + $0x10] sm:$0xff]
        %v586 = vld [vmem:[%s582 + $0x18] sm:$0xff]
        %587 = vmatpush.msra.mxu0 0.0
        %588 = vmatpush.msra.mxu0 0.0
        %589 = vmatpush.msra.mxu0 0.0
        %590 = vmatpush.msra.mxu0 0.0
        %591 = vmatpush.msra.mxu0 0.0
        %592 = vmatpush.msra.mxu0 0.0
        %593 = vmatpush.msra.mxu0 0.0
        %594 = vmatpush.msra.mxu0 0.0
        %595 = vmatpush.msra.mxu0 0.0
        %596 = vmatpush.msra.mxu0 0.0
        %597 = vmatpush.msra.mxu0 0.0
        %598 = vmatpush.msra.mxu0 0.0
        %599 = vmatpush.msra.mxu0 %v586
        %600 = vmatpush.msra.mxu0 %v585
        %601 = vmatpush.msra.mxu0 %v584
        %602 = vmatpush.msra.mxu0 %v583
        %603 = vmatmul.f32.gmra.mxu0 %v548
        %v604 = vpop.f32.mrf.mxu0
        %v605 = vadd.f32 0.0, %v604
        %606 = vmatmul.f32.gmra.mxu0 %v551
        %v607 = vpop.f32.mrf.mxu0
        %v608 = vadd.f32 0.0, %v607
        %609 = vmatmul.f32.gmra.mxu0 %v554
        %v610 = vpop.f32.mrf.mxu0
        %v611 = vadd.f32 0.0, %v610
        %612 = vdwg.mxu0
        %s613 = scalar_lea.vmem %s3, 64
        %v614 = vld [vmem:[%s613] sm:$0xff]
        %v615 = vld [vmem:[%s613 + $0x8] sm:$0xff]
        %v616 = vld [vmem:[%s613 + $0x10] sm:$0xff]
        %v617 = vld [vmem:[%s613 + $0x18] sm:$0xff]
        %618 = vmatpush.msra.mxu0 0.0
        %619 = vmatpush.msra.mxu0 0.0
        %620 = vmatpush.msra.mxu0 0.0
        %621 = vmatpush.msra.mxu0 0.0
        %622 = vmatpush.msra.mxu0 0.0
        %623 = vmatpush.msra.mxu0 0.0
        %624 = vmatpush.msra.mxu0 0.0
        %625 = vmatpush.msra.mxu0 0.0
        %626 = vmatpush.msra.mxu0 0.0
        %627 = vmatpush.msra.mxu0 0.0
        %628 = vmatpush.msra.mxu0 0.0
        %629 = vmatpush.msra.mxu0 0.0
        %630 = vmatpush.msra.mxu0 %v617
        %631 = vmatpush.msra.mxu0 %v616
        %632 = vmatpush.msra.mxu0 %v615
        %633 = vmatpush.msra.mxu0 %v614
        %634 = vmatmul.f32.gmra.mxu0 %v548
        %v635 = vpop.f32.mrf.mxu0
        %v636 = vadd.f32 0.0, %v635
        %637 = vmatmul.f32.gmra.mxu0 %v551
        %v638 = vpop.f32.mrf.mxu0
        %v639 = vadd.f32 0.0, %v638
        %640 = vmatmul.f32.gmra.mxu0 %v554
        %v641 = vpop.f32.mrf.mxu0
        %v642 = vadd.f32 0.0, %v641
        %643 = vdwg.mxu0
        %v644 = vmul.f32 %v574, %v438
        %v645 = vmul.f32 %v577, %v438
        %v646 = vmul.f32 %v580, %v438
        %v648 = vsel %vm460, %v644, 0
        %v651 = vsel %vm460, %v645, 0
        %v654 = vsel %vm460, %v646, 0
        %v657 = vsel %vm460, %v605, 0
        %v660 = vsel %vm460, %v608, 0
        %v663 = vsel %vm460, %v611, 0
        %665 = vmatpush.xpose.msra.mxu0 0.0
        %666 = vmatpush.xpose.msra.mxu0 0.0
        %667 = vmatpush.xpose.msra.mxu0 0.0
        %668 = vmatpush.xpose.msra.mxu0 0.0
        %669 = vmatpush.xpose.msra.mxu0 0.0
        %670 = vmatpush.xpose.msra.mxu0 0.0
        %671 = vmatpush.xpose.msra.mxu0 0.0
        %672 = vmatpush.xpose.msra.mxu0 0.0
        %673 = vmatpush.xpose.msra.mxu0 0.0
        %674 = vmatpush.xpose.msra.mxu0 0.0
        %675 = vmatpush.xpose.msra.mxu0 0.0
        %676 = vmatpush.xpose.msra.mxu0 0.0
        %677 = vmatpush.xpose.msra.mxu0 0.0
        %678 = vmatpush.xpose.msra.mxu0 %v663
        %679 = vmatpush.xpose.msra.mxu0 %v660
        %680 = vmatpush.xpose.msra.mxu0 %v657
        %681 = vmatmul.f32.gmra.mxu0 %v648
        %v682 = vpop.f32.mrf.mxu0
        %v683 = vadd.f32 0.0, %v682
        %684 = vmatmul.f32.gmra.mxu0 %v651
        %v685 = vpop.f32.mrf.mxu0
        %v686 = vadd.f32 0.0, %v685
        %687 = vmatmul.f32.gmra.mxu0 %v654
        %v688 = vpop.f32.mrf.mxu0
        %v689 = vadd.f32 0.0, %v688
        %690 = vdwg.mxu0
        %vm691 = vcmask 138240
        %v692 = vsel %vm691, %v683, -inf
        %693 = vmax.xlane.f32.xlu0 %v692
        %v694 = vpop.xlane.xlu0 %693
        %v695 = vsel %vm691, %v686, -inf
        %696 = vmax.xlane.f32.xlu0 %v695
        %v697 = vpop.xlane.xlu0 %696
        %vm698 = vcmask 131072
        %v699 = vsel %vm698, %v689, -inf
        %700 = vmax.xlane.f32.xlu0 %v699
        %v701 = vpop.xlane.xlu0 %700
        %v702 = vsub.f32 %v683, %v694
        %v703 = vsub.f32 %v686, %v697
        %v704 = vsub.f32 %v689, %v701
        %v705 = vmul.f32 %v702, 1.442695
        %v706 = vpow.pop %v705
        %v707 = vmul.f32 %v703, 1.442695
        %v708 = vpow.pop %v707
        %v709 = vmul.f32 %v704, 1.442695
        %v710 = vpow.pop %v709
        %v711 = vsel %vm691, %v706, 0.0
        %712 = vadd.xlane.f32.xlu0 %v711
        %v713 = vpop.xlane.xlu0 %712
        %v714 = vsel %vm691, %v708, 0.0
        %715 = vadd.xlane.f32.xlu0 %v714
        %v716 = vpop.xlane.xlu0 %715
        %v717 = vsel %vm698, %v710, 0.0
        %718 = vadd.xlane.f32.xlu0 %v717
        %v719 = vpop.xlane.xlu0 %718
        %v720 = vrcp.pop %v713
        %v721 = vmul.f32 %v713, %v720
        %v722 = vsub.f32 1.0, %v721
        %v723 = vmul.f32 %v720, %v722
        %v724 = vadd.f32 %v720, %v723
        %vm725 = vweird.f32 %v713
        %vm726 = vweird.f32 %v720
        %vm727 = vmor %vm725, %vm726
        %v728 = vsel %vm727, %v720, %v724
        %v729 = vand.u32 2147483647, %v713
        %vm730 = vcmp.eq.f32.partialorder %v729, 8.507059e+37
        %v731 = vand.u32 %v713, 2147483648
        %v732 = vor.u32 1.1754944e-38, %v731
        %v733 = vsel %vm730, %v732, %v728
        %v734 = vmul.f32 %v706, %v733
        %v735 = vrcp.pop %v716
        %v736 = vmul.f32 %v716, %v735
        %v737 = vsub.f32 1.0, %v736
        %v738 = vmul.f32 %v735, %v737
        %v739 = vadd.f32 %v735, %v738
        %vm740 = vweird.f32 %v716
        %vm741 = vweird.f32 %v735
        %vm742 = vmor %vm740, %vm741
        %v743 = vsel %vm742, %v735, %v739
        %v744 = vand.u32 2147483647, %v716
        %vm745 = vcmp.eq.f32.partialorder %v744, 8.507059e+37
        %v746 = vand.u32 %v716, 2147483648
        %v747 = vor.u32 1.1754944e-38, %v746
        %v748 = vsel %vm745, %v747, %v743
        %v749 = vmul.f32 %v708, %v748
        %v750 = vrcp.pop %v719
        %v751 = vmul.f32 %v719, %v750
        %v752 = vsub.f32 1.0, %v751
        %v753 = vmul.f32 %v750, %v752
        %v754 = vadd.f32 %v750, %v753
        %vm755 = vweird.f32 %v719
        %vm756 = vweird.f32 %v750
        %vm757 = vmor %vm755, %vm756
        %v758 = vsel %vm757, %v750, %v754
        %v759 = vand.u32 2147483647, %v719
        %vm760 = vcmp.eq.f32.partialorder %v759, 8.507059e+37
        %v761 = vand.u32 %v719, 2147483648
        %v762 = vor.u32 1.1754944e-38, %v761
        %v763 = vsel %vm760, %v762, %v758
        %v764 = vmul.f32 %v710, %v763
        %v765 = vmul.f32 %v636, %v438
        %v766 = vmul.f32 %v639, %v438
        %v767 = vmul.f32 %v642, %v438
        %v768 = vmul.f32 %v574, %v443
        %v769 = vmul.f32 %v577, %v443
        %v770 = vmul.f32 %v580, %v443
        %v772 = vsel %vm460, %v768, 0
        %v775 = vsel %vm460, %v769, 0
        %v778 = vsel %vm460, %v770, 0
        %780 = vmatpush.xpose.msra.mxu0 0.0
        %781 = vmatpush.xpose.msra.mxu0 0.0
        %782 = vmatpush.xpose.msra.mxu0 0.0
        %783 = vmatpush.xpose.msra.mxu0 0.0
        %784 = vmatpush.xpose.msra.mxu0 0.0
        %785 = vmatpush.xpose.msra.mxu0 0.0
        %786 = vmatpush.xpose.msra.mxu0 0.0
        %787 = vmatpush.xpose.msra.mxu0 0.0
        %788 = vmatpush.xpose.msra.mxu0 0.0
        %789 = vmatpush.xpose.msra.mxu0 0.0
        %790 = vmatpush.xpose.msra.mxu0 0.0
        %791 = vmatpush.xpose.msra.mxu0 0.0
        %792 = vmatpush.xpose.msra.mxu0 0.0
        %793 = vmatpush.xpose.msra.mxu0 %v663
        %794 = vmatpush.xpose.msra.mxu0 %v660
        %795 = vmatpush.xpose.msra.mxu0 %v657
        %796 = vmatmul.f32.gmra.mxu0 %v772
        %v797 = vpop.f32.mrf.mxu0
        %v798 = vadd.f32 0.0, %v797
        %799 = vmatmul.f32.gmra.mxu0 %v775
        %v800 = vpop.f32.mrf.mxu0
        %v801 = vadd.f32 0.0, %v800
        %802 = vmatmul.f32.gmra.mxu0 %v778
        %v803 = vpop.f32.mrf.mxu0
        %v804 = vadd.f32 0.0, %v803
        %805 = vdwg.mxu0
        %v806 = vsel %vm691, %v798, -inf
        %807 = vmax.xlane.f32.xlu0 %v806
        %v808 = vpop.xlane.xlu0 %807
        %v809 = vsel %vm691, %v801, -inf
        %810 = vmax.xlane.f32.xlu0 %v809
        %v811 = vpop.xlane.xlu0 %810
        %v812 = vsel %vm698, %v804, -inf
        %813 = vmax.xlane.f32.xlu0 %v812
        %v814 = vpop.xlane.xlu0 %813
        %v815 = vsub.f32 %v798, %v808
        %v816 = vsub.f32 %v801, %v811
        %v817 = vsub.f32 %v804, %v814
        %v818 = vmul.f32 %v815, 1.442695
        %v819 = vpow.pop %v818
        %v820 = vmul.f32 %v816, 1.442695
        %v821 = vpow.pop %v820
        %v822 = vmul.f32 %v817, 1.442695
        %v823 = vpow.pop %v822
        %v824 = vsel %vm691, %v819, 0.0
        %825 = vadd.xlane.f32.xlu0 %v824
        %v826 = vpop.xlane.xlu0 %825
        %v827 = vsel %vm691, %v821, 0.0
        %828 = vadd.xlane.f32.xlu0 %v827
        %v829 = vpop.xlane.xlu0 %828
        %v830 = vsel %vm698, %v823, 0.0
        %831 = vadd.xlane.f32.xlu0 %v830
        %v832 = vpop.xlane.xlu0 %831
        %v833 = vrcp.pop %v826
        %v834 = vmul.f32 %v826, %v833
        %v835 = vsub.f32 1.0, %v834
        %v836 = vmul.f32 %v833, %v835
        %v837 = vadd.f32 %v833, %v836
        %vm838 = vweird.f32 %v826
        %vm839 = vweird.f32 %v833
        %vm840 = vmor %vm838, %vm839
        %v841 = vsel %vm840, %v833, %v837
        %v842 = vand.u32 2147483647, %v826
        %vm843 = vcmp.eq.f32.partialorder %v842, 8.507059e+37
        %v844 = vand.u32 %v826, 2147483648
        %v845 = vor.u32 1.1754944e-38, %v844
        %v846 = vsel %vm843, %v845, %v841
        %v847 = vmul.f32 %v819, %v846
        %v848 = vrcp.pop %v829
        %v849 = vmul.f32 %v829, %v848
        %v850 = vsub.f32 1.0, %v849
        %v851 = vmul.f32 %v848, %v850
        %v852 = vadd.f32 %v848, %v851
        %vm853 = vweird.f32 %v829
        %vm854 = vweird.f32 %v848
        %vm855 = vmor %vm853, %vm854
        %v856 = vsel %vm855, %v848, %v852
        %v857 = vand.u32 2147483647, %v829
        %vm858 = vcmp.eq.f32.partialorder %v857, 8.507059e+37
        %v859 = vand.u32 %v829, 2147483648
        %v860 = vor.u32 1.1754944e-38, %v859
        %v861 = vsel %vm858, %v860, %v856
        %v862 = vmul.f32 %v821, %v861
        %v863 = vrcp.pop %v832
        %v864 = vmul.f32 %v832, %v863
        %v865 = vsub.f32 1.0, %v864
        %v866 = vmul.f32 %v863, %v865
        %v867 = vadd.f32 %v863, %v866
        %vm868 = vweird.f32 %v832
        %vm869 = vweird.f32 %v863
        %vm870 = vmor %vm868, %vm869
        %v871 = vsel %vm870, %v863, %v867
        %v872 = vand.u32 2147483647, %v832
        %vm873 = vcmp.eq.f32.partialorder %v872, 8.507059e+37
        %v874 = vand.u32 %v832, 2147483648
        %v875 = vor.u32 1.1754944e-38, %v874
        %v876 = vsel %vm873, %v875, %v871
        %v877 = vmul.f32 %v823, %v876
        %v878 = vmul.f32 %v636, %v443
        %v879 = vmul.f32 %v639, %v443
        %v880 = vmul.f32 %v642, %v443
        %v882 = vsel %vm691, %v847, 0
        %v885 = vsel %vm691, %v862, 0
        %v888 = vsel %vm691, %v877, 0
        %vm890 = vcmask 1040384
        %v892 = vsel %vm890, %v880, 0
        %894 = vmatpush.msra.mxu0 0.0
        %895 = vmatpush.msra.mxu0 0.0
        %896 = vmatpush.msra.mxu0 0.0
        %897 = vmatpush.msra.mxu0 0.0
        %898 = vmatpush.msra.mxu0 0.0
        %899 = vmatpush.msra.mxu0 0.0
        %900 = vmatpush.msra.mxu0 0.0
        %901 = vmatpush.msra.mxu0 0.0
        %902 = vmatpush.msra.mxu0 0.0
        %903 = vmatpush.msra.mxu0 0.0
        %904 = vmatpush.msra.mxu0 0.0
        %905 = vmatpush.msra.mxu0 0.0
        %906 = vmatpush.msra.mxu0 0.0
        %907 = vmatpush.msra.mxu0 %v892
        %908 = vmatpush.msra.mxu0 %v879
        %909 = vmatpush.msra.mxu0 %v878
        %910 = vmatmul.f32.gmra.mxu0 %v882
        %v911 = vpop.f32.mrf.mxu0
        %v912 = vadd.f32 0.0, %v911
        %913 = vmatmul.f32.gmra.mxu0 %v885
        %v914 = vpop.f32.mrf.mxu0
        %v915 = vadd.f32 0.0, %v914
        %916 = vmatmul.f32.gmra.mxu0 %v888
        %v917 = vpop.f32.mrf.mxu0
        %v918 = vadd.f32 0.0, %v917
        %919 = vdwg.mxu0
        %v921 = vsel %vm691, %v734, 0
        %v924 = vsel %vm691, %v749, 0
        %v927 = vsel %vm691, %v764, 0
        %v930 = vsel %vm890, %v767, 0
        %932 = vmatpush.msra.mxu0 0.0
        %933 = vmatpush.msra.mxu0 0.0
        %934 = vmatpush.msra.mxu0 0.0
        %935 = vmatpush.msra.mxu0 0.0
        %936 = vmatpush.msra.mxu0 0.0
        %937 = vmatpush.msra.mxu0 0.0
        %938 = vmatpush.msra.mxu0 0.0
        %939 = vmatpush.msra.mxu0 0.0
        %940 = vmatpush.msra.mxu0 0.0
        %941 = vmatpush.msra.mxu0 0.0
        %942 = vmatpush.msra.mxu0 0.0
        %943 = vmatpush.msra.mxu0 0.0
        %944 = vmatpush.msra.mxu0 0.0
        %945 = vmatpush.msra.mxu0 %v930
        %946 = vmatpush.msra.mxu0 %v766
        %947 = vmatpush.msra.mxu0 %v765
        %948 = vmatmul.f32.gmra.mxu0 %v921
        %v949 = vpop.f32.mrf.mxu0
        %v950 = vadd.f32 %v912, %v949
        %951 = vmatmul.f32.gmra.mxu0 %v924
        %v952 = vpop.f32.mrf.mxu0
        %v953 = vadd.f32 %v915, %v952
        %954 = vmatmul.f32.gmra.mxu0 %v927
        %v955 = vpop.f32.mrf.mxu0
        %v956 = vadd.f32 %v918, %v955
        %957 = vdwg.mxu0
        %v958 = vmul.f32 %v574, %v448
        %v959 = vmul.f32 %v577, %v448
        %v960 = vmul.f32 %v580, %v448
        %v962 = vsel %vm460, %v958, 0
        %v965 = vsel %vm460, %v959, 0
        %v968 = vsel %vm460, %v960, 0
        %970 = vmatpush.xpose.msra.mxu0 0.0
        %971 = vmatpush.xpose.msra.mxu0 0.0
        %972 = vmatpush.xpose.msra.mxu0 0.0
        %973 = vmatpush.xpose.msra.mxu0 0.0
        %974 = vmatpush.xpose.msra.mxu0 0.0
        %975 = vmatpush.xpose.msra.mxu0 0.0
        %976 = vmatpush.xpose.msra.mxu0 0.0
        %977 = vmatpush.xpose.msra.mxu0 0.0
        %978 = vmatpush.xpose.msra.mxu0 0.0
        %979 = vmatpush.xpose.msra.mxu0 0.0
        %980 = vmatpush.xpose.msra.mxu0 0.0
        %981 = vmatpush.xpose.msra.mxu0 0.0
        %982 = vmatpush.xpose.msra.mxu0 0.0
        %983 = vmatpush.xpose.msra.mxu0 %v663
        %984 = vmatpush.xpose.msra.mxu0 %v660
        %985 = vmatpush.xpose.msra.mxu0 %v657
        %986 = vmatmul.f32.gmra.mxu0 %v962
        %v987 = vpop.f32.mrf.mxu0
        %v988 = vadd.f32 0.0, %v987
        %989 = vmatmul.f32.gmra.mxu0 %v965
        %v990 = vpop.f32.mrf.mxu0
        %v991 = vadd.f32 0.0, %v990
        %992 = vmatmul.f32.gmra.mxu0 %v968
        %v993 = vpop.f32.mrf.mxu0
        %v994 = vadd.f32 0.0, %v993
        %995 = vdwg.mxu0
        %v996 = vsel %vm691, %v988, -inf
        %997 = vmax.xlane.f32.xlu0 %v996
        %v998 = vpop.xlane.xlu0 %997
        %v999 = vsel %vm691, %v991, -inf
        %1000 = vmax.xlane.f32.xlu0 %v999
        %v1001 = vpop.xlane.xlu0 %1000
        %v1002 = vsel %vm698, %v994, -inf
        %1003 = vmax.xlane.f32.xlu0 %v1002
        %v1004 = vpop.xlane.xlu0 %1003
        %v1005 = vsub.f32 %v988, %v998
        %v1006 = vsub.f32 %v991, %v1001
        %v1007 = vsub.f32 %v994, %v1004
        %v1008 = vmul.f32 %v1005, 1.442695
        %v1009 = vpow.pop %v1008
        %v1010 = vmul.f32 %v1006, 1.442695
        %v1011 = vpow.pop %v1010
        %v1012 = vmul.f32 %v1007, 1.442695
        %v1013 = vpow.pop %v1012
        %v1014 = vsel %vm691, %v1009, 0.0
        %1015 = vadd.xlane.f32.xlu0 %v1014
        %v1016 = vpop.xlane.xlu0 %1015
        %v1017 = vsel %vm691, %v1011, 0.0
        %1018 = vadd.xlane.f32.xlu0 %v1017
        %v1019 = vpop.xlane.xlu0 %1018
        %v1020 = vsel %vm698, %v1013, 0.0
        %1021 = vadd.xlane.f32.xlu0 %v1020
        %v1022 = vpop.xlane.xlu0 %1021
        %v1023 = vrcp.pop %v1016
        %v1024 = vmul.f32 %v1016, %v1023
        %v1025 = vsub.f32 1.0, %v1024
        %v1026 = vmul.f32 %v1023, %v1025
        %v1027 = vadd.f32 %v1023, %v1026
        %vm1028 = vweird.f32 %v1016
        %vm1029 = vweird.f32 %v1023
        %vm1030 = vmor %vm1028, %vm1029
        %v1031 = vsel %vm1030, %v1023, %v1027
        %v1032 = vand.u32 2147483647, %v1016
        %vm1033 = vcmp.eq.f32.partialorder %v1032, 8.507059e+37
        %v1034 = vand.u32 %v1016, 2147483648
        %v1035 = vor.u32 1.1754944e-38, %v1034
        %v1036 = vsel %vm1033, %v1035, %v1031
        %v1037 = vmul.f32 %v1009, %v1036
        %v1038 = vrcp.pop %v1019
        %v1039 = vmul.f32 %v1019, %v1038
        %v1040 = vsub.f32 1.0, %v1039
        %v1041 = vmul.f32 %v1038, %v1040
        %v1042 = vadd.f32 %v1038, %v1041
        %vm1043 = vweird.f32 %v1019
        %vm1044 = vweird.f32 %v1038
        %vm1045 = vmor %vm1043, %vm1044
        %v1046 = vsel %vm1045, %v1038, %v1042
        %v1047 = vand.u32 2147483647, %v1019
        %vm1048 = vcmp.eq.f32.partialorder %v1047, 8.507059e+37
        %v1049 = vand.u32 %v1019, 2147483648
        %v1050 = vor.u32 1.1754944e-38, %v1049
        %v1051 = vsel %vm1048, %v1050, %v1046
        %v1052 = vmul.f32 %v1011, %v1051
        %v1053 = vrcp.pop %v1022
        %v1054 = vmul.f32 %v1022, %v1053
        %v1055 = vsub.f32 1.0, %v1054
        %v1056 = vmul.f32 %v1053, %v1055
        %v1057 = vadd.f32 %v1053, %v1056
        %vm1058 = vweird.f32 %v1022
        %vm1059 = vweird.f32 %v1053
        %vm1060 = vmor %vm1058, %vm1059
        %v1061 = vsel %vm1060, %v1053, %v1057
        %v1062 = vand.u32 2147483647, %v1022
        %vm1063 = vcmp.eq.f32.partialorder %v1062, 8.507059e+37
        %v1064 = vand.u32 %v1022, 2147483648
        %v1065 = vor.u32 1.1754944e-38, %v1064
        %v1066 = vsel %vm1063, %v1065, %v1061
        %v1067 = vmul.f32 %v1013, %v1066
        %v1068 = vmul.f32 %v636, %v448
        %v1069 = vmul.f32 %v639, %v448
        %v1070 = vmul.f32 %v642, %v448
        %v1072 = vsel %vm691, %v1037, 0
        %v1075 = vsel %vm691, %v1052, 0
        %v1078 = vsel %vm691, %v1067, 0
        %v1081 = vsel %vm890, %v1070, 0
        %1083 = vmatpush.msra.mxu0 0.0
        %1084 = vmatpush.msra.mxu0 0.0
        %1085 = vmatpush.msra.mxu0 0.0
        %1086 = vmatpush.msra.mxu0 0.0
        %1087 = vmatpush.msra.mxu0 0.0
        %1088 = vmatpush.msra.mxu0 0.0
        %1089 = vmatpush.msra.mxu0 0.0
        %1090 = vmatpush.msra.mxu0 0.0
        %1091 = vmatpush.msra.mxu0 0.0
        %1092 = vmatpush.msra.mxu0 0.0
        %1093 = vmatpush.msra.mxu0 0.0
        %1094 = vmatpush.msra.mxu0 0.0
        %1095 = vmatpush.msra.mxu0 0.0
        %1096 = vmatpush.msra.mxu0 %v1081
        %1097 = vmatpush.msra.mxu0 %v1069
        %1098 = vmatpush.msra.mxu0 %v1068
        %1099 = vmatmul.f32.gmra.mxu0 %v1072
        %v1100 = vpop.f32.mrf.mxu0
        %v1101 = vadd.f32 0.0, %v1100
        %1102 = vmatmul.f32.gmra.mxu0 %v1075
        %v1103 = vpop.f32.mrf.mxu0
        %v1104 = vadd.f32 0.0, %v1103
        %1105 = vmatmul.f32.gmra.mxu0 %v1078
        %v1106 = vpop.f32.mrf.mxu0
        %v1107 = vadd.f32 0.0, %v1106
        %1108 = vdwg.mxu0
        %v1109 = vadd.f32 %v950, %v1101
        %v1110 = vadd.f32 %v953, %v1104
        %v1111 = vadd.f32 %v956, %v1107
        %v1112 = vmul.f32 %v574, %v453
        %v1113 = vmul.f32 %v577, %v453
        %v1114 = vmul.f32 %v580, %v453
        %v1116 = vsel %vm460, %v1112, 0
        %v1119 = vsel %vm460, %v1113, 0
        %v1122 = vsel %vm460, %v1114, 0
        %1124 = vmatpush.xpose.msra.mxu0 0.0
        %1125 = vmatpush.xpose.msra.mxu0 0.0
        %1126 = vmatpush.xpose.msra.mxu0 0.0
        %1127 = vmatpush.xpose.msra.mxu0 0.0
        %1128 = vmatpush.xpose.msra.mxu0 0.0
        %1129 = vmatpush.xpose.msra.mxu0 0.0
        %1130 = vmatpush.xpose.msra.mxu0 0.0
        %1131 = vmatpush.xpose.msra.mxu0 0.0
        %1132 = vmatpush.xpose.msra.mxu0 0.0
        %1133 = vmatpush.xpose.msra.mxu0 0.0
        %1134 = vmatpush.xpose.msra.mxu0 0.0
        %1135 = vmatpush.xpose.msra.mxu0 0.0
        %1136 = vmatpush.xpose.msra.mxu0 0.0
        %1137 = vmatpush.xpose.msra.mxu0 %v663
        %1138 = vmatpush.xpose.msra.mxu0 %v660
        %1139 = vmatpush.xpose.msra.mxu0 %v657
        %1140 = vmatmul.f32.gmra.mxu0 %v1116
        %v1141 = vpop.f32.mrf.mxu0
        %v1142 = vadd.f32 0.0, %v1141
        %1143 = vmatmul.f32.gmra.mxu0 %v1119
        %v1144 = vpop.f32.mrf.mxu0
        %v1145 = vadd.f32 0.0, %v1144
        %1146 = vmatmul.f32.gmra.mxu0 %v1122
        %v1147 = vpop.f32.mrf.mxu0
        %v1148 = vadd.f32 0.0, %v1147
        %1149 = vdwg.mxu0
        %v1150 = vsel %vm691, %v1142, -inf
        %1151 = vmax.xlane.f32.xlu0 %v1150
        %v1152 = vpop.xlane.xlu0 %1151
        %v1153 = vsel %vm691, %v1145, -inf
        %1154 = vmax.xlane.f32.xlu0 %v1153
        %v1155 = vpop.xlane.xlu0 %1154
        %v1156 = vsel %vm698, %v1148, -inf
        %1157 = vmax.xlane.f32.xlu0 %v1156
        %v1158 = vpop.xlane.xlu0 %1157
        %v1159 = vsub.f32 %v1142, %v1152
        %v1160 = vsub.f32 %v1145, %v1155
        %v1161 = vsub.f32 %v1148, %v1158
        %v1162 = vmul.f32 %v1159, 1.442695
        %v1163 = vpow.pop %v1162
        %v1164 = vmul.f32 %v1160, 1.442695
        %v1165 = vpow.pop %v1164
        %v1166 = vmul.f32 %v1161, 1.442695
        %v1167 = vpow.pop %v1166
        %v1168 = vsel %vm691, %v1163, 0.0
        %1169 = vadd.xlane.f32.xlu0 %v1168
        %v1170 = vpop.xlane.xlu0 %1169
        %v1171 = vsel %vm691, %v1165, 0.0
        %1172 = vadd.xlane.f32.xlu0 %v1171
        %v1173 = vpop.xlane.xlu0 %1172
        %v1174 = vsel %vm698, %v1167, 0.0
        %1175 = vadd.xlane.f32.xlu0 %v1174
        %v1176 = vpop.xlane.xlu0 %1175
        %v1177 = vrcp.pop %v1170
        %v1178 = vmul.f32 %v1170, %v1177
        %v1179 = vsub.f32 1.0, %v1178
        %v1180 = vmul.f32 %v1177, %v1179
        %v1181 = vadd.f32 %v1177, %v1180
        %vm1182 = vweird.f32 %v1170
        %vm1183 = vweird.f32 %v1177
        %vm1184 = vmor %vm1182, %vm1183
        %v1185 = vsel %vm1184, %v1177, %v1181
        %v1186 = vand.u32 2147483647, %v1170
        %vm1187 = vcmp.eq.f32.partialorder %v1186, 8.507059e+37
        %v1188 = vand.u32 %v1170, 2147483648
        %v1189 = vor.u32 1.1754944e-38, %v1188
        %v1190 = vsel %vm1187, %v1189, %v1185
        %v1191 = vmul.f32 %v1163, %v1190
        %v1192 = vrcp.pop %v1173
        %v1193 = vmul.f32 %v1173, %v1192
        %v1194 = vsub.f32 1.0, %v1193
        %v1195 = vmul.f32 %v1192, %v1194
        %v1196 = vadd.f32 %v1192, %v1195
        %vm1197 = vweird.f32 %v1173
        %vm1198 = vweird.f32 %v1192
        %vm1199 = vmor %vm1197, %vm1198
        %v1200 = vsel %vm1199, %v1192, %v1196
        %v1201 = vand.u32 2147483647, %v1173
        %vm1202 = vcmp.eq.f32.partialorder %v1201, 8.507059e+37
        %v1203 = vand.u32 %v1173, 2147483648
        %v1204 = vor.u32 1.1754944e-38, %v1203
        %v1205 = vsel %vm1202, %v1204, %v1200
        %v1206 = vmul.f32 %v1165, %v1205
        %v1207 = vrcp.pop %v1176
        %v1208 = vmul.f32 %v1176, %v1207
        %v1209 = vsub.f32 1.0, %v1208
        %v1210 = vmul.f32 %v1207, %v1209
        %v1211 = vadd.f32 %v1207, %v1210
        %vm1212 = vweird.f32 %v1176
        %vm1213 = vweird.f32 %v1207
        %vm1214 = vmor %vm1212, %vm1213
        %v1215 = vsel %vm1214, %v1207, %v1211
        %v1216 = vand.u32 2147483647, %v1176
        %vm1217 = vcmp.eq.f32.partialorder %v1216, 8.507059e+37
        %v1218 = vand.u32 %v1176, 2147483648
        %v1219 = vor.u32 1.1754944e-38, %v1218
        %v1220 = vsel %vm1217, %v1219, %v1215
        %v1221 = vmul.f32 %v1167, %v1220
        %v1222 = vmul.f32 %v636, %v453
        %v1223 = vmul.f32 %v639, %v453
        %v1224 = vmul.f32 %v642, %v453
        %v1226 = vsel %vm691, %v1191, 0
        %v1229 = vsel %vm691, %v1206, 0
        %v1232 = vsel %vm691, %v1221, 0
        %v1235 = vsel %vm890, %v1224, 0
        %1237 = vmatpush.msra.mxu0 0.0
        %1238 = vmatpush.msra.mxu0 0.0
        %1239 = vmatpush.msra.mxu0 0.0
        %1240 = vmatpush.msra.mxu0 0.0
        %1241 = vmatpush.msra.mxu0 0.0
        %1242 = vmatpush.msra.mxu0 0.0
        %1243 = vmatpush.msra.mxu0 0.0
        %1244 = vmatpush.msra.mxu0 0.0
        %1245 = vmatpush.msra.mxu0 0.0
        %1246 = vmatpush.msra.mxu0 0.0
        %1247 = vmatpush.msra.mxu0 0.0
        %1248 = vmatpush.msra.mxu0 0.0
        %1249 = vmatpush.msra.mxu0 0.0
        %1250 = vmatpush.msra.mxu0 %v1235
        %1251 = vmatpush.msra.mxu0 %v1223
        %1252 = vmatpush.msra.mxu0 %v1222
        %1253 = vmatmul.f32.gmra.mxu0 %v1226
        %v1254 = vpop.f32.mrf.mxu0
        %v1255 = vadd.f32 0.0, %v1254
        %1256 = vmatmul.f32.gmra.mxu0 %v1229
        %v1257 = vpop.f32.mrf.mxu0
        %v1258 = vadd.f32 0.0, %v1257
        %1259 = vmatmul.f32.gmra.mxu0 %v1232
        %v1260 = vpop.f32.mrf.mxu0
        %v1261 = vadd.f32 0.0, %v1260
        %1262 = vdwg.mxu0
        %v1263 = vadd.f32 %v1109, %v1255
        %v1264 = vadd.f32 %v1110, %v1258
        %v1265 = vadd.f32 %v1111, %v1261
        %s1266 = scalar_lea.vmem %s3, 96
        %v1267 = vld [vmem:[%s1266] sm:$0xff]
        %v1268 = vld [vmem:[%s1266 + $0x8] sm:$0xff]
        %v1269 = vld [vmem:[%s1266 + $0x10] sm:$0xff]
        %v1270 = vld [vmem:[%s1266 + $0x18] sm:$0xff]
        %v1271 = vperm.slane %v458, 0
        %v1273 = vsel %vm460, %v1263, 0
        %v1276 = vsel %vm460, %v1264, 0
        %v1279 = vsel %vm460, %v1265, 0
        %1281 = vmatpush.msra.mxu0 0.0
        %1282 = vmatpush.msra.mxu0 0.0
        %1283 = vmatpush.msra.mxu0 0.0
        %1284 = vmatpush.msra.mxu0 0.0
        %1285 = vmatpush.msra.mxu0 0.0
        %1286 = vmatpush.msra.mxu0 0.0
        %1287 = vmatpush.msra.mxu0 0.0
        %1288 = vmatpush.msra.mxu0 0.0
        %1289 = vmatpush.msra.mxu0 0.0
        %1290 = vmatpush.msra.mxu0 0.0
        %1291 = vmatpush.msra.mxu0 0.0
        %1292 = vmatpush.msra.mxu0 0.0
        %1293 = vmatpush.msra.mxu0 %v1270
        %1294 = vmatpush.msra.mxu0 %v1269
        %1295 = vmatpush.msra.mxu0 %v1268
        %1296 = vmatpush.msra.mxu0 %v1267
        %1297 = vmatmul.f32.gmra.mxu0 %v1273
        %v1298 = vpop.f32.mrf.mxu0
        %v1299 = vadd.f32 %v1271, %v1298
        %1300 = vmatmul.f32.gmra.mxu0 %v1276
        %v1301 = vpop.f32.mrf.mxu0
        %v1302 = vadd.f32 %v1271, %v1301
        %1303 = vmatmul.f32.gmra.mxu0 %v1279
        %v1304 = vpop.f32.mrf.mxu0
        %v1305 = vadd.f32 %v1271, %v1304
        %1306 = vdwg.mxu0
        %v1307 = vadd.f32 %v424, %v1299
        %v1308 = vadd.f32 %v427, %v1302
        %v1309 = vadd.f32 %v430, %v1305
        %v1310 = vsel %vm460, %v1307, 0.0
        %1311 = vadd.xlane.f32.xlu0 %v1310
        %v1312 = vpop.xlane.xlu0 %1311
        %v1313 = vsel %vm460, %v1308, 0.0
        %1314 = vadd.xlane.f32.xlu0 %v1313
        %v1315 = vpop.xlane.xlu0 %1314
        %v1316 = vsel %vm467, %v1309, 0.0
        %1317 = vadd.xlane.f32.xlu0 %v1316
        %v1318 = vpop.xlane.xlu0 %1317
        %v1319 = vmul.f32 %v1312, %v477
        %v1320 = vmul.f32 %v1315, %v477
        %v1321 = vmul.f32 %v1318, %v477
        %v1322 = vsub.f32 %v1307, %v1319
        %v1323 = vsub.f32 %v1308, %v1320
        %v1324 = vsub.f32 %v1309, %v1321
        %v1325 = vmul.f32 %v1322, %v1322
        %v1326 = vmul.f32 %v1323, %v1323
        %v1327 = vmul.f32 %v1324, %v1324
        %v1328 = vsel %vm460, %v1325, 0.0
        %1329 = vadd.xlane.f32.xlu0 %v1328
        %v1330 = vpop.xlane.xlu0 %1329
        %v1331 = vsel %vm460, %v1326, 0.0
        %1332 = vadd.xlane.f32.xlu0 %v1331
        %v1333 = vpop.xlane.xlu0 %1332
        %v1334 = vsel %vm467, %v1327, 0.0
        %1335 = vadd.xlane.f32.xlu0 %v1334
        %v1336 = vpop.xlane.xlu0 %1335
        %v1337 = vmul.f32 %v1330, %v477
        %v1338 = vmul.f32 %v1333, %v477
        %v1339 = vmul.f32 %v1336, %v477
        %v1340 = vadd.f32 %v1337, 1e-05
        %v1341 = vadd.f32 %v1338, 1e-05
        %v1342 = vadd.f32 %v1339, 1e-05
        %v1343 = vrsqrt.pop %v1340
        %v1344 = vmul.f32 %v1343, %v1340
        %v1345 = vmul.f32 %v1344, %v1343
        %v1346 = vmul.f32 0.5, %v1345
        %v1347 = vsub.f32 1.5, %v1346
        %v1348 = vmul.f32 %v1343, %v1347
        %vm1349 = vweird.f32 %v1340
        %vm1350 = vweird.f32 %v1343
        %vm1351 = vmor %vm1349, %vm1350
        %v1352 = vsel %vm1351, %v1343, %v1348
        %v1353 = vrsqrt.pop %v1341
        %v1354 = vmul.f32 %v1353, %v1341
        %v1355 = vmul.f32 %v1354, %v1353
        %v1356 = vmul.f32 0.5, %v1355
        %v1357 = vsub.f32 1.5, %v1356
        %v1358 = vmul.f32 %v1353, %v1357
        %vm1359 = vweird.f32 %v1341
        %vm1360 = vweird.f32 %v1353
        %vm1361 = vmor %vm1359, %vm1360
        %v1362 = vsel %vm1361, %v1353, %v1358
        %v1363 = vrsqrt.pop %v1342
        %v1364 = vmul.f32 %v1363, %v1342
        %v1365 = vmul.f32 %v1364, %v1363
        %v1366 = vmul.f32 0.5, %v1365
        %v1367 = vsub.f32 1.5, %v1366
        %v1368 = vmul.f32 %v1363, %v1367
        %vm1369 = vweird.f32 %v1342
        %vm1370 = vweird.f32 %v1363
        %vm1371 = vmor %vm1369, %vm1370
        %v1372 = vsel %vm1371, %v1363, %v1368
        %v1373 = vmul.f32 %v1322, %v1352
        %v1374 = vmul.f32 %v1323, %v1362
        %v1375 = vmul.f32 %v1324, %v1372
        %v1376 = vperm.slane %v456, 0
        %v1377 = vmul.f32 %v1373, %v1376
        %v1378 = vmul.f32 %v1374, %v1376
        %v1379 = vmul.f32 %v1375, %v1376
        %v1380 = vperm.slane %v457, 0
        %v1381 = vadd.f32 %v1377, %v1380
        %v1382 = vadd.f32 %v1378, %v1380
        %v1383 = vadd.f32 %v1379, %v1380
        %v1384 = vld [vmem:[%s4] sm:$0xff]
        %v1385 = vld [vmem:[%s4 + $0x8] sm:$0xff]
        %v1386 = vld [vmem:[%s4 + $0x10] sm:$0xff]
        %v1387 = vld [vmem:[%s4 + $0x18] sm:$0xff]
        %v1388 = vld [vmem:[%s7] sm:$0x1]
        %v1390 = vperm.slane %v1388, 0
        %v1393 = vsel %vm460, %v1381, 0
        %v1396 = vsel %vm460, %v1382, 0
        %v1399 = vsel %vm460, %v1383, 0
        %1401 = vmatpush.msra.mxu0 0.0
        %1402 = vmatpush.msra.mxu0 0.0
        %1403 = vmatpush.msra.mxu0 0.0
        %1404 = vmatpush.msra.mxu0 0.0
        %1405 = vmatpush.msra.mxu0 0.0
        %1406 = vmatpush.msra.mxu0 0.0
        %1407 = vmatpush.msra.mxu0 0.0
        %1408 = vmatpush.msra.mxu0 0.0
        %1409 = vmatpush.msra.mxu0 0.0
        %1410 = vmatpush.msra.mxu0 0.0
        %1411 = vmatpush.msra.mxu0 0.0
        %1412 = vmatpush.msra.mxu0 0.0
        %1413 = vmatpush.msra.mxu0 %v1387
        %1414 = vmatpush.msra.mxu0 %v1386
        %1415 = vmatpush.msra.mxu0 %v1385
        %1416 = vmatpush.msra.mxu0 %v1384
        %1417 = vmatmul.f32.gmra.mxu0 %v1393
        %v1418 = vpop.f32.mrf.mxu0
        %v1419 = vadd.f32 %v1390, %v1418
        %1420 = vmatmul.f32.gmra.mxu0 %v1396
        %v1421 = vpop.f32.mrf.mxu0
        %v1422 = vadd.f32 %v1390, %v1421
        %1423 = vmatmul.f32.gmra.mxu0 %v1399
        %v1424 = vpop.f32.mrf.mxu0
        %v1425 = vadd.f32 %v1390, %v1424
        %1426 = vdwg.mxu0
        %v1427 = vmul.f32 %v1419, 0.5
        %v1428 = vmul.f32 %v1422, 0.5
        %v1429 = vmul.f32 %v1425, 0.5
        %v1430 = vmul.f32 %v1419, 0.70710677
        %v1431 = vmul.f32 %v1422, 0.70710677
        %v1432 = vmul.f32 %v1425, 0.70710677
        %v1433 = vand.u32 2147483647, %v1430
        %v1434 = vand.u32 2147483647, %v1431
        %v1435 = vand.u32 2147483647, %v1432
        %v1436 = vmul.f32 %v1433, 0.3275911
        %v1437 = vmul.f32 %v1434, 0.3275911
        %v1438 = vmul.f32 %v1435, 0.3275911
        %v1439 = vadd.f32 %v1436, 1.0
        %v1440 = vadd.f32 %v1437, 1.0
        %v1441 = vadd.f32 %v1438, 1.0
        %v1442 = vrcp.pop %v1439
        %v1443 = vmul.f32 %v1439, %v1442
        %v1444 = vsub.f32 1.0, %v1443
        %v1445 = vmul.f32 %v1442, %v1444
        %v1446 = vadd.f32 %v1442, %v1445
        %vm1447 = vweird.f32 %v1439
        %vm1448 = vweird.f32 %v1442
        %vm1449 = vmor %vm1447, %vm1448
        %v1450 = vsel %vm1449, %v1442, %v1446
        %v1451 = vand.u32 2147483647, %v1439
        %vm1452 = vcmp.eq.f32.partialorder %v1451, 8.507059e+37
        %v1453 = vand.u32 %v1439, 2147483648
        %v1454 = vor.u32 1.1754944e-38, %v1453
        %v1455 = vsel %vm1452, %v1454, %v1450
        %v1456 = vmul.f32 1.0, %v1455
        %v1457 = vrcp.pop %v1440
        %v1458 = vmul.f32 %v1440, %v1457
        %v1459 = vsub.f32 1.0, %v1458
        %v1460 = vmul.f32 %v1457, %v1459
        %v1461 = vadd.f32 %v1457, %v1460
        %vm1462 = vweird.f32 %v1440
        %vm1463 = vweird.f32 %v1457
        %vm1464 = vmor %vm1462, %vm1463
        %v1465 = vsel %vm1464, %v1457, %v1461
        %v1466 = vand.u32 2147483647, %v1440
        %vm1467 = vcmp.eq.f32.partialorder %v1466, 8.507059e+37
        %v1468 = vand.u32 %v1440, 2147483648
        %v1469 = vor.u32 1.1754944e-38, %v1468
        %v1470 = vsel %vm1467, %v1469, %v1465
        %v1471 = vmul.f32 1.0, %v1470
        %v1472 = vrcp.pop %v1441
        %v1473 = vmul.f32 %v1441, %v1472
        %v1474 = vsub.f32 1.0, %v1473
        %v1475 = vmul.f32 %v1472, %v1474
        %v1476 = vadd.f32 %v1472, %v1475
        %vm1477 = vweird.f32 %v1441
        %vm1478 = vweird.f32 %v1472
        %vm1479 = vmor %vm1477, %vm1478
        %v1480 = vsel %vm1479, %v1472, %v1476
        %v1481 = vand.u32 2147483647, %v1441
        %vm1482 = vcmp.eq.f32.partialorder %v1481, 8.507059e+37
        %v1483 = vand.u32 %v1441, 2147483648
        %v1484 = vor.u32 1.1754944e-38, %v1483
        %v1485 = vsel %vm1482, %v1484, %v1480
        %v1486 = vmul.f32 1.0, %v1485
        %v1487 = vmul.f32 %v1456, 1.0614054
        %v1488 = vmul.f32 %v1471, 1.0614054
        %v1489 = vmul.f32 %v1486, 1.0614054
        %v1490 = vadd.f32 %v1487, -1.4531521
        %v1491 = vadd.f32 %v1488, -1.4531521
        %v1492 = vadd.f32 %v1489, -1.4531521
        %v1493 = vmul.f32 %v1490, %v1456
        %v1494 = vmul.f32 %v1491, %v1471
        %v1495 = vmul.f32 %v1492, %v1486
        %v1496 = vadd.f32 %v1493, 1.4214138
        %v1497 = vadd.f32 %v1494, 1.4214138
        %v1498 = vadd.f32 %v1495, 1.4214138
        %v1499 = vmul.f32 %v1496, %v1456
        %v1500 = vmul.f32 %v1497, %v1471
        %v1501 = vmul.f32 %v1498, %v1486
        %v1502 = vadd.f32 %v1499, -0.28449672
        %v1503 = vadd.f32 %v1500, -0.28449672
        %v1504 = vadd.f32 %v1501, -0.28449672
        %v1505 = vmul.f32 %v1502, %v1456
        %v1506 = vmul.f32 %v1503, %v1471
        %v1507 = vmul.f32 %v1504, %v1486
        %v1508 = vadd.f32 %v1505, 0.2548296
        %v1509 = vadd.f32 %v1506, 0.2548296
        %v1510 = vadd.f32 %v1507, 0.2548296
        %v1511 = vmul.f32 %v1508, %v1456
        %v1512 = vmul.f32 %v1509, %v1471
        %v1513 = vmul.f32 %v1510, %v1486
        %v1514 = vsub.f32 0.0, %v1433
        %v1515 = vsub.f32 0.0, %v1434
        %v1516 = vsub.f32 0.0, %v1435
        %v1517 = vmul.f32 %v1514, %v1433
        %v1518 = vmul.f32 %v1515, %v1434
        %v1519 = vmul.f32 %v1516, %v1435
        %v1520 = vmul.f32 %v1517, 1.442695
        %v1521 = vpow.pop %v1520
        %v1522 = vmul.f32 %v1518, 1.442695
        %v1523 = vpow.pop %v1522
        %v1524 = vmul.f32 %v1519, 1.442695
        %v1525 = vpow.pop %v1524
        %v1526 = vmul.f32 %v1511, %v1521
        %v1527 = vmul.f32 %v1512, %v1523
        %v1528 = vmul.f32 %v1513, %v1525
        %v1529 = vsub.f32 1.0, %v1526
        %v1530 = vsub.f32 1.0, %v1527
        %v1531 = vsub.f32 1.0, %v1528
        %vm1532 = vcmp.ge.f32.partialorder %v1430, 0.0
        %vm1533 = vcmp.ge.f32.partialorder %v1431, 0.0
        %vm1534 = vcmp.ge.f32.partialorder %v1432, 0.0
        %v1535 = vsub.f32 0.0, %v1529
        %v1536 = vsub.f32 0.0, %v1530
        %v1537 = vsub.f32 0.0, %v1531
        %v1538 = vsel %vm1532, %v1529, %v1535
        %v1539 = vsel %vm1533, %v1530, %v1536
        %v1540 = vsel %vm1534, %v1531, %v1537
        %v1541 = vadd.f32 %v1538, 1.0
        %v1542 = vadd.f32 %v1539, 1.0
        %v1543 = vadd.f32 %v1540, 1.0
        %v1544 = vmul.f32 %v1427, %v1541
        %v1545 = vmul.f32 %v1428, %v1542
        %v1546 = vmul.f32 %v1429, %v1543
        %v1547 = vld [vmem:[%s5] sm:$0xff]
        %v1548 = vld [vmem:[%s5 + $0x8] sm:$0xff]
        %v1549 = vld [vmem:[%s5 + $0x10] sm:$0xff]
        %v1550 = vld [vmem:[%s5 + $0x18] sm:$0xff]
        %v1551 = vld [vmem:[%s5 + $0x20] sm:$0xff]
        %v1552 = vld [vmem:[%s5 + $0x28] sm:$0xff]
        %v1553 = vld [vmem:[%s5 + $0x30] sm:$0xff]
        %v1554 = vld [vmem:[%s5 + $0x38] sm:$0xff]
        %v1555 = vld [vmem:[%s5 + $0x40] sm:$0xff]
        %v1556 = vld [vmem:[%s5 + $0x48] sm:$0xff]
        %v1557 = vld [vmem:[%s5 + $0x50] sm:$0xff]
        %v1558 = vld [vmem:[%s5 + $0x58] sm:$0xff]
        %v1559 = vld [vmem:[%s5 + $0x60] sm:$0xff]
        %v1560 = vld [vmem:[%s5 + $0x68] sm:$0xff]
        %v1561 = vld [vmem:[%s5 + $0x70] sm:$0xff]
        %v1562 = vld [vmem:[%s5 + $0x78] sm:$0xff]
        %v1563 = vperm.slane %v459, 0
        %1564 = vmatpush.msra.mxu0 %v1562
        %1565 = vmatpush.msra.mxu0 %v1561
        %1566 = vmatpush.msra.mxu0 %v1560
        %1567 = vmatpush.msra.mxu0 %v1559
        %1568 = vmatpush.msra.mxu0 %v1558
        %1569 = vmatpush.msra.mxu0 %v1557
        %1570 = vmatpush.msra.mxu0 %v1556
        %1571 = vmatpush.msra.mxu0 %v1555
        %1572 = vmatpush.msra.mxu0 %v1554
        %1573 = vmatpush.msra.mxu0 %v1553
        %1574 = vmatpush.msra.mxu0 %v1552
        %1575 = vmatpush.msra.mxu0 %v1551
        %1576 = vmatpush.msra.mxu0 %v1550
        %1577 = vmatpush.msra.mxu0 %v1549
        %1578 = vmatpush.msra.mxu0 %v1548
        %1579 = vmatpush.msra.mxu0 %v1547
        %1580 = vmatmul.f32.gmra.mxu0 %v1544
        %v1581 = vpop.f32.mrf.mxu0
        %v1582 = vadd.f32 %v1563, %v1581
        %1583 = vmatmul.f32.gmra.mxu0 %v1545
        %v1584 = vpop.f32.mrf.mxu0
        %v1585 = vadd.f32 %v1563, %v1584
        %1586 = vmatmul.f32.gmra.mxu0 %v1546
        %v1587 = vpop.f32.mrf.mxu0
        %v1588 = vadd.f32 %v1563, %v1587
        %1589 = vdwg.mxu0
        %v1590 = vadd.f32 %v1307, %v1582
        %v1591 = vadd.f32 %v1308, %v1585
        %v1592 = vadd.f32 %v1309, %v1588
        %s1593 = scalar_lea.vmem %s6, 8
        %v1594 = vld [vmem:[%s1593] sm:$0x1]
        %v1595 = vld [vmem:[%s1593 + $0x1] sm:$0x1]
        %v1596 = vld [vmem:[%s1593 + $0x2] sm:$0x1]
        %v1597 = vld [vmem:[%s1593 + $0x3] sm:$0x1]
        %v1598 = vld [vmem:[%s1593 + $0x4] sm:$0x1]
        %v1599 = vld [vmem:[%s1593 + $0x5] sm:$0x1]
        %v1600 = vsel %vm460, %v1590, 0.0
        %1601 = vadd.xlane.f32.xlu0 %v1600
        %v1602 = vpop.xlane.xlu0 %1601
        %v1603 = vsel %vm460, %v1591, 0.0
        %1604 = vadd.xlane.f32.xlu0 %v1603
        %v1605 = vpop.xlane.xlu0 %1604
        %v1606 = vsel %vm467, %v1592, 0.0
        %1607 = vadd.xlane.f32.xlu0 %v1606
        %v1608 = vpop.xlane.xlu0 %1607
        %v1609 = vmul.f32 %v1602, %v477
        %v1610 = vmul.f32 %v1605, %v477
        %v1611 = vmul.f32 %v1608, %v477
        %v1612 = vsub.f32 %v1590, %v1609
        %v1613 = vsub.f32 %v1591, %v1610
        %v1614 = vsub.f32 %v1592, %v1611
        %v1615 = vmul.f32 %v1612, %v1612
        %v1616 = vmul.f32 %v1613, %v1613
        %v1617 = vmul.f32 %v1614, %v1614
        %v1618 = vsel %vm460, %v1615, 0.0
        %1619 = vadd.xlane.f32.xlu0 %v1618
        %v1620 = vpop.xlane.xlu0 %1619
        %v1621 = vsel %vm460, %v1616, 0.0
        %1622 = vadd.xlane.f32.xlu0 %v1621
        %v1623 = vpop.xlane.xlu0 %1622
        %v1624 = vsel %vm467, %v1617, 0.0
        %1625 = vadd.xlane.f32.xlu0 %v1624
        %v1626 = vpop.xlane.xlu0 %1625
        %v1627 = vmul.f32 %v1620, %v477
        %v1628 = vmul.f32 %v1623, %v477
        %v1629 = vmul.f32 %v1626, %v477
        %v1630 = vadd.f32 %v1627, 1e-05
        %v1631 = vadd.f32 %v1628, 1e-05
        %v1632 = vadd.f32 %v1629, 1e-05
        %v1633 = vrsqrt.pop %v1630
        %v1634 = vmul.f32 %v1633, %v1630
        %v1635 = vmul.f32 %v1634, %v1633
        %v1636 = vmul.f32 0.5, %v1635
        %v1637 = vsub.f32 1.5, %v1636
        %v1638 = vmul.f32 %v1633, %v1637
        %vm1639 = vweird.f32 %v1630
        %vm1640 = vweird.f32 %v1633
        %vm1641 = vmor %vm1639, %vm1640
        %v1642 = vsel %vm1641, %v1633, %v1638
        %v1643 = vrsqrt.pop %v1631
        %v1644 = vmul.f32 %v1643, %v1631
        %v1645 = vmul.f32 %v1644, %v1643
        %v1646 = vmul.f32 0.5, %v1645
        %v1647 = vsub.f32 1.5, %v1646
        %v1648 = vmul.f32 %v1643, %v1647
        %vm1649 = vweird.f32 %v1631
        %vm1650 = vweird.f32 %v1643
        %vm1651 = vmor %vm1649, %vm1650
        %v1652 = vsel %vm1651, %v1643, %v1648
        %v1653 = vrsqrt.pop %v1632
        %v1654 = vmul.f32 %v1653, %v1632
        %v1655 = vmul.f32 %v1654, %v1653
        %v1656 = vmul.f32 0.5, %v1655
        %v1657 = vsub.f32 1.5, %v1656
        %v1658 = vmul.f32 %v1653, %v1657
        %vm1659 = vweird.f32 %v1632
        %vm1660 = vweird.f32 %v1653
        %vm1661 = vmor %vm1659, %vm1660
        %v1662 = vsel %vm1661, %v1653, %v1658
        %v1663 = vmul.f32 %v1612, %v1642
        %v1664 = vmul.f32 %v1613, %v1652
        %v1665 = vmul.f32 %v1614, %v1662
        %v1666 = vperm.slane %v1594, 0
        %v1667 = vmul.f32 %v1663, %v1666
        %v1668 = vmul.f32 %v1664, %v1666
        %v1669 = vmul.f32 %v1665, %v1666
        %v1670 = vperm.slane %v1595, 0
        %v1671 = vadd.f32 %v1667, %v1670
        %v1672 = vadd.f32 %v1668, %v1670
        %v1673 = vadd.f32 %v1669, %v1670
        %s1674 = scalar_lea.vmem %s3, 128
        %v1675 = vld [vmem:[%s1674] sm:$0xff]
        %v1676 = vld [vmem:[%s1674 + $0x8] sm:$0xff]
        %v1677 = vld [vmem:[%s1674 + $0x10] sm:$0xff]
        %v1678 = vld [vmem:[%s1674 + $0x18] sm:$0xff]
        %v1680 = vsel %vm460, %v1671, 0
        %v1683 = vsel %vm460, %v1672, 0
        %v1686 = vsel %vm460, %v1673, 0
        %1688 = vmatpush.msra.mxu0 0.0
        %1689 = vmatpush.msra.mxu0 0.0
        %1690 = vmatpush.msra.mxu0 0.0
        %1691 = vmatpush.msra.mxu0 0.0
        %1692 = vmatpush.msra.mxu0 0.0
        %1693 = vmatpush.msra.mxu0 0.0
        %1694 = vmatpush.msra.mxu0 0.0
        %1695 = vmatpush.msra.mxu0 0.0
        %1696 = vmatpush.msra.mxu0 0.0
        %1697 = vmatpush.msra.mxu0 0.0
        %1698 = vmatpush.msra.mxu0 0.0
        %1699 = vmatpush.msra.mxu0 0.0
        %1700 = vmatpush.msra.mxu0 %v1678
        %1701 = vmatpush.msra.mxu0 %v1677
        %1702 = vmatpush.msra.mxu0 %v1676
        %1703 = vmatpush.msra.mxu0 %v1675
        %1704 = vmatmul.f32.gmra.mxu0 %v1680
        %v1705 = vpop.f32.mrf.mxu0
        %v1706 = vadd.f32 0.0, %v1705
        %1707 = vmatmul.f32.gmra.mxu0 %v1683
        %v1708 = vpop.f32.mrf.mxu0
        %v1709 = vadd.f32 0.0, %v1708
        %1710 = vmatmul.f32.gmra.mxu0 %v1686
        %v1711 = vpop.f32.mrf.mxu0
        %v1712 = vadd.f32 0.0, %v1711
        %1713 = vdwg.mxu0
        %s1714 = scalar_lea.vmem %s3, 160
        %v1715 = vld [vmem:[%s1714] sm:$0xff]
        %v1716 = vld [vmem:[%s1714 + $0x8] sm:$0xff]
        %v1717 = vld [vmem:[%s1714 + $0x10] sm:$0xff]
        %v1718 = vld [vmem:[%s1714 + $0x18] sm:$0xff]
        %1719 = vmatpush.msra.mxu0 0.0
        %1720 = vmatpush.msra.mxu0 0.0
        %1721 = vmatpush.msra.mxu0 0.0
        %1722 = vmatpush.msra.mxu0 0.0
        %1723 = vmatpush.msra.mxu0 0.0
        %1724 = vmatpush.msra.mxu0 0.0
        %1725 = vmatpush.msra.mxu0 0.0
        %1726 = vmatpush.msra.mxu0 0.0
        %1727 = vmatpush.msra.mxu0 0.0
        %1728 = vmatpush.msra.mxu0 0.0
        %1729 = vmatpush.msra.mxu0 0.0
        %1730 = vmatpush.msra.mxu0 0.0
        %1731 = vmatpush.msra.mxu0 %v1718
        %1732 = vmatpush.msra.mxu0 %v1717
        %1733 = vmatpush.msra.mxu0 %v1716
        %1734 = vmatpush.msra.mxu0 %v1715
        %1735 = vmatmul.f32.gmra.mxu0 %v1680
        %v1736 = vpop.f32.mrf.mxu0
        %v1737 = vadd.f32 0.0, %v1736
        %1738 = vmatmul.f32.gmra.mxu0 %v1683
        %v1739 = vpop.f32.mrf.mxu0
        %v1740 = vadd.f32 0.0, %v1739
        %1741 = vmatmul.f32.gmra.mxu0 %v1686
        %v1742 = vpop.f32.mrf.mxu0
        %v1743 = vadd.f32 0.0, %v1742
        %1744 = vdwg.mxu0
        %s1745 = scalar_lea.vmem %s3, 192
        %v1746 = vld [vmem:[%s1745] sm:$0xff]
        %v1747 = vld [vmem:[%s1745 + $0x8] sm:$0xff]
        %v1748 = vld [vmem:[%s1745 + $0x10] sm:$0xff]
        %v1749 = vld [vmem:[%s1745 + $0x18] sm:$0xff]
        %1750 = vmatpush.msra.mxu0 0.0
        %1751 = vmatpush.msra.mxu0 0.0
        %1752 = vmatpush.msra.mxu0 0.0
        %1753 = vmatpush.msra.mxu0 0.0
        %1754 = vmatpush.msra.mxu0 0.0
        %1755 = vmatpush.msra.mxu0 0.0
        %1756 = vmatpush.msra.mxu0 0.0
        %1757 = vmatpush.msra.mxu0 0.0
        %1758 = vmatpush.msra.mxu0 0.0
        %1759 = vmatpush.msra.mxu0 0.0
        %1760 = vmatpush.msra.mxu0 0.0
        %1761 = vmatpush.msra.mxu0 0.0
        %1762 = vmatpush.msra.mxu0 %v1749
        %1763 = vmatpush.msra.mxu0 %v1748
        %1764 = vmatpush.msra.mxu0 %v1747
        %1765 = vmatpush.msra.mxu0 %v1746
        %1766 = vmatmul.f32.gmra.mxu0 %v1680
        %v1767 = vpop.f32.mrf.mxu0
        %v1768 = vadd.f32 0.0, %v1767
        %1769 = vmatmul.f32.gmra.mxu0 %v1683
        %v1770 = vpop.f32.mrf.mxu0
        %v1771 = vadd.f32 0.0, %v1770
        %1772 = vmatmul.f32.gmra.mxu0 %v1686
        %v1773 = vpop.f32.mrf.mxu0
        %v1774 = vadd.f32 0.0, %v1773
        %1775 = vdwg.mxu0
        %v1776 = vmul.f32 %v1706, %v438
        %v1777 = vmul.f32 %v1709, %v438
        %v1778 = vmul.f32 %v1712, %v438
        %v1780 = vsel %vm460, %v1776, 0
        %v1783 = vsel %vm460, %v1777, 0
        %v1786 = vsel %vm460, %v1778, 0
        %v1789 = vsel %vm460, %v1737, 0
        %v1792 = vsel %vm460, %v1740, 0
        %v1795 = vsel %vm460, %v1743, 0
        %1797 = vmatpush.xpose.msra.mxu0 0.0
        %1798 = vmatpush.xpose.msra.mxu0 0.0
        %1799 = vmatpush.xpose.msra.mxu0 0.0
        %1800 = vmatpush.xpose.msra.mxu0 0.0
        %1801 = vmatpush.xpose.msra.mxu0 0.0
        %1802 = vmatpush.xpose.msra.mxu0 0.0
        %1803 = vmatpush.xpose.msra.mxu0 0.0
        %1804 = vmatpush.xpose.msra.mxu0 0.0
        %1805 = vmatpush.xpose.msra.mxu0 0.0
        %1806 = vmatpush.xpose.msra.mxu0 0.0
        %1807 = vmatpush.xpose.msra.mxu0 0.0
        %1808 = vmatpush.xpose.msra.mxu0 0.0
        %1809 = vmatpush.xpose.msra.mxu0 0.0
        %1810 = vmatpush.xpose.msra.mxu0 %v1795
        %1811 = vmatpush.xpose.msra.mxu0 %v1792
        %1812 = vmatpush.xpose.msra.mxu0 %v1789
        %1813 = vmatmul.f32.gmra.mxu0 %v1780
        %v1814 = vpop.f32.mrf.mxu0
        %v1815 = vadd.f32 0.0, %v1814
        %1816 = vmatmul.f32.gmra.mxu0 %v1783
        %v1817 = vpop.f32.mrf.mxu0
        %v1818 = vadd.f32 0.0, %v1817
        %1819 = vmatmul.f32.gmra.mxu0 %v1786
        %v1820 = vpop.f32.mrf.mxu0
        %v1821 = vadd.f32 0.0, %v1820
        %1822 = vdwg.mxu0
        %v1823 = vsel %vm691, %v1815, -inf
        %1824 = vmax.xlane.f32.xlu0 %v1823
        %v1825 = vpop.xlane.xlu0 %1824
        %v1826 = vsel %vm691, %v1818, -inf
        %1827 = vmax.xlane.f32.xlu0 %v1826
        %v1828 = vpop.xlane.xlu0 %1827
        %v1829 = vsel %vm698, %v1821, -inf
        %1830 = vmax.xlane.f32.xlu0 %v1829
        %v1831 = vpop.xlane.xlu0 %1830
        %v1832 = vsub.f32 %v1815, %v1825
        %v1833 = vsub.f32 %v1818, %v1828
        %v1834 = vsub.f32 %v1821, %v1831
        %v1835 = vmul.f32 %v1832, 1.442695
        %v1836 = vpow.pop %v1835
        %v1837 = vmul.f32 %v1833, 1.442695
        %v1838 = vpow.pop %v1837
        %v1839 = vmul.f32 %v1834, 1.442695
        %v1840 = vpow.pop %v1839
        %v1841 = vsel %vm691, %v1836, 0.0
        %1842 = vadd.xlane.f32.xlu0 %v1841
        %v1843 = vpop.xlane.xlu0 %1842
        %v1844 = vsel %vm691, %v1838, 0.0
        %1845 = vadd.xlane.f32.xlu0 %v1844
        %v1846 = vpop.xlane.xlu0 %1845
        %v1847 = vsel %vm698, %v1840, 0.0
        %1848 = vadd.xlane.f32.xlu0 %v1847
        %v1849 = vpop.xlane.xlu0 %1848
        %v1850 = vrcp.pop %v1843
        %v1851 = vmul.f32 %v1843, %v1850
        %v1852 = vsub.f32 1.0, %v1851
        %v1853 = vmul.f32 %v1850, %v1852
        %v1854 = vadd.f32 %v1850, %v1853
        %vm1855 = vweird.f32 %v1843
        %vm1856 = vweird.f32 %v1850
        %vm1857 = vmor %vm1855, %vm1856
        %v1858 = vsel %vm1857, %v1850, %v1854
        %v1859 = vand.u32 2147483647, %v1843
        %vm1860 = vcmp.eq.f32.partialorder %v1859, 8.507059e+37
        %v1861 = vand.u32 %v1843, 2147483648
        %v1862 = vor.u32 1.1754944e-38, %v1861
        %v1863 = vsel %vm1860, %v1862, %v1858
        %v1864 = vmul.f32 %v1836, %v1863
        %v1865 = vrcp.pop %v1846
        %v1866 = vmul.f32 %v1846, %v1865
        %v1867 = vsub.f32 1.0, %v1866
        %v1868 = vmul.f32 %v1865, %v1867
        %v1869 = vadd.f32 %v1865, %v1868
        %vm1870 = vweird.f32 %v1846
        %vm1871 = vweird.f32 %v1865
        %vm1872 = vmor %vm1870, %vm1871
        %v1873 = vsel %vm1872, %v1865, %v1869
        %v1874 = vand.u32 2147483647, %v1846
        %vm1875 = vcmp.eq.f32.partialorder %v1874, 8.507059e+37
        %v1876 = vand.u32 %v1846, 2147483648
        %v1877 = vor.u32 1.1754944e-38, %v1876
        %v1878 = vsel %vm1875, %v1877, %v1873
        %v1879 = vmul.f32 %v1838, %v1878
        %v1880 = vrcp.pop %v1849
        %v1881 = vmul.f32 %v1849, %v1880
        %v1882 = vsub.f32 1.0, %v1881
        %v1883 = vmul.f32 %v1880, %v1882
        %v1884 = vadd.f32 %v1880, %v1883
        %vm1885 = vweird.f32 %v1849
        %vm1886 = vweird.f32 %v1880
        %vm1887 = vmor %vm1885, %vm1886
        %v1888 = vsel %vm1887, %v1880, %v1884
        %v1889 = vand.u32 2147483647, %v1849
        %vm1890 = vcmp.eq.f32.partialorder %v1889, 8.507059e+37
        %v1891 = vand.u32 %v1849, 2147483648
        %v1892 = vor.u32 1.1754944e-38, %v1891
        %v1893 = vsel %vm1890, %v1892, %v1888
        %v1894 = vmul.f32 %v1840, %v1893
        %v1895 = vmul.f32 %v1768, %v438
        %v1896 = vmul.f32 %v1771, %v438
        %v1897 = vmul.f32 %v1774, %v438
        %v1898 = vmul.f32 %v1706, %v443
        %v1899 = vmul.f32 %v1709, %v443
        %v1900 = vmul.f32 %v1712, %v443
        %v1902 = vsel %vm460, %v1898, 0
        %v1905 = vsel %vm460, %v1899, 0
        %v1908 = vsel %vm460, %v1900, 0
        %1910 = vmatpush.xpose.msra.mxu0 0.0
        %1911 = vmatpush.xpose.msra.mxu0 0.0
        %1912 = vmatpush.xpose.msra.mxu0 0.0
        %1913 = vmatpush.xpose.msra.mxu0 0.0
        %1914 = vmatpush.xpose.msra.mxu0 0.0
        %1915 = vmatpush.xpose.msra.mxu0 0.0
        %1916 = vmatpush.xpose.msra.mxu0 0.0
        %1917 = vmatpush.xpose.msra.mxu0 0.0
        %1918 = vmatpush.xpose.msra.mxu0 0.0
        %1919 = vmatpush.xpose.msra.mxu0 0.0
        %1920 = vmatpush.xpose.msra.mxu0 0.0
        %1921 = vmatpush.xpose.msra.mxu0 0.0
        %1922 = vmatpush.xpose.msra.mxu0 0.0
        %1923 = vmatpush.xpose.msra.mxu0 %v1795
        %1924 = vmatpush.xpose.msra.mxu0 %v1792
        %1925 = vmatpush.xpose.msra.mxu0 %v1789
        %1926 = vmatmul.f32.gmra.mxu0 %v1902
        %v1927 = vpop.f32.mrf.mxu0
        %v1928 = vadd.f32 0.0, %v1927
        %1929 = vmatmul.f32.gmra.mxu0 %v1905
        %v1930 = vpop.f32.mrf.mxu0
        %v1931 = vadd.f32 0.0, %v1930
        %1932 = vmatmul.f32.gmra.mxu0 %v1908
        %v1933 = vpop.f32.mrf.mxu0
        %v1934 = vadd.f32 0.0, %v1933
        %1935 = vdwg.mxu0
        %v1936 = vsel %vm691, %v1928, -inf
        %1937 = vmax.xlane.f32.xlu0 %v1936
        %v1938 = vpop.xlane.xlu0 %1937
        %v1939 = vsel %vm691, %v1931, -inf
        %1940 = vmax.xlane.f32.xlu0 %v1939
        %v1941 = vpop.xlane.xlu0 %1940
        %v1942 = vsel %vm698, %v1934, -inf
        %1943 = vmax.xlane.f32.xlu0 %v1942
        %v1944 = vpop.xlane.xlu0 %1943
        %v1945 = vsub.f32 %v1928, %v1938
        %v1946 = vsub.f32 %v1931, %v1941
        %v1947 = vsub.f32 %v1934, %v1944
        %v1948 = vmul.f32 %v1945, 1.442695
        %v1949 = vpow.pop %v1948
        %v1950 = vmul.f32 %v1946, 1.442695
        %v1951 = vpow.pop %v1950
        %v1952 = vmul.f32 %v1947, 1.442695
        %v1953 = vpow.pop %v1952
        %v1954 = vsel %vm691, %v1949, 0.0
        %1955 = vadd.xlane.f32.xlu0 %v1954
        %v1956 = vpop.xlane.xlu0 %1955
        %v1957 = vsel %vm691, %v1951, 0.0
        %1958 = vadd.xlane.f32.xlu0 %v1957
        %v1959 = vpop.xlane.xlu0 %1958
        %v1960 = vsel %vm698, %v1953, 0.0
        %1961 = vadd.xlane.f32.xlu0 %v1960
        %v1962 = vpop.xlane.xlu0 %1961
        %v1963 = vrcp.pop %v1956
        %v1964 = vmul.f32 %v1956, %v1963
        %v1965 = vsub.f32 1.0, %v1964
        %v1966 = vmul.f32 %v1963, %v1965
        %v1967 = vadd.f32 %v1963, %v1966
        %vm1968 = vweird.f32 %v1956
        %vm1969 = vweird.f32 %v1963
        %vm1970 = vmor %vm1968, %vm1969
        %v1971 = vsel %vm1970, %v1963, %v1967
        %v1972 = vand.u32 2147483647, %v1956
        %vm1973 = vcmp.eq.f32.partialorder %v1972, 8.507059e+37
        %v1974 = vand.u32 %v1956, 2147483648
        %v1975 = vor.u32 1.1754944e-38, %v1974
        %v1976 = vsel %vm1973, %v1975, %v1971
        %v1977 = vmul.f32 %v1949, %v1976
        %v1978 = vrcp.pop %v1959
        %v1979 = vmul.f32 %v1959, %v1978
        %v1980 = vsub.f32 1.0, %v1979
        %v1981 = vmul.f32 %v1978, %v1980
        %v1982 = vadd.f32 %v1978, %v1981
        %vm1983 = vweird.f32 %v1959
        %vm1984 = vweird.f32 %v1978
        %vm1985 = vmor %vm1983, %vm1984
        %v1986 = vsel %vm1985, %v1978, %v1982
        %v1987 = vand.u32 2147483647, %v1959
        %vm1988 = vcmp.eq.f32.partialorder %v1987, 8.507059e+37
        %v1989 = vand.u32 %v1959, 2147483648
        %v1990 = vor.u32 1.1754944e-38, %v1989
        %v1991 = vsel %vm1988, %v1990, %v1986
        %v1992 = vmul.f32 %v1951, %v1991
        %v1993 = vrcp.pop %v1962
        %v1994 = vmul.f32 %v1962, %v1993
        %v1995 = vsub.f32 1.0, %v1994
        %v1996 = vmul.f32 %v1993, %v1995
        %v1997 = vadd.f32 %v1993, %v1996
        %vm1998 = vweird.f32 %v1962
        %vm1999 = vweird.f32 %v1993
        %vm2000 = vmor %vm1998, %vm1999
        %v2001 = vsel %vm2000, %v1993, %v1997
        %v2002 = vand.u32 2147483647, %v1962
        %vm2003 = vcmp.eq.f32.partialorder %v2002, 8.507059e+37
        %v2004 = vand.u32 %v1962, 2147483648
        %v2005 = vor.u32 1.1754944e-38, %v2004
        %v2006 = vsel %vm2003, %v2005, %v2001
        %v2007 = vmul.f32 %v1953, %v2006
        %v2008 = vmul.f32 %v1768, %v443
        %v2009 = vmul.f32 %v1771, %v443
        %v2010 = vmul.f32 %v1774, %v443
        %v2012 = vsel %vm691, %v1977, 0
        %v2015 = vsel %vm691, %v1992, 0
        %v2018 = vsel %vm691, %v2007, 0
        %v2021 = vsel %vm890, %v2010, 0
        %2023 = vmatpush.msra.mxu0 0.0
        %2024 = vmatpush.msra.mxu0 0.0
        %2025 = vmatpush.msra.mxu0 0.0
        %2026 = vmatpush.msra.mxu0 0.0
        %2027 = vmatpush.msra.mxu0 0.0
        %2028 = vmatpush.msra.mxu0 0.0
        %2029 = vmatpush.msra.mxu0 0.0
        %2030 = vmatpush.msra.mxu0 0.0
        %2031 = vmatpush.msra.mxu0 0.0
        %2032 = vmatpush.msra.mxu0 0.0
        %2033 = vmatpush.msra.mxu0 0.0
        %2034 = vmatpush.msra.mxu0 0.0
        %2035 = vmatpush.msra.mxu0 0.0
        %2036 = vmatpush.msra.mxu0 %v2021
        %2037 = vmatpush.msra.mxu0 %v2009
        %2038 = vmatpush.msra.mxu0 %v2008
        %2039 = vmatmul.f32.gmra.mxu0 %v2012
        %v2040 = vpop.f32.mrf.mxu0
        %v2041 = vadd.f32 0.0, %v2040
        %2042 = vmatmul.f32.gmra.mxu0 %v2015
        %v2043 = vpop.f32.mrf.mxu0
        %v2044 = vadd.f32 0.0, %v2043
        %2045 = vmatmul.f32.gmra.mxu0 %v2018
        %v2046 = vpop.f32.mrf.mxu0
        %v2047 = vadd.f32 0.0, %v2046
        %2048 = vdwg.mxu0
        %v2050 = vsel %vm691, %v1864, 0
        %v2053 = vsel %vm691, %v1879, 0
        %v2056 = vsel %vm691, %v1894, 0
        %v2059 = vsel %vm890, %v1897, 0
        %2061 = vmatpush.msra.mxu0 0.0
        %2062 = vmatpush.msra.mxu0 0.0
        %2063 = vmatpush.msra.mxu0 0.0
        %2064 = vmatpush.msra.mxu0 0.0
        %2065 = vmatpush.msra.mxu0 0.0
        %2066 = vmatpush.msra.mxu0 0.0
        %2067 = vmatpush.msra.mxu0 0.0
        %2068 = vmatpush.msra.mxu0 0.0
        %2069 = vmatpush.msra.mxu0 0.0
        %2070 = vmatpush.msra.mxu0 0.0
        %2071 = vmatpush.msra.mxu0 0.0
        %2072 = vmatpush.msra.mxu0 0.0
        %2073 = vmatpush.msra.mxu0 0.0
        %2074 = vmatpush.msra.mxu0 %v2059
        %2075 = vmatpush.msra.mxu0 %v1896
        %2076 = vmatpush.msra.mxu0 %v1895
        %2077 = vmatmul.f32.gmra.mxu0 %v2050
        %v2078 = vpop.f32.mrf.mxu0
        %v2079 = vadd.f32 %v2041, %v2078
        %2080 = vmatmul.f32.gmra.mxu0 %v2053
        %v2081 = vpop.f32.mrf.mxu0
        %v2082 = vadd.f32 %v2044, %v2081
        %2083 = vmatmul.f32.gmra.mxu0 %v2056
        %v2084 = vpop.f32.mrf.mxu0
        %v2085 = vadd.f32 %v2047, %v2084
        %2086 = vdwg.mxu0
        %v2087 = vmul.f32 %v1706, %v448
        %v2088 = vmul.f32 %v1709, %v448
        %v2089 = vmul.f32 %v1712, %v448
        %v2091 = vsel %vm460, %v2087, 0
        %v2094 = vsel %vm460, %v2088, 0
        %v2097 = vsel %vm460, %v2089, 0
        %2099 = vmatpush.xpose.msra.mxu0 0.0
        %2100 = vmatpush.xpose.msra.mxu0 0.0
        %2101 = vmatpush.xpose.msra.mxu0 0.0
        %2102 = vmatpush.xpose.msra.mxu0 0.0
        %2103 = vmatpush.xpose.msra.mxu0 0.0
        %2104 = vmatpush.xpose.msra.mxu0 0.0
        %2105 = vmatpush.xpose.msra.mxu0 0.0
        %2106 = vmatpush.xpose.msra.mxu0 0.0
        %2107 = vmatpush.xpose.msra.mxu0 0.0
        %2108 = vmatpush.xpose.msra.mxu0 0.0
        %2109 = vmatpush.xpose.msra.mxu0 0.0
        %2110 = vmatpush.xpose.msra.mxu0 0.0
        %2111 = vmatpush.xpose.msra.mxu0 0.0
        %2112 = vmatpush.xpose.msra.mxu0 %v1795
        %2113 = vmatpush.xpose.msra.mxu0 %v1792
        %2114 = vmatpush.xpose.msra.mxu0 %v1789
        %2115 = vmatmul.f32.gmra.mxu0 %v2091
        %v2116 = vpop.f32.mrf.mxu0
        %v2117 = vadd.f32 0.0, %v2116
        %2118 = vmatmul.f32.gmra.mxu0 %v2094
        %v2119 = vpop.f32.mrf.mxu0
        %v2120 = vadd.f32 0.0, %v2119
        %2121 = vmatmul.f32.gmra.mxu0 %v2097
        %v2122 = vpop.f32.mrf.mxu0
        %v2123 = vadd.f32 0.0, %v2122
        %2124 = vdwg.mxu0
        %v2125 = vsel %vm691, %v2117, -inf
        %2126 = vmax.xlane.f32.xlu0 %v2125
        %v2127 = vpop.xlane.xlu0 %2126
        %v2128 = vsel %vm691, %v2120, -inf
        %2129 = vmax.xlane.f32.xlu0 %v2128
        %v2130 = vpop.xlane.xlu0 %2129
        %v2131 = vsel %vm698, %v2123, -inf
        %2132 = vmax.xlane.f32.xlu0 %v2131
        %v2133 = vpop.xlane.xlu0 %2132
        %v2134 = vsub.f32 %v2117, %v2127
        %v2135 = vsub.f32 %v2120, %v2130
        %v2136 = vsub.f32 %v2123, %v2133
        %v2137 = vmul.f32 %v2134, 1.442695
        %v2138 = vpow.pop %v2137
        %v2139 = vmul.f32 %v2135, 1.442695
        %v2140 = vpow.pop %v2139
        %v2141 = vmul.f32 %v2136, 1.442695
        %v2142 = vpow.pop %v2141
        %v2143 = vsel %vm691, %v2138, 0.0
        %2144 = vadd.xlane.f32.xlu0 %v2143
        %v2145 = vpop.xlane.xlu0 %2144
        %v2146 = vsel %vm691, %v2140, 0.0
        %2147 = vadd.xlane.f32.xlu0 %v2146
        %v2148 = vpop.xlane.xlu0 %2147
        %v2149 = vsel %vm698, %v2142, 0.0
        %2150 = vadd.xlane.f32.xlu0 %v2149
        %v2151 = vpop.xlane.xlu0 %2150
        %v2152 = vrcp.pop %v2145
        %v2153 = vmul.f32 %v2145, %v2152
        %v2154 = vsub.f32 1.0, %v2153
        %v2155 = vmul.f32 %v2152, %v2154
        %v2156 = vadd.f32 %v2152, %v2155
        %vm2157 = vweird.f32 %v2145
        %vm2158 = vweird.f32 %v2152
        %vm2159 = vmor %vm2157, %vm2158
        %v2160 = vsel %vm2159, %v2152, %v2156
        %v2161 = vand.u32 2147483647, %v2145
        %vm2162 = vcmp.eq.f32.partialorder %v2161, 8.507059e+37
        %v2163 = vand.u32 %v2145, 2147483648
        %v2164 = vor.u32 1.1754944e-38, %v2163
        %v2165 = vsel %vm2162, %v2164, %v2160
        %v2166 = vmul.f32 %v2138, %v2165
        %v2167 = vrcp.pop %v2148
        %v2168 = vmul.f32 %v2148, %v2167
        %v2169 = vsub.f32 1.0, %v2168
        %v2170 = vmul.f32 %v2167, %v2169
        %v2171 = vadd.f32 %v2167, %v2170
        %vm2172 = vweird.f32 %v2148
        %vm2173 = vweird.f32 %v2167
        %vm2174 = vmor %vm2172, %vm2173
        %v2175 = vsel %vm2174, %v2167, %v2171
        %v2176 = vand.u32 2147483647, %v2148
        %vm2177 = vcmp.eq.f32.partialorder %v2176, 8.507059e+37
        %v2178 = vand.u32 %v2148, 2147483648
        %v2179 = vor.u32 1.1754944e-38, %v2178
        %v2180 = vsel %vm2177, %v2179, %v2175
        %v2181 = vmul.f32 %v2140, %v2180
        %v2182 = vrcp.pop %v2151
        %v2183 = vmul.f32 %v2151, %v2182
        %v2184 = vsub.f32 1.0, %v2183
        %v2185 = vmul.f32 %v2182, %v2184
        %v2186 = vadd.f32 %v2182, %v2185
        %vm2187 = vweird.f32 %v2151
        %vm2188 = vweird.f32 %v2182
        %vm2189 = vmor %vm2187, %vm2188
        %v2190 = vsel %vm2189, %v2182, %v2186
        %v2191 = vand.u32 2147483647, %v2151
        %vm2192 = vcmp.eq.f32.partialorder %v2191, 8.507059e+37
        %v2193 = vand.u32 %v2151, 2147483648
        %v2194 = vor.u32 1.1754944e-38, %v2193
        %v2195 = vsel %vm2192, %v2194, %v2190
        %v2196 = vmul.f32 %v2142, %v2195
        %v2197 = vmul.f32 %v1768, %v448
        %v2198 = vmul.f32 %v1771, %v448
        %v2199 = vmul.f32 %v1774, %v448
        %v2201 = vsel %vm691, %v2166, 0
        %v2204 = vsel %vm691, %v2181, 0
        %v2207 = vsel %vm691, %v2196, 0
        %v2210 = vsel %vm890, %v2199, 0
        %2212 = vmatpush.msra.mxu0 0.0
        %2213 = vmatpush.msra.mxu0 0.0
        %2214 = vmatpush.msra.mxu0 0.0
        %2215 = vmatpush.msra.mxu0 0.0
        %2216 = vmatpush.msra.mxu0 0.0
        %2217 = vmatpush.msra.mxu0 0.0
        %2218 = vmatpush.msra.mxu0 0.0
        %2219 = vmatpush.msra.mxu0 0.0
        %2220 = vmatpush.msra.mxu0 0.0
        %2221 = vmatpush.msra.mxu0 0.0
        %2222 = vmatpush.msra.mxu0 0.0
        %2223 = vmatpush.msra.mxu0 0.0
        %2224 = vmatpush.msra.mxu0 0.0
        %2225 = vmatpush.msra.mxu0 %v2210
        %2226 = vmatpush.msra.mxu0 %v2198
        %2227 = vmatpush.msra.mxu0 %v2197
        %2228 = vmatmul.f32.gmra.mxu0 %v2201
        %v2229 = vpop.f32.mrf.mxu0
        %v2230 = vadd.f32 0.0, %v2229
        %2231 = vmatmul.f32.gmra.mxu0 %v2204
        %v2232 = vpop.f32.mrf.mxu0
        %v2233 = vadd.f32 0.0, %v2232
        %2234 = vmatmul.f32.gmra.mxu0 %v2207
        %v2235 = vpop.f32.mrf.mxu0
        %v2236 = vadd.f32 0.0, %v2235
        %2237 = vdwg.mxu0
        %v2238 = vadd.f32 %v2079, %v2230
        %v2239 = vadd.f32 %v2082, %v2233
        %v2240 = vadd.f32 %v2085, %v2236
        %v2241 = vmul.f32 %v1706, %v453
        %v2242 = vmul.f32 %v1709, %v453
        %v2243 = vmul.f32 %v1712, %v453
        %v2245 = vsel %vm460, %v2241, 0
        %v2248 = vsel %vm460, %v2242, 0
        %v2251 = vsel %vm460, %v2243, 0
        %2253 = vmatpush.xpose.msra.mxu0 0.0
        %2254 = vmatpush.xpose.msra.mxu0 0.0
        %2255 = vmatpush.xpose.msra.mxu0 0.0
        %2256 = vmatpush.xpose.msra.mxu0 0.0
        %2257 = vmatpush.xpose.msra.mxu0 0.0
        %2258 = vmatpush.xpose.msra.mxu0 0.0
        %2259 = vmatpush.xpose.msra.mxu0 0.0
        %2260 = vmatpush.xpose.msra.mxu0 0.0
        %2261 = vmatpush.xpose.msra.mxu0 0.0
        %2262 = vmatpush.xpose.msra.mxu0 0.0
        %2263 = vmatpush.xpose.msra.mxu0 0.0
        %2264 = vmatpush.xpose.msra.mxu0 0.0
        %2265 = vmatpush.xpose.msra.mxu0 0.0
        %2266 = vmatpush.xpose.msra.mxu0 %v1795
        %2267 = vmatpush.xpose.msra.mxu0 %v1792
        %2268 = vmatpush.xpose.msra.mxu0 %v1789
        %2269 = vmatmul.f32.gmra.mxu0 %v2245
        %v2270 = vpop.f32.mrf.mxu0
        %v2271 = vadd.f32 0.0, %v2270
        %2272 = vmatmul.f32.gmra.mxu0 %v2248
        %v2273 = vpop.f32.mrf.mxu0
        %v2274 = vadd.f32 0.0, %v2273
        %2275 = vmatmul.f32.gmra.mxu0 %v2251
        %v2276 = vpop.f32.mrf.mxu0
        %v2277 = vadd.f32 0.0, %v2276
        %2278 = vdwg.mxu0
        %v2279 = vsel %vm691, %v2271, -inf
        %2280 = vmax.xlane.f32.xlu0 %v2279
        %v2281 = vpop.xlane.xlu0 %2280
        %v2282 = vsel %vm691, %v2274, -inf
        %2283 = vmax.xlane.f32.xlu0 %v2282
        %v2284 = vpop.xlane.xlu0 %2283
        %v2285 = vsel %vm698, %v2277, -inf
        %2286 = vmax.xlane.f32.xlu0 %v2285
        %v2287 = vpop.xlane.xlu0 %2286
        %v2288 = vsub.f32 %v2271, %v2281
        %v2289 = vsub.f32 %v2274, %v2284
        %v2290 = vsub.f32 %v2277, %v2287
        %v2291 = vmul.f32 %v2288, 1.442695
        %v2292 = vpow.pop %v2291
        %v2293 = vmul.f32 %v2289, 1.442695
        %v2294 = vpow.pop %v2293
        %v2295 = vmul.f32 %v2290, 1.442695
        %v2296 = vpow.pop %v2295
        %v2297 = vsel %vm691, %v2292, 0.0
        %2298 = vadd.xlane.f32.xlu0 %v2297
        %v2299 = vpop.xlane.xlu0 %2298
        %v2300 = vsel %vm691, %v2294, 0.0
        %2301 = vadd.xlane.f32.xlu0 %v2300
        %v2302 = vpop.xlane.xlu0 %2301
        %v2303 = vsel %vm698, %v2296, 0.0
        %2304 = vadd.xlane.f32.xlu0 %v2303
        %v2305 = vpop.xlane.xlu0 %2304
        %v2306 = vrcp.pop %v2299
        %v2307 = vmul.f32 %v2299, %v2306
        %v2308 = vsub.f32 1.0, %v2307
        %v2309 = vmul.f32 %v2306, %v2308
        %v2310 = vadd.f32 %v2306, %v2309
        %vm2311 = vweird.f32 %v2299
        %vm2312 = vweird.f32 %v2306
        %vm2313 = vmor %vm2311, %vm2312
        %v2314 = vsel %vm2313, %v2306, %v2310
        %v2315 = vand.u32 2147483647, %v2299
        %vm2316 = vcmp.eq.f32.partialorder %v2315, 8.507059e+37
        %v2317 = vand.u32 %v2299, 2147483648
        %v2318 = vor.u32 1.1754944e-38, %v2317
        %v2319 = vsel %vm2316, %v2318, %v2314
        %v2320 = vmul.f32 %v2292, %v2319
        %v2321 = vrcp.pop %v2302
        %v2322 = vmul.f32 %v2302, %v2321
        %v2323 = vsub.f32 1.0, %v2322
        %v2324 = vmul.f32 %v2321, %v2323
        %v2325 = vadd.f32 %v2321, %v2324
        %vm2326 = vweird.f32 %v2302
        %vm2327 = vweird.f32 %v2321
        %vm2328 = vmor %vm2326, %vm2327
        %v2329 = vsel %vm2328, %v2321, %v2325
        %v2330 = vand.u32 2147483647, %v2302
        %vm2331 = vcmp.eq.f32.partialorder %v2330, 8.507059e+37
        %v2332 = vand.u32 %v2302, 2147483648
        %v2333 = vor.u32 1.1754944e-38, %v2332
        %v2334 = vsel %vm2331, %v2333, %v2329
        %v2335 = vmul.f32 %v2294, %v2334
        %v2336 = vrcp.pop %v2305
        %v2337 = vmul.f32 %v2305, %v2336
        %v2338 = vsub.f32 1.0, %v2337
        %v2339 = vmul.f32 %v2336, %v2338
        %v2340 = vadd.f32 %v2336, %v2339
        %vm2341 = vweird.f32 %v2305
        %vm2342 = vweird.f32 %v2336
        %vm2343 = vmor %vm2341, %vm2342
        %v2344 = vsel %vm2343, %v2336, %v2340
        %v2345 = vand.u32 2147483647, %v2305
        %vm2346 = vcmp.eq.f32.partialorder %v2345, 8.507059e+37
        %v2347 = vand.u32 %v2305, 2147483648
        %v2348 = vor.u32 1.1754944e-38, %v2347
        %v2349 = vsel %vm2346, %v2348, %v2344
        %v2350 = vmul.f32 %v2296, %v2349
        %v2351 = vmul.f32 %v1768, %v453
        %v2352 = vmul.f32 %v1771, %v453
        %v2353 = vmul.f32 %v1774, %v453
        %v2355 = vsel %vm691, %v2320, 0
        %v2358 = vsel %vm691, %v2335, 0
        %v2361 = vsel %vm691, %v2350, 0
        %v2364 = vsel %vm890, %v2353, 0
        %2366 = vmatpush.msra.mxu0 0.0
        %2367 = vmatpush.msra.mxu0 0.0
        %2368 = vmatpush.msra.mxu0 0.0
        %2369 = vmatpush.msra.mxu0 0.0
        %2370 = vmatpush.msra.mxu0 0.0
        %2371 = vmatpush.msra.mxu0 0.0
        %2372 = vmatpush.msra.mxu0 0.0
        %2373 = vmatpush.msra.mxu0 0.0
        %2374 = vmatpush.msra.mxu0 0.0
        %2375 = vmatpush.msra.mxu0 0.0
        %2376 = vmatpush.msra.mxu0 0.0
        %2377 = vmatpush.msra.mxu0 0.0
        %2378 = vmatpush.msra.mxu0 0.0
        %2379 = vmatpush.msra.mxu0 %v2364
        %2380 = vmatpush.msra.mxu0 %v2352
        %2381 = vmatpush.msra.mxu0 %v2351
        %2382 = vmatmul.f32.gmra.mxu0 %v2355
        %v2383 = vpop.f32.mrf.mxu0
        %v2384 = vadd.f32 0.0, %v2383
        %2385 = vmatmul.f32.gmra.mxu0 %v2358
        %v2386 = vpop.f32.mrf.mxu0
        %v2387 = vadd.f32 0.0, %v2386
        %2388 = vmatmul.f32.gmra.mxu0 %v2361
        %v2389 = vpop.f32.mrf.mxu0
        %v2390 = vadd.f32 0.0, %v2389
        %2391 = vdwg.mxu0
        %v2392 = vadd.f32 %v2238, %v2384
        %v2393 = vadd.f32 %v2239, %v2387
        %v2394 = vadd.f32 %v2240, %v2390
        %s2395 = scalar_lea.vmem %s3, 224
        %v2396 = vld [vmem:[%s2395] sm:$0xff]
        %v2397 = vld [vmem:[%s2395 + $0x8] sm:$0xff]
        %v2398 = vld [vmem:[%s2395 + $0x10] sm:$0xff]
        %v2399 = vld [vmem:[%s2395 + $0x18] sm:$0xff]
        %v2400 = vperm.slane %v1598, 0
        %v2402 = vsel %vm460, %v2392, 0
        %v2405 = vsel %vm460, %v2393, 0
        %v2408 = vsel %vm460, %v2394, 0
        %2410 = vmatpush.msra.mxu0 0.0
        %2411 = vmatpush.msra.mxu0 0.0
        %2412 = vmatpush.msra.mxu0 0.0
        %2413 = vmatpush.msra.mxu0 0.0
        %2414 = vmatpush.msra.mxu0 0.0
        %2415 = vmatpush.msra.mxu0 0.0
        %2416 = vmatpush.msra.mxu0 0.0
        %2417 = vmatpush.msra.mxu0 0.0
        %2418 = vmatpush.msra.mxu0 0.0
        %2419 = vmatpush.msra.mxu0 0.0
        %2420 = vmatpush.msra.mxu0 0.0
        %2421 = vmatpush.msra.mxu0 0.0
        %2422 = vmatpush.msra.mxu0 %v2399
        %2423 = vmatpush.msra.mxu0 %v2398
        %2424 = vmatpush.msra.mxu0 %v2397
        %2425 = vmatpush.msra.mxu0 %v2396
        %2426 = vmatmul.f32.gmra.mxu0 %v2402
        %v2427 = vpop.f32.mrf.mxu0
        %v2428 = vadd.f32 %v2400, %v2427
        %2429 = vmatmul.f32.gmra.mxu0 %v2405
        %v2430 = vpop.f32.mrf.mxu0
        %v2431 = vadd.f32 %v2400, %v2430
        %2432 = vmatmul.f32.gmra.mxu0 %v2408
        %v2433 = vpop.f32.mrf.mxu0
        %v2434 = vadd.f32 %v2400, %v2433
        %2435 = vdwg.mxu0
        %v2436 = vadd.f32 %v1590, %v2428
        %v2437 = vadd.f32 %v1591, %v2431
        %v2438 = vadd.f32 %v1592, %v2434
        %v2439 = vsel %vm460, %v2436, 0.0
        %2440 = vadd.xlane.f32.xlu0 %v2439
        %v2441 = vpop.xlane.xlu0 %2440
        %v2442 = vsel %vm460, %v2437, 0.0
        %2443 = vadd.xlane.f32.xlu0 %v2442
        %v2444 = vpop.xlane.xlu0 %2443
        %v2445 = vsel %vm467, %v2438, 0.0
        %2446 = vadd.xlane.f32.xlu0 %v2445
        %v2447 = vpop.xlane.xlu0 %2446
        %v2448 = vmul.f32 %v2441, %v477
        %v2449 = vmul.f32 %v2444, %v477
        %v2450 = vmul.f32 %v2447, %v477
        %v2451 = vsub.f32 %v2436, %v2448
        %v2452 = vsub.f32 %v2437, %v2449
        %v2453 = vsub.f32 %v2438, %v2450
        %v2454 = vmul.f32 %v2451, %v2451
        %v2455 = vmul.f32 %v2452, %v2452
        %v2456 = vmul.f32 %v2453, %v2453
        %v2457 = vsel %vm460, %v2454, 0.0
        %2458 = vadd.xlane.f32.xlu0 %v2457
        %v2459 = vpop.xlane.xlu0 %2458
        %v2460 = vsel %vm460, %v2455, 0.0
        %2461 = vadd.xlane.f32.xlu0 %v2460
        %v2462 = vpop.xlane.xlu0 %2461
        %v2463 = vsel %vm467, %v2456, 0.0
        %2464 = vadd.xlane.f32.xlu0 %v2463
        %v2465 = vpop.xlane.xlu0 %2464
        %v2466 = vmul.f32 %v2459, %v477
        %v2467 = vmul.f32 %v2462, %v477
        %v2468 = vmul.f32 %v2465, %v477
        %v2469 = vadd.f32 %v2466, 1e-05
        %v2470 = vadd.f32 %v2467, 1e-05
        %v2471 = vadd.f32 %v2468, 1e-05
        %v2472 = vrsqrt.pop %v2469
        %v2473 = vmul.f32 %v2472, %v2469
        %v2474 = vmul.f32 %v2473, %v2472
        %v2475 = vmul.f32 0.5, %v2474
        %v2476 = vsub.f32 1.5, %v2475
        %v2477 = vmul.f32 %v2472, %v2476
        %vm2478 = vweird.f32 %v2469
        %vm2479 = vweird.f32 %v2472
        %vm2480 = vmor %vm2478, %vm2479
        %v2481 = vsel %vm2480, %v2472, %v2477
        %v2482 = vrsqrt.pop %v2470
        %v2483 = vmul.f32 %v2482, %v2470
        %v2484 = vmul.f32 %v2483, %v2482
        %v2485 = vmul.f32 0.5, %v2484
        %v2486 = vsub.f32 1.5, %v2485
        %v2487 = vmul.f32 %v2482, %v2486
        %vm2488 = vweird.f32 %v2470
        %vm2489 = vweird.f32 %v2482
        %vm2490 = vmor %vm2488, %vm2489
        %v2491 = vsel %vm2490, %v2482, %v2487
        %v2492 = vrsqrt.pop %v2471
        %v2493 = vmul.f32 %v2492, %v2471
        %v2494 = vmul.f32 %v2493, %v2492
        %v2495 = vmul.f32 0.5, %v2494
        %v2496 = vsub.f32 1.5, %v2495
        %v2497 = vmul.f32 %v2492, %v2496
        %vm2498 = vweird.f32 %v2471
        %vm2499 = vweird.f32 %v2492
        %vm2500 = vmor %vm2498, %vm2499
        %v2501 = vsel %vm2500, %v2492, %v2497
        %v2502 = vmul.f32 %v2451, %v2481
        %v2503 = vmul.f32 %v2452, %v2491
        %v2504 = vmul.f32 %v2453, %v2501
        %v2505 = vperm.slane %v1596, 0
        %v2506 = vmul.f32 %v2502, %v2505
        %v2507 = vmul.f32 %v2503, %v2505
        %v2508 = vmul.f32 %v2504, %v2505
        %v2509 = vperm.slane %v1597, 0
        %v2510 = vadd.f32 %v2506, %v2509
        %v2511 = vadd.f32 %v2507, %v2509
        %v2512 = vadd.f32 %v2508, %v2509
        %s2513 = scalar_lea.vmem %s4, 32
        %v2514 = vld [vmem:[%s2513] sm:$0xff]
        %v2515 = vld [vmem:[%s2513 + $0x8] sm:$0xff]
        %v2516 = vld [vmem:[%s2513 + $0x10] sm:$0xff]
        %v2517 = vld [vmem:[%s2513 + $0x18] sm:$0xff]
        %s2518 = scalar_lea.vmem %s7, 1
        %v2519 = vld [vmem:[%s2518] sm:$0x1]
        %v2521 = vperm.slane %v2519, 0
        %v2524 = vsel %vm460, %v2510, 0
        %v2527 = vsel %vm460, %v2511, 0
        %v2530 = vsel %vm460, %v2512, 0
        %2532 = vmatpush.msra.mxu0 0.0
        %2533 = vmatpush.msra.mxu0 0.0
        %2534 = vmatpush.msra.mxu0 0.0
        %2535 = vmatpush.msra.mxu0 0.0
        %2536 = vmatpush.msra.mxu0 0.0
        %2537 = vmatpush.msra.mxu0 0.0
        %2538 = vmatpush.msra.mxu0 0.0
        %2539 = vmatpush.msra.mxu0 0.0
        %2540 = vmatpush.msra.mxu0 0.0
        %2541 = vmatpush.msra.mxu0 0.0
        %2542 = vmatpush.msra.mxu0 0.0
        %2543 = vmatpush.msra.mxu0 0.0
        %2544 = vmatpush.msra.mxu0 %v2517
        %2545 = vmatpush.msra.mxu0 %v2516
        %2546 = vmatpush.msra.mxu0 %v2515
        %2547 = vmatpush.msra.mxu0 %v2514
        %2548 = vmatmul.f32.gmra.mxu0 %v2524
        %v2549 = vpop.f32.mrf.mxu0
        %v2550 = vadd.f32 %v2521, %v2549
        %2551 = vmatmul.f32.gmra.mxu0 %v2527
        %v2552 = vpop.f32.mrf.mxu0
        %v2553 = vadd.f32 %v2521, %v2552
        %2554 = vmatmul.f32.gmra.mxu0 %v2530
        %v2555 = vpop.f32.mrf.mxu0
        %v2556 = vadd.f32 %v2521, %v2555
        %2557 = vdwg.mxu0
        %v2558 = vmul.f32 %v2550, 0.5
        %v2559 = vmul.f32 %v2553, 0.5
        %v2560 = vmul.f32 %v2556, 0.5
        %v2561 = vmul.f32 %v2550, 0.70710677
        %v2562 = vmul.f32 %v2553, 0.70710677
        %v2563 = vmul.f32 %v2556, 0.70710677
        %v2564 = vand.u32 2147483647, %v2561
        %v2565 = vand.u32 2147483647, %v2562
        %v2566 = vand.u32 2147483647, %v2563
        %v2567 = vmul.f32 %v2564, 0.3275911
        %v2568 = vmul.f32 %v2565, 0.3275911
        %v2569 = vmul.f32 %v2566, 0.3275911
        %v2570 = vadd.f32 %v2567, 1.0
        %v2571 = vadd.f32 %v2568, 1.0
        %v2572 = vadd.f32 %v2569, 1.0
        %v2573 = vrcp.pop %v2570
        %v2574 = vmul.f32 %v2570, %v2573
        %v2575 = vsub.f32 1.0, %v2574
        %v2576 = vmul.f32 %v2573, %v2575
        %v2577 = vadd.f32 %v2573, %v2576
        %vm2578 = vweird.f32 %v2570
        %vm2579 = vweird.f32 %v2573
        %vm2580 = vmor %vm2578, %vm2579
        %v2581 = vsel %vm2580, %v2573, %v2577
        %v2582 = vand.u32 2147483647, %v2570
        %vm2583 = vcmp.eq.f32.partialorder %v2582, 8.507059e+37
        %v2584 = vand.u32 %v2570, 2147483648
        %v2585 = vor.u32 1.1754944e-38, %v2584
        %v2586 = vsel %vm2583, %v2585, %v2581
        %v2587 = vmul.f32 1.0, %v2586
        %v2588 = vrcp.pop %v2571
        %v2589 = vmul.f32 %v2571, %v2588
        %v2590 = vsub.f32 1.0, %v2589
        %v2591 = vmul.f32 %v2588, %v2590
        %v2592 = vadd.f32 %v2588, %v2591
        %vm2593 = vweird.f32 %v2571
        %vm2594 = vweird.f32 %v2588
        %vm2595 = vmor %vm2593, %vm2594
        %v2596 = vsel %vm2595, %v2588, %v2592
        %v2597 = vand.u32 2147483647, %v2571
        %vm2598 = vcmp.eq.f32.partialorder %v2597, 8.507059e+37
        %v2599 = vand.u32 %v2571, 2147483648
        %v2600 = vor.u32 1.1754944e-38, %v2599
        %v2601 = vsel %vm2598, %v2600, %v2596
        %v2602 = vmul.f32 1.0, %v2601
        %v2603 = vrcp.pop %v2572
        %v2604 = vmul.f32 %v2572, %v2603
        %v2605 = vsub.f32 1.0, %v2604
        %v2606 = vmul.f32 %v2603, %v2605
        %v2607 = vadd.f32 %v2603, %v2606
        %vm2608 = vweird.f32 %v2572
        %vm2609 = vweird.f32 %v2603
        %vm2610 = vmor %vm2608, %vm2609
        %v2611 = vsel %vm2610, %v2603, %v2607
        %v2612 = vand.u32 2147483647, %v2572
        %vm2613 = vcmp.eq.f32.partialorder %v2612, 8.507059e+37
        %v2614 = vand.u32 %v2572, 2147483648
        %v2615 = vor.u32 1.1754944e-38, %v2614
        %v2616 = vsel %vm2613, %v2615, %v2611
        %v2617 = vmul.f32 1.0, %v2616
        %v2618 = vmul.f32 %v2587, 1.0614054
        %v2619 = vmul.f32 %v2602, 1.0614054
        %v2620 = vmul.f32 %v2617, 1.0614054
        %v2621 = vadd.f32 %v2618, -1.4531521
        %v2622 = vadd.f32 %v2619, -1.4531521
        %v2623 = vadd.f32 %v2620, -1.4531521
        %v2624 = vmul.f32 %v2621, %v2587
        %v2625 = vmul.f32 %v2622, %v2602
        %v2626 = vmul.f32 %v2623, %v2617
        %v2627 = vadd.f32 %v2624, 1.4214138
        %v2628 = vadd.f32 %v2625, 1.4214138
        %v2629 = vadd.f32 %v2626, 1.4214138
        %v2630 = vmul.f32 %v2627, %v2587
        %v2631 = vmul.f32 %v2628, %v2602
        %v2632 = vmul.f32 %v2629, %v2617
        %v2633 = vadd.f32 %v2630, -0.28449672
        %v2634 = vadd.f32 %v2631, -0.28449672
        %v2635 = vadd.f32 %v2632, -0.28449672
        %v2636 = vmul.f32 %v2633, %v2587
        %v2637 = vmul.f32 %v2634, %v2602
        %v2638 = vmul.f32 %v2635, %v2617
        %v2639 = vadd.f32 %v2636, 0.2548296
        %v2640 = vadd.f32 %v2637, 0.2548296
        %v2641 = vadd.f32 %v2638, 0.2548296
        %v2642 = vmul.f32 %v2639, %v2587
        %v2643 = vmul.f32 %v2640, %v2602
        %v2644 = vmul.f32 %v2641, %v2617
        %v2645 = vsub.f32 0.0, %v2564
        %v2646 = vsub.f32 0.0, %v2565
        %v2647 = vsub.f32 0.0, %v2566
        %v2648 = vmul.f32 %v2645, %v2564
        %v2649 = vmul.f32 %v2646, %v2565
        %v2650 = vmul.f32 %v2647, %v2566
        %v2651 = vmul.f32 %v2648, 1.442695
        %v2652 = vpow.pop %v2651
        %v2653 = vmul.f32 %v2649, 1.442695
        %v2654 = vpow.pop %v2653
        %v2655 = vmul.f32 %v2650, 1.442695
        %v2656 = vpow.pop %v2655
        %v2657 = vmul.f32 %v2642, %v2652
        %v2658 = vmul.f32 %v2643, %v2654
        %v2659 = vmul.f32 %v2644, %v2656
        %v2660 = vsub.f32 1.0, %v2657
        %v2661 = vsub.f32 1.0, %v2658
        %v2662 = vsub.f32 1.0, %v2659
        %vm2663 = vcmp.ge.f32.partialorder %v2561, 0.0
        %vm2664 = vcmp.ge.f32.partialorder %v2562, 0.0
        %vm2665 = vcmp.ge.f32.partialorder %v2563, 0.0
        %v2666 = vsub.f32 0.0, %v2660
        %v2667 = vsub.f32 0.0, %v2661
        %v2668 = vsub.f32 0.0, %v2662
        %v2669 = vsel %vm2663, %v2660, %v2666
        %v2670 = vsel %vm2664, %v2661, %v2667
        %v2671 = vsel %vm2665, %v2662, %v2668
        %v2672 = vadd.f32 %v2669, 1.0
        %v2673 = vadd.f32 %v2670, 1.0
        %v2674 = vadd.f32 %v2671, 1.0
        %v2675 = vmul.f32 %v2558, %v2672
        %v2676 = vmul.f32 %v2559, %v2673
        %v2677 = vmul.f32 %v2560, %v2674
        %s2678 = scalar_lea.vmem %s5, 128
        %v2679 = vld [vmem:[%s2678] sm:$0xff]
        %v2680 = vld [vmem:[%s2678 + $0x8] sm:$0xff]
        %v2681 = vld [vmem:[%s2678 + $0x10] sm:$0xff]
        %v2682 = vld [vmem:[%s2678 + $0x18] sm:$0xff]
        %v2683 = vld [vmem:[%s2678 + $0x20] sm:$0xff]
        %v2684 = vld [vmem:[%s2678 + $0x28] sm:$0xff]
        %v2685 = vld [vmem:[%s2678 + $0x30] sm:$0xff]
        %v2686 = vld [vmem:[%s2678 + $0x38] sm:$0xff]
        %v2687 = vld [vmem:[%s2678 + $0x40] sm:$0xff]
        %v2688 = vld [vmem:[%s2678 + $0x48] sm:$0xff]
        %v2689 = vld [vmem:[%s2678 + $0x50] sm:$0xff]
        %v2690 = vld [vmem:[%s2678 + $0x58] sm:$0xff]
        %v2691 = vld [vmem:[%s2678 + $0x60] sm:$0xff]
        %v2692 = vld [vmem:[%s2678 + $0x68] sm:$0xff]
        %v2693 = vld [vmem:[%s2678 + $0x70] sm:$0xff]
        %v2694 = vld [vmem:[%s2678 + $0x78] sm:$0xff]
        %v2695 = vperm.slane %v1599, 0
        %2696 = vmatpush.msra.mxu0 %v2694
        %2697 = vmatpush.msra.mxu0 %v2693
        %2698 = vmatpush.msra.mxu0 %v2692
        %2699 = vmatpush.msra.mxu0 %v2691
        %2700 = vmatpush.msra.mxu0 %v2690
        %2701 = vmatpush.msra.mxu0 %v2689
        %2702 = vmatpush.msra.mxu0 %v2688
        %2703 = vmatpush.msra.mxu0 %v2687
        %2704 = vmatpush.msra.mxu0 %v2686
        %2705 = vmatpush.msra.mxu0 %v2685
        %2706 = vmatpush.msra.mxu0 %v2684
        %2707 = vmatpush.msra.mxu0 %v2683
        %2708 = vmatpush.msra.mxu0 %v2682
        %2709 = vmatpush.msra.mxu0 %v2681
        %2710 = vmatpush.msra.mxu0 %v2680
        %2711 = vmatpush.msra.mxu0 %v2679
        %2712 = vmatmul.f32.gmra.mxu0 %v2675
        %v2713 = vpop.f32.mrf.mxu0
        %v2714 = vadd.f32 %v2695, %v2713
        %2715 = vmatmul.f32.gmra.mxu0 %v2676
        %v2716 = vpop.f32.mrf.mxu0
        %v2717 = vadd.f32 %v2695, %v2716
        %2718 = vmatmul.f32.gmra.mxu0 %v2677
        %v2719 = vpop.f32.mrf.mxu0
        %v2720 = vadd.f32 %v2695, %v2719
        %2721 = vdwg.mxu0
        %v2722 = vadd.f32 %v2436, %v2714
        %v2723 = vadd.f32 %v2437, %v2717
        %v2724 = vadd.f32 %v2438, %v2720
        %vm2725 = vcmp.eq.s32.totalorder %v433, 0
        %v2726 = vsel %vm2725, 1, 0
        %v2727 = vcvt.s32.f32 %v2726
        %v2729 = vsel %vm691, %v2727, 0
        %v2732 = vsel %vm890, %v2724, 0
        %2734 = vmatpush.msra.mxu0 0.0
        %2735 = vmatpush.msra.mxu0 0.0
        %2736 = vmatpush.msra.mxu0 0.0
        %2737 = vmatpush.msra.mxu0 0.0
        %2738 = vmatpush.msra.mxu0 0.0
        %2739 = vmatpush.msra.mxu0 0.0
        %2740 = vmatpush.msra.mxu0 0.0
        %2741 = vmatpush.msra.mxu0 0.0
        %2742 = vmatpush.msra.mxu0 0.0
        %2743 = vmatpush.msra.mxu0 0.0
        %2744 = vmatpush.msra.mxu0 0.0
        %2745 = vmatpush.msra.mxu0 0.0
        %2746 = vmatpush.msra.mxu0 0.0
        %2747 = vmatpush.msra.mxu0 %v2732
        %2748 = vmatpush.msra.mxu0 %v2723
        %2749 = vmatpush.msra.mxu0 %v2722
        %2750 = vmatmul.f32.gmra.mxu0 %v2729
        %v2751 = vpop.f32.mrf.mxu0
        %v2752 = vadd.f32 0.0, %v2751
        %2753 = vdwg.mxu0
        %v2754 = vld [vmem:[%s8] sm:$0x1]
        %v2755 = vld [vmem:[%s8 + $0x1] sm:$0x1]
        %v2756 = vsel %vm467, %v2752, 0.0
        %2757 = vadd.xlane.f32.xlu0 %v2756
        %v2758 = vpop.xlane.xlu0 %2757
        %v2759 = vmul.f32 %v2758, %v477
        %v2760 = vsub.f32 %v2752, %v2759
        %v2761 = vmul.f32 %v2760, %v2760
        %v2762 = vsel %vm467, %v2761, 0.0
        %2763 = vadd.xlane.f32.xlu0 %v2762
        %v2764 = vpop.xlane.xlu0 %2763
        %v2765 = vmul.f32 %v2764, %v477
        %v2766 = vadd.f32 %v2765, 1e-05
        %v2767 = vrsqrt.pop %v2766
        %v2768 = vmul.f32 %v2767, %v2766
        %v2769 = vmul.f32 %v2768, %v2767
        %v2770 = vmul.f32 0.5, %v2769
        %v2771 = vsub.f32 1.5, %v2770
        %v2772 = vmul.f32 %v2767, %v2771
        %vm2773 = vweird.f32 %v2766
        %vm2774 = vweird.f32 %v2767
        %vm2775 = vmor %vm2773, %vm2774
        %v2776 = vsel %vm2775, %v2767, %v2772
        %v2777 = vmul.f32 %v2760, %v2776
        %v2778 = vmul.f32 %v2777, %v2754
        %v2779 = vadd.f32 %v2778, %v2755
        %v2780 = vld [vmem:[%s9] sm:$0xff]
        %v2781 = vld [vmem:[%s9 + $0x8] sm:$0xff]
        %v2782 = vld [vmem:[%s9 + $0x10] sm:$0xff]
        %v2783 = vld [vmem:[%s9 + $0x18] sm:$0xff]
        %v2784 = vld [vmem:[%s10] sm:$0x1]
        %v2786 = vsel %vm460, %v2779, 0
        %2788 = vmatpush.msra.mxu0 0.0
        %2789 = vmatpush.msra.mxu0 0.0
        %2790 = vmatpush.msra.mxu0 0.0
        %2791 = vmatpush.msra.mxu0 0.0
        %2792 = vmatpush.msra.mxu0 0.0
        %2793 = vmatpush.msra.mxu0 0.0
        %2794 = vmatpush.msra.mxu0 0.0
        %2795 = vmatpush.msra.mxu0 0.0
        %2796 = vmatpush.msra.mxu0 0.0
        %2797 = vmatpush.msra.mxu0 0.0
        %2798 = vmatpush.msra.mxu0 0.0
        %2799 = vmatpush.msra.mxu0 0.0
        %2800 = vmatpush.msra.mxu0 %v2783
        %2801 = vmatpush.msra.mxu0 %v2782
        %2802 = vmatpush.msra.mxu0 %v2781
        %2803 = vmatpush.msra.mxu0 %v2780
        %2804 = vmatmul.f32.gmra.mxu0 %v2786
        %v2805 = vpop.f32.mrf.mxu0
        %v2806 = vadd.f32 %v2784, %v2805
        %2807 = vdwg.mxu0
        %vm2808 = vcmask 73728
        %2809 = vst.msk [vmem:[%s378] sm:$0x1] %vm2808, %v2806
        %s2810 = sand.u32 %s269, 1
        %s2811 = scalar_lea.sflag [#allocation3], %s2810
        %s2812 = sand.u32 %s269, 1
        %s2813 = scalar_lea.vmem [#allocation2], %s2812
        // Predicated region
        $region65: #{vit_forward.1} parent=63 // pred_check
          %p2814 = pneg %p279
        $region66: #{vit_forward.1} parent=63 // pred_check_branch
          %2816 = sbr.rel (%p2814) target = $region68
        $region67: #{vit_forward.1} parent=63 // pred_region
          %2818 = vsyncadd %s2811, 0
          %s2819 = scalar_lea.hbm %s11, %s25
          %s2821 = sshll.u32 %s2813, 4
          %s2822 = int_to_ptr.vmem [resolvable:$true] %s2821
          %s2823 = sshll.u32 %s2819, 4
          %s2824 = int_to_ptr.hbm [resolvable:$true] %s2823
          %2826 = dma.vmem_to_hbm [thread:$0]  %s2822, 16, %s2824, %s2811
        $region68: #{vit_forward.1} parent=63 // pred_fallthru
          _
      $region64: #{vit_forward.1} parent=5 // pred_fallthru
        _
      %p2827 = scmp.le.s32.totalorder 2, %s20
      // Predicated region
      $region69: #{vit_forward.1} parent=5 // pred_check
        %p2828 = pneg %p2827
      $region70: #{vit_forward.1} parent=5 // pred_check_branch
        %2830 = sbr.rel (%p2828) target = $region72
      $region71: #{vit_forward.1} parent=5 // pred_region
        %s2831 = ssub.s32 %s20, 2
        // Predicated region
        $region73: #{vit_forward.1} parent=71 // pred_check
          %p2832 = pneg %p285
        $region74: #{vit_forward.1} parent=71 // pred_check_branch
          %2834 = sbr.rel (%p2832) target = $region76
        $region75: #{vit_forward.1} parent=71 // pred_region
          %s2835 = sand.u32 %s270, 1
          %s2836 = scalar_lea.sflag [#allocation3], %s2835
          %s2837 = sand.u32 %s270, 1
          %s2838 = scalar_lea.vmem [#allocation2], %s2837
          %2840 = dma.done %s2836, 16
        $region76: #{vit_forward.1} parent=71 // pred_fallthru
          _
      $region72: #{vit_forward.1} parent=5 // pred_fallthru
        _
    $region6: #{vit_forward.1} parent=1 // loop_footer
      %s24 = sadd.s32 1, %s20
    $region7: #{vit_forward.1} parent=1 // loop_footer_branch
      %19 = sbr.rel target = $region3
    $region8: #{vit_forward.1} parent=1 // loop_exit
      _
    %2841 = vsyncpa [#allocation3], 1
    %s2842 = scalar_lea.sflag [#allocation3], 1
    %2843 = vsyncpa %s2842, 1

</llo_original>
